<compile_context>
chip_gen: v5e
topology: v5e:2x2
jax: 0.10.0
libtpu: 0.0.40
codegen_flags: <defaults>
</compile_context>

<pallas_src>
import functools

import jax
import jax.numpy as jnp
from jax.experimental import pallas as pl
from jax.experimental.pallas import tpu as pltpu


# ----------------------------------------------------------------------------
# Fused CS-projection + multi-layer LSTM kernel
# (PyTorch gate order i, f, g, o; zero initial state; bias pre-folded)
# ----------------------------------------------------------------------------
def _cs_lstm_kernel(y_ref, w0_ref, wihr_ref, whh_ref, b_ref, o_ref,
                    gx_scr, hseq_scr, *, num_layers, hidden_pad, seq_len,
                    batch_blk):
    Hp = hidden_pad
    T = seq_len
    Bb = batch_blk
    TB = T * Bb
    K = y_ref.shape[-1]

    # ---- Layer 0: fused CS projection + input matmul over ALL timesteps ----
    #   gates_x[t,b] = y[b,:,t] @ (A^T @ W_ih0) + bias0     (one MXU matmul)
    x0 = y_ref[...].reshape(TB, K)                                 # (T*Bb, K)
    gx0 = jnp.dot(x0, w0_ref[...], preferred_element_type=jnp.float32)
    gx_scr[...] = (gx0 + b_ref[0]).reshape(T, Bb, 4 * Hp)

    for l in range(num_layers):
        w_hh = whh_ref[l]                                          # (Hp, 4Hp)
        # Last layer writes the output block directly; earlier layers write
        # the per-layer sequence scratch (input to the next layer's matmul).
        out_ref = o_ref if l == num_layers - 1 else hseq_scr

        def step(t, carry, w_hh=w_hh, out_ref=out_ref):
            h, c = carry
            # Only the recurrent matmul sits on the serial path.
            gates = gx_scr[t] + jnp.dot(h, w_hh,
                                        preferred_element_type=jnp.float32)
            # Gate slices are 128-lane aligned (Hp is a multiple of 128).
            i_g = jax.nn.sigmoid(gates[:, 0 * Hp:1 * Hp])
            f_g = jax.nn.sigmoid(gates[:, 1 * Hp:2 * Hp])
            g_g = jnp.tanh(gates[:, 2 * Hp:3 * Hp])
            o_g = jax.nn.sigmoid(gates[:, 3 * Hp:4 * Hp])
            c_new = f_g * c + i_g * g_g
            h_new = o_g * jnp.tanh(c_new)
            out_ref[t] = h_new
            return (h_new, c_new)

        zeros = jnp.zeros((Bb, Hp), jnp.float32)
        jax.lax.fori_loop(0, T, step, (zeros, zeros), unroll=True)

        # ---- Hoisted input-to-hidden matmul for the next layer ----
        if l + 1 < num_layers:
            x_next = hseq_scr[...].reshape(TB, Hp)                 # (T*Bb, Hp)
            gx = jnp.dot(x_next, wihr_ref[l],
                         preferred_element_type=jnp.float32)
            gx_scr[...] = (gx + b_ref[l + 1]).reshape(T, Bb, 4 * Hp)


# ----------------------------------------------------------------------------
# Parameter padding helpers (lane-align the 4 PyTorch gate blocks)
# ----------------------------------------------------------------------------
def _pad_gate_cols(w, H, Hp):
    """(in, 4H) -> (in, 4*Hp): zero-pad each gate block from H to Hp cols."""
    if Hp == H:
        return w
    n_in = w.shape[0]
    w4 = w.reshape(n_in, 4, H)
    w4 = jnp.pad(w4, ((0, 0), (0, 0), (0, Hp - H)))
    return w4.reshape(n_in, 4 * Hp)


def _pad_rows(w, H, Hp):
    """(H, G) -> (Hp, G): zero-pad the hidden-input rows."""
    if Hp == H:
        return w
    return jnp.pad(w, ((0, Hp - H), (0, 0)))


# ----------------------------------------------------------------------------
# Full CS_LSTM forward
# ----------------------------------------------------------------------------
def cs_lstm_forward(y, A, wih0, wih_rest, whh, bias, *, hidden, num_layers,
                    batch_blocks=1):
    """y:(B,K,T) f32, A:(M,K) f32.  Weights pre-transposed from PyTorch:
    wih0:(M,4H), wih_rest:(max(L-1,1),H,4H), whh:(L,H,4H), bias:(L,1,4H)
    (b_ih + b_hh folded).  Returns (B,H,T) == CS_LSTM.forward(y).

    batch_blocks: number of independent batch shards run as a "parallel"
    grid axis (set to 2 on v7x so each TensorCore runs half the batch)."""
    B, K, T = y.shape
    H = hidden
    L = num_layers
    Hp = ((H + 127) // 128) * 128       # lane-pad hidden dim to 128 multiple
    assert B % batch_blocks == 0
    G = batch_blocks
    Bb = B // G

    # --- parameter prep (tiny plain-XLA ops; hoistable/cacheable) ----------
    # Fold the compressed-sensing projection into the layer-0 input weight:
    #   x_t @ W_ih0 = (A @ y_t)^T @ W_ih0 = y_t^T @ (A^T @ W_ih0)
    w0 = A.T @ _pad_gate_cols(wih0, H, Hp)                          # (K, 4Hp)
    wihr = jnp.stack([_pad_rows(_pad_gate_cols(wih_rest[i], H, Hp), H, Hp)
                      for i in range(wih_rest.shape[0])])           # (Lr,Hp,4Hp)
    whhp = jnp.stack([_pad_rows(_pad_gate_cols(whh[i], H, Hp), H, Hp)
                      for i in range(L)])                           # (L,Hp,4Hp)
    biasp = jnp.stack([_pad_gate_cols(bias[i], H, Hp)
                       for i in range(L)])                          # (L,1,4Hp)

    # Time-major, batch-shard-major input layout: (G, T, Bb, K).
    y_k = jnp.transpose(y, (2, 0, 1)).reshape(T, G, Bb, K)
    y_k = jnp.transpose(y_k, (1, 0, 2, 3))

    kernel = functools.partial(_cs_lstm_kernel, num_layers=L, hidden_pad=Hp,
                               seq_len=T, batch_blk=Bb)
    out = pl.pallas_call(
        kernel,
        out_shape=jax.ShapeDtypeStruct((G, T, Bb, Hp), jnp.float32),
        grid=(G,),
        in_specs=[
            pl.BlockSpec((None, T, Bb, K), lambda g: (g, 0, 0, 0)),
            pl.BlockSpec(w0.shape, lambda g: (0, 0)),
            pl.BlockSpec(wihr.shape, lambda g: (0, 0, 0)),
            pl.BlockSpec(whhp.shape, lambda g: (0, 0, 0)),
            pl.BlockSpec(biasp.shape, lambda g: (0, 0, 0)),
        ],
        out_specs=pl.BlockSpec((None, T, Bb, Hp), lambda g: (g, 0, 0, 0)),
        scratch_shapes=[
            pltpu.VMEM((T, Bb, 4 * Hp), jnp.float32),  # hoisted input gates
            pltpu.VMEM((T, Bb, Hp), jnp.float32),      # per-layer output seq
        ],
        compiler_params=pltpu.CompilerParams(
            dimension_semantics=("parallel",)),
    )(y_k, w0, wihr, whhp, biasp)

    # (G, T, Bb, Hp) -> (T, B, Hp) -> (B, H, T); strip lane padding outside.
    out = jnp.transpose(out, (1, 0, 2, 3)).reshape(T, B, Hp)
    return jnp.transpose(out, (1, 2, 0))[:, :H, :]


# ----------------------------------------------------------------------------
# Pure-JAX reference for verification
# ----------------------------------------------------------------------------
def ref_forward(y, A, wih0, wih_rest, whh, bias, *, hidden, num_layers):
    H = hidden
    x = jnp.einsum('mk,bkt->bmt', A, y)          # (B, M, T)
    x = jnp.transpose(x, (0, 2, 1))              # (B, T, M)
    B, T, _ = x.shape
    inp = x
    for l in range(num_layers):
        w_ih = wih0 if l == 0 else wih_rest[l - 1]
        w_hh = whh[l]
        b = bias[l, 0]

        def step(carry, x_t):
            h, c = carry
            gates = x_t @ w_ih + h @ w_hh + b
            i_g = jax.nn.sigmoid(gates[:, :H])
            f_g = jax.nn.sigmoid(gates[:, H:2 * H])
            g_g = jnp.tanh(gates[:, 2 * H:3 * H])
            o_g = jax.nn.sigmoid(gates[:, 3 * H:])
            c = f_g * c + i_g * g_g
            h = o_g * jnp.tanh(c)
            return (h, c), h

        init = (jnp.zeros((B, H), jnp.float32), jnp.zeros((B, H), jnp.float32))
        _, ys = jax.lax.scan(step, init, jnp.swapaxes(inp, 0, 1))
        inp = jnp.swapaxes(ys, 0, 1)
    return jnp.transpose(inp, (0, 2, 1))


if __name__ == "__main__":
    # Small shapes implied by the module:
    #   options.measure_rate = M, options.dim = H, options.num_iters = L
    B, K, T = 2, 16, 8      # batch, signal length, sequence length
    M, H, L = 8, 32, 2      # measure_rate, hidden dim, num LSTM layers

    key = jax.random.PRNGKey(0)
    ks = jax.random.split(key, 6)
    scale = 1.0 / jnp.sqrt(H)

    # TODO(synk): A is loaded from an h5py .mat file in the original module;
    # a deterministic synthetic A (and PyTorch-style LSTM weights, stored
    # pre-transposed to (in, 4H) with b_ih + b_hh folded) stands in here.
    A = jax.random.normal(ks[0], (M, K), jnp.float32) / jnp.sqrt(K)
    wih0 = jax.random.uniform(ks[1], (M, 4 * H), jnp.float32, -scale, scale)
    wih_rest = jax.random.uniform(ks[2], (max(L - 1, 1), H, 4 * H),
                                  jnp.float32, -scale, scale)
    whh = jax.random.uniform(ks[3], (L, H, 4 * H), jnp.float32, -scale, scale)
    bias = jax.random.uniform(ks[4], (L, 1, 4 * H), jnp.float32, -scale, scale)
    y = jax.random.normal(ks[5], (B, K, T), jnp.float32)

    ref = jax.block_until_ready(
        ref_forward(y, A, wih0, wih_rest, whh, bias, hidden=H, num_layers=L))

    # Single-shard run (v5e/v6e: one TensorCore).
    out = jax.block_until_ready(
        cs_lstm_forward(y, A, wih0, wih_rest, whh, bias,
                        hidden=H, num_layers=L, batch_blocks=1))
    assert out.shape == (B, H, T), out.shape
    assert jnp.allclose(out, ref, rtol=1e-4, atol=1e-4), \
        float(jnp.max(jnp.abs(out - ref)))

    # Batch-parallel variant (one independent batch shard per grid step;
    # on v7x the "parallel" axis is split across the two TensorCores).
    out2 = jax.block_until_ready(
        cs_lstm_forward(y, A, wih0, wih_rest, whh, bias,
                        hidden=H, num_layers=L, batch_blocks=2))
    assert jnp.allclose(out2, ref, rtol=1e-4, atol=1e-4), \
        float(jnp.max(jnp.abs(out2 - ref)))

    print("KERNEL_OK")
</pallas_src>

<mosaic_0001>
module attributes {stable_mosaic.version = 11 : i64} {
  func.func @_cs_lstm_kernel(%arg0: i32, %arg1: memref<1x8x2x16xf32, #tpu.memory_space<vmem>>, %arg2: memref<16x512xf32, #tpu.memory_space<vmem>>, %arg3: memref<1x128x512xf32, #tpu.memory_space<vmem>>, %arg4: memref<2x128x512xf32, #tpu.memory_space<vmem>>, %arg5: memref<2x1x512xf32, #tpu.memory_space<vmem>>, %arg6: memref<1x8x2x128xf32, #tpu.memory_space<vmem>>, %arg7: memref<8x2x512xf32, #tpu.memory_space<vmem>>, %arg8: memref<8x2x128xf32, #tpu.memory_space<vmem>>) attributes {dimension_semantics = [#tpu.dimension_semantics<parallel>], iteration_bounds = array<i64: 1>, scalar_prefetch = 0 : i64, scratch_operands = 2 : i64, tpu.core_type = #tpu.core_type<tc>, window_params = [{transform_indices = @transform_0, window_bounds = array<i64: 1, 8, 2, 16>}, {pipeline_mode = #tpu.pipeline_mode<synchronous>, transform_indices = @transform_1, window_bounds = array<i64: 16, 512>}, {pipeline_mode = #tpu.pipeline_mode<synchronous>, transform_indices = @transform_2, window_bounds = array<i64: 1, 128, 512>}, {pipeline_mode = #tpu.pipeline_mode<synchronous>, transform_indices = @transform_3, window_bounds = array<i64: 2, 128, 512>}, {pipeline_mode = #tpu.pipeline_mode<synchronous>, transform_indices = @transform_4, window_bounds = array<i64: 2, 1, 512>}, {transform_indices = @transform_5, window_bounds = array<i64: 1, 8, 2, 128>}]} {
    %c0 = arith.constant 0 : index
    %c0_0 = arith.constant 0 : index
    %c0_1 = arith.constant 0 : index
    %c0_2 = arith.constant 0 : index
    %0 = vector.load %arg1[%c0, %c0_0, %c0_1, %c0_2] : memref<1x8x2x16xf32, #tpu.memory_space<vmem>>, vector<1x8x2x16xf32>
    %1 = vector.shape_cast %0 : vector<1x8x2x16xf32> to vector<8x2x16xf32>
    %2 = vector.shape_cast %1 : vector<8x2x16xf32> to vector<16x16xf32>
    %c0_3 = arith.constant 0 : index
    %c0_4 = arith.constant 0 : index
    %3 = vector.load %arg2[%c0_3, %c0_4] : memref<16x512xf32, #tpu.memory_space<vmem>>, vector<16x512xf32>
    %cst = arith.constant dense<0.000000e+00> : vector<16x512xf32>
    %4 = tpu.matmul %2, %3, %cst {dimension_numbers = #tpu.dot_dimension_numbers<[1], [0], [0], [1], [0, 0, 1, 1], [], []>} : vector<16x16xf32>, vector<16x512xf32>, vector<16x512xf32> -> vector<16x512xf32>
    %c0_5 = arith.constant 0 : index
    %c0_6 = arith.constant 0 : index
    %c0_7 = arith.constant 0 : index
    %5 = vector.load %arg5[%c0_5, %c0_6, %c0_7] : memref<2x1x512xf32, #tpu.memory_space<vmem>>, vector<1x1x512xf32>
    %6 = vector.shape_cast %5 : vector<1x1x512xf32> to vector<1x512xf32>
    %7 = vector.broadcast %6 : vector<1x512xf32> to vector<16x512xf32>
    %8 = arith.addf %4, %7 : vector<16x512xf32>
    %9 = vector.shape_cast %8 : vector<16x512xf32> to vector<8x2x512xf32>
    %c0_8 = arith.constant 0 : index
    %c0_9 = arith.constant 0 : index
    %c0_10 = arith.constant 0 : index
    %10 = vector.load %arg7[%c0_8, %c0_9, %c0_10] : memref<8x2x512xf32, #tpu.memory_space<vmem>>, vector<8x2x512xf32>
    tpu.vector_store %arg7[%c0_8, %c0_9, %c0_10], %9 {strides = array<i32>} : memref<8x2x512xf32, #tpu.memory_space<vmem>>, vector<8x2x512xf32>,
    %c0_11 = arith.constant 0 : index
    %c0_12 = arith.constant 0 : index
    %c0_13 = arith.constant 0 : index
    %11 = vector.load %arg4[%c0_11, %c0_12, %c0_13] : memref<2x128x512xf32, #tpu.memory_space<vmem>>, vector<1x128x512xf32>
    %12 = vector.shape_cast %11 : vector<1x128x512xf32> to vector<128x512xf32>
    %cst_14 = arith.constant 0.000000e+00 : f32
    %13 = vector.broadcast %cst_14 : f32 to vector<2x128xf32>
    %c0_i32 = arith.constant 0 : i32
    %14 = arith.index_cast %c0_i32 : i32 to index
    %c0_15 = arith.constant 0 : index
    %c0_16 = arith.constant 0 : index
    %15 = vector.load %arg7[%14, %c0_15, %c0_16] : memref<8x2x512xf32, #tpu.memory_space<vmem>>, vector<1x2x512xf32>
    %16 = vector.shape_cast %15 : vector<1x2x512xf32> to vector<2x512xf32>
    %cst_17 = arith.constant dense<0.000000e+00> : vector<2x512xf32>
    %17 = tpu.matmul %13, %12, %cst_17 {dimension_numbers = #tpu.dot_dimension_numbers<[1], [0], [0], [1], [0, 0, 1, 1], [], []>} : vector<2x128xf32>, vector<128x512xf32>, vector<2x512xf32> -> vector<2x512xf32>
    %18 = arith.addf %16, %17 : vector<2x512xf32>
    %19 = vector.extract_strided_slice %18 {offsets = [0, 0], sizes = [2, 128], strides = [1, 1]} : vector<2x512xf32> to vector<2x128xf32>
    %20 = arith.negf %19 : vector<2x128xf32>
    %21 = math.exp %20 : vector<2x128xf32>
    %cst_18 = arith.constant 1.000000e+00 : f32
    %22 = vector.broadcast %cst_18 : f32 to vector<2x128xf32>
    %23 = arith.addf %22, %21 : vector<2x128xf32>
    %24 = arith.divf %22, %23 : vector<2x128xf32>
    %25 = vector.extract_strided_slice %18 {offsets = [0, 128], sizes = [2, 128], strides = [1, 1]} : vector<2x512xf32> to vector<2x128xf32>
    %26 = arith.negf %25 : vector<2x128xf32>
    %27 = math.exp %26 : vector<2x128xf32>
    %cst_19 = arith.constant 1.000000e+00 : f32
    %28 = vector.broadcast %cst_19 : f32 to vector<2x128xf32>
    %29 = arith.addf %28, %27 : vector<2x128xf32>
    %30 = arith.divf %28, %29 : vector<2x128xf32>
    %31 = vector.extract_strided_slice %18 {offsets = [0, 256], sizes = [2, 128], strides = [1, 1]} : vector<2x512xf32> to vector<2x128xf32>
    %32 = math.tanh %31 : vector<2x128xf32>
    %33 = vector.extract_strided_slice %18 {offsets = [0, 384], sizes = [2, 128], strides = [1, 1]} : vector<2x512xf32> to vector<2x128xf32>
    %34 = arith.negf %33 : vector<2x128xf32>
    %35 = math.exp %34 : vector<2x128xf32>
    %cst_20 = arith.constant 1.000000e+00 : f32
    %36 = vector.broadcast %cst_20 : f32 to vector<2x128xf32>
    %37 = arith.addf %36, %35 : vector<2x128xf32>
    %38 = arith.divf %36, %37 : vector<2x128xf32>
    %39 = arith.mulf %30, %13 : vector<2x128xf32>
    %40 = arith.mulf %24, %32 : vector<2x128xf32>
    %41 = arith.addf %39, %40 : vector<2x128xf32>
    %42 = math.tanh %41 : vector<2x128xf32>
    %43 = arith.mulf %38, %42 : vector<2x128xf32>
    %44 = arith.index_cast %c0_i32 : i32 to index
    %c0_21 = arith.constant 0 : index
    %c0_22 = arith.constant 0 : index
    %45 = vector.load %arg8[%44, %c0_21, %c0_22] : memref<8x2x128xf32, #tpu.memory_space<vmem>>, vector<1x2x128xf32>
    %46 = vector.shape_cast %45 : vector<1x2x128xf32> to vector<2x128xf32>
    %47 = vector.shape_cast %43 : vector<2x128xf32> to vector<1x2x128xf32>
    tpu.vector_store %arg8[%44, %c0_21, %c0_22], %47 {strides = array<i32>} : memref<8x2x128xf32, #tpu.memory_space<vmem>>, vector<1x2x128xf32>,
    %c1_i32 = arith.constant 1 : i32
    %48 = arith.index_cast %c1_i32 : i32 to index
    %c0_23 = arith.constant 0 : index
    %c0_24 = arith.constant 0 : index
    %49 = vector.load %arg7[%48, %c0_23, %c0_24] : memref<8x2x512xf32, #tpu.memory_space<vmem>>, vector<1x2x512xf32>
    %50 = vector.shape_cast %49 : vector<1x2x512xf32> to vector<2x512xf32>
    %cst_25 = arith.constant dense<0.000000e+00> : vector<2x512xf32>
    %51 = tpu.matmul %43, %12, %cst_25 {dimension_numbers = #tpu.dot_dimension_numbers<[1], [0], [0], [1], [0, 0, 1, 1], [], []>} : vector<2x128xf32>, vector<128x512xf32>, vector<2x512xf32> -> vector<2x512xf32>
    %52 = arith.addf %50, %51 : vector<2x512xf32>
    %53 = vector.extract_strided_slice %52 {offsets = [0, 0], sizes = [2, 128], strides = [1, 1]} : vector<2x512xf32> to vector<2x128xf32>
    %54 = arith.negf %53 : vector<2x128xf32>
    %55 = math.exp %54 : vector<2x128xf32>
    %cst_26 = arith.constant 1.000000e+00 : f32
    %56 = vector.broadcast %cst_26 : f32 to vector<2x128xf32>
    %57 = arith.addf %56, %55 : vector<2x128xf32>
    %58 = arith.divf %56, %57 : vector<2x128xf32>
    %59 = vector.extract_strided_slice %52 {offsets = [0, 128], sizes = [2, 128], strides = [1, 1]} : vector<2x512xf32> to vector<2x128xf32>
    %60 = arith.negf %59 : vector<2x128xf32>
    %61 = math.exp %60 : vector<2x128xf32>
    %cst_27 = arith.constant 1.000000e+00 : f32
    %62 = vector.broadcast %cst_27 : f32 to vector<2x128xf32>
    %63 = arith.addf %62, %61 : vector<2x128xf32>
    %64 = arith.divf %62, %63 : vector<2x128xf32>
    %65 = vector.extract_strided_slice %52 {offsets = [0, 256], sizes = [2, 128], strides = [1, 1]} : vector<2x512xf32> to vector<2x128xf32>
    %66 = math.tanh %65 : vector<2x128xf32>
    %67 = vector.extract_strided_slice %52 {offsets = [0, 384], sizes = [2, 128], strides = [1, 1]} : vector<2x512xf32> to vector<2x128xf32>
    %68 = arith.negf %67 : vector<2x128xf32>
    %69 = math.exp %68 : vector<2x128xf32>
    %cst_28 = arith.constant 1.000000e+00 : f32
    %70 = vector.broadcast %cst_28 : f32 to vector<2x128xf32>
    %71 = arith.addf %70, %69 : vector<2x128xf32>
    %72 = arith.divf %70, %71 : vector<2x128xf32>
    %73 = arith.mulf %64, %41 : vector<2x128xf32>
    %74 = arith.mulf %58, %66 : vector<2x128xf32>
    %75 = arith.addf %73, %74 : vector<2x128xf32>
    %76 = math.tanh %75 : vector<2x128xf32>
    %77 = arith.mulf %72, %76 : vector<2x128xf32>
    %78 = arith.index_cast %c1_i32 : i32 to index
    %c0_29 = arith.constant 0 : index
    %c0_30 = arith.constant 0 : index
    %79 = vector.load %arg8[%78, %c0_29, %c0_30] : memref<8x2x128xf32, #tpu.memory_space<vmem>>, vector<1x2x128xf32>
    %80 = vector.shape_cast %79 : vector<1x2x128xf32> to vector<2x128xf32>
    %81 = vector.shape_cast %77 : vector<2x128xf32> to vector<1x2x128xf32>
    tpu.vector_store %arg8[%78, %c0_29, %c0_30], %81 {strides = array<i32>} : memref<8x2x128xf32, #tpu.memory_space<vmem>>, vector<1x2x128xf32>,
    %c2_i32 = arith.constant 2 : i32
    %82 = arith.index_cast %c2_i32 : i32 to index
    %c0_31 = arith.constant 0 : index
    %c0_32 = arith.constant 0 : index
    %83 = vector.load %arg7[%82, %c0_31, %c0_32] : memref<8x2x512xf32, #tpu.memory_space<vmem>>, vector<1x2x512xf32>
    %84 = vector.shape_cast %83 : vector<1x2x512xf32> to vector<2x512xf32>
    %cst_33 = arith.constant dense<0.000000e+00> : vector<2x512xf32>
    %85 = tpu.matmul %77, %12, %cst_33 {dimension_numbers = #tpu.dot_dimension_numbers<[1], [0], [0], [1], [0, 0, 1, 1], [], []>} : vector<2x128xf32>, vector<128x512xf32>, vector<2x512xf32> -> vector<2x512xf32>
    %86 = arith.addf %84, %85 : vector<2x512xf32>
    %87 = vector.extract_strided_slice %86 {offsets = [0, 0], sizes = [2, 128], strides = [1, 1]} : vector<2x512xf32> to vector<2x128xf32>
    %88 = arith.negf %87 : vector<2x128xf32>
    %89 = math.exp %88 : vector<2x128xf32>
    %cst_34 = arith.constant 1.000000e+00 : f32
    %90 = vector.broadcast %cst_34 : f32 to vector<2x128xf32>
    %91 = arith.addf %90, %89 : vector<2x128xf32>
    %92 = arith.divf %90, %91 : vector<2x128xf32>
    %93 = vector.extract_strided_slice %86 {offsets = [0, 128], sizes = [2, 128], strides = [1, 1]} : vector<2x512xf32> to vector<2x128xf32>
    %94 = arith.negf %93 : vector<2x128xf32>
    %95 = math.exp %94 : vector<2x128xf32>
    %cst_35 = arith.constant 1.000000e+00 : f32
    %96 = vector.broadcast %cst_35 : f32 to vector<2x128xf32>
    %97 = arith.addf %96, %95 : vector<2x128xf32>
    %98 = arith.divf %96, %97 : vector<2x128xf32>
    %99 = vector.extract_strided_slice %86 {offsets = [0, 256], sizes = [2, 128], strides = [1, 1]} : vector<2x512xf32> to vector<2x128xf32>
    %100 = math.tanh %99 : vector<2x128xf32>
    %101 = vector.extract_strided_slice %86 {offsets = [0, 384], sizes = [2, 128], strides = [1, 1]} : vector<2x512xf32> to vector<2x128xf32>
    %102 = arith.negf %101 : vector<2x128xf32>
    %103 = math.exp %102 : vector<2x128xf32>
    %cst_36 = arith.constant 1.000000e+00 : f32
    %104 = vector.broadcast %cst_36 : f32 to vector<2x128xf32>
    %105 = arith.addf %104, %103 : vector<2x128xf32>
    %106 = arith.divf %104, %105 : vector<2x128xf32>
    %107 = arith.mulf %98, %75 : vector<2x128xf32>
    %108 = arith.mulf %92, %100 : vector<2x128xf32>
    %109 = arith.addf %107, %108 : vector<2x128xf32>
    %110 = math.tanh %109 : vector<2x128xf32>
    %111 = arith.mulf %106, %110 : vector<2x128xf32>
    %112 = arith.index_cast %c2_i32 : i32 to index
    %c0_37 = arith.constant 0 : index
    %c0_38 = arith.constant 0 : index
    %113 = vector.load %arg8[%112, %c0_37, %c0_38] : memref<8x2x128xf32, #tpu.memory_space<vmem>>, vector<1x2x128xf32>
    %114 = vector.shape_cast %113 : vector<1x2x128xf32> to vector<2x128xf32>
    %115 = vector.shape_cast %111 : vector<2x128xf32> to vector<1x2x128xf32>
    tpu.vector_store %arg8[%112, %c0_37, %c0_38], %115 {strides = array<i32>} : memref<8x2x128xf32, #tpu.memory_space<vmem>>, vector<1x2x128xf32>,
    %c3_i32 = arith.constant 3 : i32
    %116 = arith.index_cast %c3_i32 : i32 to index
    %c0_39 = arith.constant 0 : index
    %c0_40 = arith.constant 0 : index
    %117 = vector.load %arg7[%116, %c0_39, %c0_40] : memref<8x2x512xf32, #tpu.memory_space<vmem>>, vector<1x2x512xf32>
    %118 = vector.shape_cast %117 : vector<1x2x512xf32> to vector<2x512xf32>
    %cst_41 = arith.constant dense<0.000000e+00> : vector<2x512xf32>
    %119 = tpu.matmul %111, %12, %cst_41 {dimension_numbers = #tpu.dot_dimension_numbers<[1], [0], [0], [1], [0, 0, 1, 1], [], []>} : vector<2x128xf32>, vector<128x512xf32>, vector<2x512xf32> -> vector<2x512xf32>
    %120 = arith.addf %118, %119 : vector<2x512xf32>
    %121 = vector.extract_strided_slice %120 {offsets = [0, 0], sizes = [2, 128], strides = [1, 1]} : vector<2x512xf32> to vector<2x128xf32>
    %122 = arith.negf %121 : vector<2x128xf32>
    %123 = math.exp %122 : vector<2x128xf32>
    %cst_42 = arith.constant 1.000000e+00 : f32
    %124 = vector.broadcast %cst_42 : f32 to vector<2x128xf32>
    %125 = arith.addf %124, %123 : vector<2x128xf32>
    %126 = arith.divf %124, %125 : vector<2x128xf32>
    %127 = vector.extract_strided_slice %120 {offsets = [0, 128], sizes = [2, 128], strides = [1, 1]} : vector<2x512xf32> to vector<2x128xf32>
    %128 = arith.negf %127 : vector<2x128xf32>
    %129 = math.exp %128 : vector<2x128xf32>
    %cst_43 = arith.constant 1.000000e+00 : f32
    %130 = vector.broadcast %cst_43 : f32 to vector<2x128xf32>
    %131 = arith.addf %130, %129 : vector<2x128xf32>
    %132 = arith.divf %130, %131 : vector<2x128xf32>
    %133 = vector.extract_strided_slice %120 {offsets = [0, 256], sizes = [2, 128], strides = [1, 1]} : vector<2x512xf32> to vector<2x128xf32>
    %134 = math.tanh %133 : vector<2x128xf32>
    %135 = vector.extract_strided_slice %120 {offsets = [0, 384], sizes = [2, 128], strides = [1, 1]} : vector<2x512xf32> to vector<2x128xf32>
    %136 = arith.negf %135 : vector<2x128xf32>
    %137 = math.exp %136 : vector<2x128xf32>
    %cst_44 = arith.constant 1.000000e+00 : f32
    %138 = vector.broadcast %cst_44 : f32 to vector<2x128xf32>
    %139 = arith.addf %138, %137 : vector<2x128xf32>
    %140 = arith.divf %138, %139 : vector<2x128xf32>
    %141 = arith.mulf %132, %109 : vector<2x128xf32>
    %142 = arith.mulf %126, %134 : vector<2x128xf32>
    %143 = arith.addf %141, %142 : vector<2x128xf32>
    %144 = math.tanh %143 : vector<2x128xf32>
    %145 = arith.mulf %140, %144 : vector<2x128xf32>
    %146 = arith.index_cast %c3_i32 : i32 to index
    %c0_45 = arith.constant 0 : index
    %c0_46 = arith.constant 0 : index
    %147 = vector.load %arg8[%146, %c0_45, %c0_46] : memref<8x2x128xf32, #tpu.memory_space<vmem>>, vector<1x2x128xf32>
    %148 = vector.shape_cast %147 : vector<1x2x128xf32> to vector<2x128xf32>
    %149 = vector.shape_cast %145 : vector<2x128xf32> to vector<1x2x128xf32>
    tpu.vector_store %arg8[%146, %c0_45, %c0_46], %149 {strides = array<i32>} : memref<8x2x128xf32, #tpu.memory_space<vmem>>, vector<1x2x128xf32>,
    %c4_i32 = arith.constant 4 : i32
    %150 = arith.index_cast %c4_i32 : i32 to index
    %c0_47 = arith.constant 0 : index
    %c0_48 = arith.constant 0 : index
    %151 = vector.load %arg7[%150, %c0_47, %c0_48] : memref<8x2x512xf32, #tpu.memory_space<vmem>>, vector<1x2x512xf32>
    %152 = vector.shape_cast %151 : vector<1x2x512xf32> to vector<2x512xf32>
    %cst_49 = arith.constant dense<0.000000e+00> : vector<2x512xf32>
    %153 = tpu.matmul %145, %12, %cst_49 {dimension_numbers = #tpu.dot_dimension_numbers<[1], [0], [0], [1], [0, 0, 1, 1], [], []>} : vector<2x128xf32>, vector<128x512xf32>, vector<2x512xf32> -> vector<2x512xf32>
    %154 = arith.addf %152, %153 : vector<2x512xf32>
    %155 = vector.extract_strided_slice %154 {offsets = [0, 0], sizes = [2, 128], strides = [1, 1]} : vector<2x512xf32> to vector<2x128xf32>
    %156 = arith.negf %155 : vector<2x128xf32>
    %157 = math.exp %156 : vector<2x128xf32>
    %cst_50 = arith.constant 1.000000e+00 : f32
    %158 = vector.broadcast %cst_50 : f32 to vector<2x128xf32>
    %159 = arith.addf %158, %157 : vector<2x128xf32>
    %160 = arith.divf %158, %159 : vector<2x128xf32>
    %161 = vector.extract_strided_slice %154 {offsets = [0, 128], sizes = [2, 128], strides = [1, 1]} : vector<2x512xf32> to vector<2x128xf32>
    %162 = arith.negf %161 : vector<2x128xf32>
    %163 = math.exp %162 : vector<2x128xf32>
    %cst_51 = arith.constant 1.000000e+00 : f32
    %164 = vector.broadcast %cst_51 : f32 to vector<2x128xf32>
    %165 = arith.addf %164, %163 : vector<2x128xf32>
    %166 = arith.divf %164, %165 : vector<2x128xf32>
    %167 = vector.extract_strided_slice %154 {offsets = [0, 256], sizes = [2, 128], strides = [1, 1]} : vector<2x512xf32> to vector<2x128xf32>
    %168 = math.tanh %167 : vector<2x128xf32>
    %169 = vector.extract_strided_slice %154 {offsets = [0, 384], sizes = [2, 128], strides = [1, 1]} : vector<2x512xf32> to vector<2x128xf32>
    %170 = arith.negf %169 : vector<2x128xf32>
    %171 = math.exp %170 : vector<2x128xf32>
    %cst_52 = arith.constant 1.000000e+00 : f32
    %172 = vector.broadcast %cst_52 : f32 to vector<2x128xf32>
    %173 = arith.addf %172, %171 : vector<2x128xf32>
    %174 = arith.divf %172, %173 : vector<2x128xf32>
    %175 = arith.mulf %166, %143 : vector<2x128xf32>
    %176 = arith.mulf %160, %168 : vector<2x128xf32>
    %177 = arith.addf %175, %176 : vector<2x128xf32>
    %178 = math.tanh %177 : vector<2x128xf32>
    %179 = arith.mulf %174, %178 : vector<2x128xf32>
    %180 = arith.index_cast %c4_i32 : i32 to index
    %c0_53 = arith.constant 0 : index
    %c0_54 = arith.constant 0 : index
    %181 = vector.load %arg8[%180, %c0_53, %c0_54] : memref<8x2x128xf32, #tpu.memory_space<vmem>>, vector<1x2x128xf32>
    %182 = vector.shape_cast %181 : vector<1x2x128xf32> to vector<2x128xf32>
    %183 = vector.shape_cast %179 : vector<2x128xf32> to vector<1x2x128xf32>
    tpu.vector_store %arg8[%180, %c0_53, %c0_54], %183 {strides = array<i32>} : memref<8x2x128xf32, #tpu.memory_space<vmem>>, vector<1x2x128xf32>,
    %c5_i32 = arith.constant 5 : i32
    %184 = arith.index_cast %c5_i32 : i32 to index
    %c0_55 = arith.constant 0 : index
    %c0_56 = arith.constant 0 : index
    %185 = vector.load %arg7[%184, %c0_55, %c0_56] : memref<8x2x512xf32, #tpu.memory_space<vmem>>, vector<1x2x512xf32>
    %186 = vector.shape_cast %185 : vector<1x2x512xf32> to vector<2x512xf32>
    %cst_57 = arith.constant dense<0.000000e+00> : vector<2x512xf32>
    %187 = tpu.matmul %179, %12, %cst_57 {dimension_numbers = #tpu.dot_dimension_numbers<[1], [0], [0], [1], [0, 0, 1, 1], [], []>} : vector<2x128xf32>, vector<128x512xf32>, vector<2x512xf32> -> vector<2x512xf32>
    %188 = arith.addf %186, %187 : vector<2x512xf32>
    %189 = vector.extract_strided_slice %188 {offsets = [0, 0], sizes = [2, 128], strides = [1, 1]} : vector<2x512xf32> to vector<2x128xf32>
    %190 = arith.negf %189 : vector<2x128xf32>
    %191 = math.exp %190 : vector<2x128xf32>
    %cst_58 = arith.constant 1.000000e+00 : f32
    %192 = vector.broadcast %cst_58 : f32 to vector<2x128xf32>
    %193 = arith.addf %192, %191 : vector<2x128xf32>
    %194 = arith.divf %192, %193 : vector<2x128xf32>
    %195 = vector.extract_strided_slice %188 {offsets = [0, 128], sizes = [2, 128], strides = [1, 1]} : vector<2x512xf32> to vector<2x128xf32>
    %196 = arith.negf %195 : vector<2x128xf32>
    %197 = math.exp %196 : vector<2x128xf32>
    %cst_59 = arith.constant 1.000000e+00 : f32
    %198 = vector.broadcast %cst_59 : f32 to vector<2x128xf32>
    %199 = arith.addf %198, %197 : vector<2x128xf32>
    %200 = arith.divf %198, %199 : vector<2x128xf32>
    %201 = vector.extract_strided_slice %188 {offsets = [0, 256], sizes = [2, 128], strides = [1, 1]} : vector<2x512xf32> to vector<2x128xf32>
    %202 = math.tanh %201 : vector<2x128xf32>
    %203 = vector.extract_strided_slice %188 {offsets = [0, 384], sizes = [2, 128], strides = [1, 1]} : vector<2x512xf32> to vector<2x128xf32>
    %204 = arith.negf %203 : vector<2x128xf32>
    %205 = math.exp %204 : vector<2x128xf32>
    %cst_60 = arith.constant 1.000000e+00 : f32
    %206 = vector.broadcast %cst_60 : f32 to vector<2x128xf32>
    %207 = arith.addf %206, %205 : vector<2x128xf32>
    %208 = arith.divf %206, %207 : vector<2x128xf32>
    %209 = arith.mulf %200, %177 : vector<2x128xf32>
    %210 = arith.mulf %194, %202 : vector<2x128xf32>
    %211 = arith.addf %209, %210 : vector<2x128xf32>
    %212 = math.tanh %211 : vector<2x128xf32>
    %213 = arith.mulf %208, %212 : vector<2x128xf32>
    %214 = arith.index_cast %c5_i32 : i32 to index
    %c0_61 = arith.constant 0 : index
    %c0_62 = arith.constant 0 : index
    %215 = vector.load %arg8[%214, %c0_61, %c0_62] : memref<8x2x128xf32, #tpu.memory_space<vmem>>, vector<1x2x128xf32>
    %216 = vector.shape_cast %215 : vector<1x2x128xf32> to vector<2x128xf32>
    %217 = vector.shape_cast %213 : vector<2x128xf32> to vector<1x2x128xf32>
    tpu.vector_store %arg8[%214, %c0_61, %c0_62], %217 {strides = array<i32>} : memref<8x2x128xf32, #tpu.memory_space<vmem>>, vector<1x2x128xf32>,
    %c6_i32 = arith.constant 6 : i32
    %218 = arith.index_cast %c6_i32 : i32 to index
    %c0_63 = arith.constant 0 : index
    %c0_64 = arith.constant 0 : index
    %219 = vector.load %arg7[%218, %c0_63, %c0_64] : memref<8x2x512xf32, #tpu.memory_space<vmem>>, vector<1x2x512xf32>
    %220 = vector.shape_cast %219 : vector<1x2x512xf32> to vector<2x512xf32>
    %cst_65 = arith.constant dense<0.000000e+00> : vector<2x512xf32>
    %221 = tpu.matmul %213, %12, %cst_65 {dimension_numbers = #tpu.dot_dimension_numbers<[1], [0], [0], [1], [0, 0, 1, 1], [], []>} : vector<2x128xf32>, vector<128x512xf32>, vector<2x512xf32> -> vector<2x512xf32>
    %222 = arith.addf %220, %221 : vector<2x512xf32>
    %223 = vector.extract_strided_slice %222 {offsets = [0, 0], sizes = [2, 128], strides = [1, 1]} : vector<2x512xf32> to vector<2x128xf32>
    %224 = arith.negf %223 : vector<2x128xf32>
    %225 = math.exp %224 : vector<2x128xf32>
    %cst_66 = arith.constant 1.000000e+00 : f32
    %226 = vector.broadcast %cst_66 : f32 to vector<2x128xf32>
    %227 = arith.addf %226, %225 : vector<2x128xf32>
    %228 = arith.divf %226, %227 : vector<2x128xf32>
    %229 = vector.extract_strided_slice %222 {offsets = [0, 128], sizes = [2, 128], strides = [1, 1]} : vector<2x512xf32> to vector<2x128xf32>
    %230 = arith.negf %229 : vector<2x128xf32>
    %231 = math.exp %230 : vector<2x128xf32>
    %cst_67 = arith.constant 1.000000e+00 : f32
    %232 = vector.broadcast %cst_67 : f32 to vector<2x128xf32>
    %233 = arith.addf %232, %231 : vector<2x128xf32>
    %234 = arith.divf %232, %233 : vector<2x128xf32>
    %235 = vector.extract_strided_slice %222 {offsets = [0, 256], sizes = [2, 128], strides = [1, 1]} : vector<2x512xf32> to vector<2x128xf32>
    %236 = math.tanh %235 : vector<2x128xf32>
    %237 = vector.extract_strided_slice %222 {offsets = [0, 384], sizes = [2, 128], strides = [1, 1]} : vector<2x512xf32> to vector<2x128xf32>
    %238 = arith.negf %237 : vector<2x128xf32>
    %239 = math.exp %238 : vector<2x128xf32>
    %cst_68 = arith.constant 1.000000e+00 : f32
    %240 = vector.broadcast %cst_68 : f32 to vector<2x128xf32>
    %241 = arith.addf %240, %239 : vector<2x128xf32>
    %242 = arith.divf %240, %241 : vector<2x128xf32>
    %243 = arith.mulf %234, %211 : vector<2x128xf32>
    %244 = arith.mulf %228, %236 : vector<2x128xf32>
    %245 = arith.addf %243, %244 : vector<2x128xf32>
    %246 = math.tanh %245 : vector<2x128xf32>
    %247 = arith.mulf %242, %246 : vector<2x128xf32>
    %248 = arith.index_cast %c6_i32 : i32 to index
    %c0_69 = arith.constant 0 : index
    %c0_70 = arith.constant 0 : index
    %249 = vector.load %arg8[%248, %c0_69, %c0_70] : memref<8x2x128xf32, #tpu.memory_space<vmem>>, vector<1x2x128xf32>
    %250 = vector.shape_cast %249 : vector<1x2x128xf32> to vector<2x128xf32>
    %251 = vector.shape_cast %247 : vector<2x128xf32> to vector<1x2x128xf32>
    tpu.vector_store %arg8[%248, %c0_69, %c0_70], %251 {strides = array<i32>} : memref<8x2x128xf32, #tpu.memory_space<vmem>>, vector<1x2x128xf32>,
    %c7_i32 = arith.constant 7 : i32
    %252 = arith.index_cast %c7_i32 : i32 to index
    %c0_71 = arith.constant 0 : index
    %c0_72 = arith.constant 0 : index
    %253 = vector.load %arg7[%252, %c0_71, %c0_72] : memref<8x2x512xf32, #tpu.memory_space<vmem>>, vector<1x2x512xf32>
    %254 = vector.shape_cast %253 : vector<1x2x512xf32> to vector<2x512xf32>
    %cst_73 = arith.constant dense<0.000000e+00> : vector<2x512xf32>
    %255 = tpu.matmul %247, %12, %cst_73 {dimension_numbers = #tpu.dot_dimension_numbers<[1], [0], [0], [1], [0, 0, 1, 1], [], []>} : vector<2x128xf32>, vector<128x512xf32>, vector<2x512xf32> -> vector<2x512xf32>
    %256 = arith.addf %254, %255 : vector<2x512xf32>
    %257 = vector.extract_strided_slice %256 {offsets = [0, 0], sizes = [2, 128], strides = [1, 1]} : vector<2x512xf32> to vector<2x128xf32>
    %258 = arith.negf %257 : vector<2x128xf32>
    %259 = math.exp %258 : vector<2x128xf32>
    %cst_74 = arith.constant 1.000000e+00 : f32
    %260 = vector.broadcast %cst_74 : f32 to vector<2x128xf32>
    %261 = arith.addf %260, %259 : vector<2x128xf32>
    %262 = arith.divf %260, %261 : vector<2x128xf32>
    %263 = vector.extract_strided_slice %256 {offsets = [0, 128], sizes = [2, 128], strides = [1, 1]} : vector<2x512xf32> to vector<2x128xf32>
    %264 = arith.negf %263 : vector<2x128xf32>
    %265 = math.exp %264 : vector<2x128xf32>
    %cst_75 = arith.constant 1.000000e+00 : f32
    %266 = vector.broadcast %cst_75 : f32 to vector<2x128xf32>
    %267 = arith.addf %266, %265 : vector<2x128xf32>
    %268 = arith.divf %266, %267 : vector<2x128xf32>
    %269 = vector.extract_strided_slice %256 {offsets = [0, 256], sizes = [2, 128], strides = [1, 1]} : vector<2x512xf32> to vector<2x128xf32>
    %270 = math.tanh %269 : vector<2x128xf32>
    %271 = vector.extract_strided_slice %256 {offsets = [0, 384], sizes = [2, 128], strides = [1, 1]} : vector<2x512xf32> to vector<2x128xf32>
    %272 = arith.negf %271 : vector<2x128xf32>
    %273 = math.exp %272 : vector<2x128xf32>
    %cst_76 = arith.constant 1.000000e+00 : f32
    %274 = vector.broadcast %cst_76 : f32 to vector<2x128xf32>
    %275 = arith.addf %274, %273 : vector<2x128xf32>
    %276 = arith.divf %274, %275 : vector<2x128xf32>
    %277 = arith.mulf %268, %245 : vector<2x128xf32>
    %278 = arith.mulf %262, %270 : vector<2x128xf32>
    %279 = arith.addf %277, %278 : vector<2x128xf32>
    %280 = math.tanh %279 : vector<2x128xf32>
    %281 = arith.mulf %276, %280 : vector<2x128xf32>
    %282 = arith.index_cast %c7_i32 : i32 to index
    %c0_77 = arith.constant 0 : index
    %c0_78 = arith.constant 0 : index
    %283 = vector.load %arg8[%282, %c0_77, %c0_78] : memref<8x2x128xf32, #tpu.memory_space<vmem>>, vector<1x2x128xf32>
    %284 = vector.shape_cast %283 : vector<1x2x128xf32> to vector<2x128xf32>
    %285 = vector.shape_cast %281 : vector<2x128xf32> to vector<1x2x128xf32>
    tpu.vector_store %arg8[%282, %c0_77, %c0_78], %285 {strides = array<i32>} : memref<8x2x128xf32, #tpu.memory_space<vmem>>, vector<1x2x128xf32>,
    %c8_i32 = arith.constant 8 : i32
    %c0_79 = arith.constant 0 : index
    %c0_80 = arith.constant 0 : index
    %c0_81 = arith.constant 0 : index
    %286 = vector.load %arg8[%c0_79, %c0_80, %c0_81] : memref<8x2x128xf32, #tpu.memory_space<vmem>>, vector<8x2x128xf32>
    %287 = vector.shape_cast %286 : vector<8x2x128xf32> to vector<16x128xf32>
    %c0_82 = arith.constant 0 : index
    %c0_83 = arith.constant 0 : index
    %c0_84 = arith.constant 0 : index
    %288 = vector.load %arg3[%c0_82, %c0_83, %c0_84] : memref<1x128x512xf32, #tpu.memory_space<vmem>>, vector<1x128x512xf32>
    %289 = vector.shape_cast %288 : vector<1x128x512xf32> to vector<128x512xf32>
    %cst_85 = arith.constant dense<0.000000e+00> : vector<16x512xf32>
    %290 = tpu.matmul %287, %289, %cst_85 {dimension_numbers = #tpu.dot_dimension_numbers<[1], [0], [0], [1], [0, 0, 1, 1], [], []>} : vector<16x128xf32>, vector<128x512xf32>, vector<16x512xf32> -> vector<16x512xf32>
    %c1 = arith.constant 1 : index
    %c0_86 = arith.constant 0 : index
    %c0_87 = arith.constant 0 : index
    %291 = vector.load %arg5[%c1, %c0_86, %c0_87] : memref<2x1x512xf32, #tpu.memory_space<vmem>>, vector<1x1x512xf32>
    %292 = vector.shape_cast %291 : vector<1x1x512xf32> to vector<1x512xf32>
    %293 = vector.broadcast %292 : vector<1x512xf32> to vector<16x512xf32>
    %294 = arith.addf %290, %293 : vector<16x512xf32>
    %295 = vector.shape_cast %294 : vector<16x512xf32> to vector<8x2x512xf32>
    %c0_88 = arith.constant 0 : index
    %c0_89 = arith.constant 0 : index
    %c0_90 = arith.constant 0 : index
    %296 = vector.load %arg7[%c0_88, %c0_89, %c0_90] : memref<8x2x512xf32, #tpu.memory_space<vmem>>, vector<8x2x512xf32>
    tpu.vector_store %arg7[%c0_88, %c0_89, %c0_90], %295 {strides = array<i32>} : memref<8x2x512xf32, #tpu.memory_space<vmem>>, vector<8x2x512xf32>,
    %c1_91 = arith.constant 1 : index
    %c0_92 = arith.constant 0 : index
    %c0_93 = arith.constant 0 : index
    %297 = vector.load %arg4[%c1_91, %c0_92, %c0_93] : memref<2x128x512xf32, #tpu.memory_space<vmem>>, vector<1x128x512xf32>
    %298 = vector.shape_cast %297 : vector<1x128x512xf32> to vector<128x512xf32>
    %cst_94 = arith.constant 0.000000e+00 : f32
    %299 = vector.broadcast %cst_94 : f32 to vector<2x128xf32>
    %c0_i32_95 = arith.constant 0 : i32
    %300 = arith.index_cast %c0_i32_95 : i32 to index
    %c0_96 = arith.constant 0 : index
    %c0_97 = arith.constant 0 : index
    %301 = vector.load %arg7[%300, %c0_96, %c0_97] : memref<8x2x512xf32, #tpu.memory_space<vmem>>, vector<1x2x512xf32>
    %302 = vector.shape_cast %301 : vector<1x2x512xf32> to vector<2x512xf32>
    %cst_98 = arith.constant dense<0.000000e+00> : vector<2x512xf32>
    %303 = tpu.matmul %299, %298, %cst_98 {dimension_numbers = #tpu.dot_dimension_numbers<[1], [0], [0], [1], [0, 0, 1, 1], [], []>} : vector<2x128xf32>, vector<128x512xf32>, vector<2x512xf32> -> vector<2x512xf32>
    %304 = arith.addf %302, %303 : vector<2x512xf32>
    %305 = vector.extract_strided_slice %304 {offsets = [0, 0], sizes = [2, 128], strides = [1, 1]} : vector<2x512xf32> to vector<2x128xf32>
    %306 = arith.negf %305 : vector<2x128xf32>
    %307 = math.exp %306 : vector<2x128xf32>
    %cst_99 = arith.constant 1.000000e+00 : f32
    %308 = vector.broadcast %cst_99 : f32 to vector<2x128xf32>
    %309 = arith.addf %308, %307 : vector<2x128xf32>
    %310 = arith.divf %308, %309 : vector<2x128xf32>
    %311 = vector.extract_strided_slice %304 {offsets = [0, 128], sizes = [2, 128], strides = [1, 1]} : vector<2x512xf32> to vector<2x128xf32>
    %312 = arith.negf %311 : vector<2x128xf32>
    %313 = math.exp %312 : vector<2x128xf32>
    %cst_100 = arith.constant 1.000000e+00 : f32
    %314 = vector.broadcast %cst_100 : f32 to vector<2x128xf32>
    %315 = arith.addf %314, %313 : vector<2x128xf32>
    %316 = arith.divf %314, %315 : vector<2x128xf32>
    %317 = vector.extract_strided_slice %304 {offsets = [0, 256], sizes = [2, 128], strides = [1, 1]} : vector<2x512xf32> to vector<2x128xf32>
    %318 = math.tanh %317 : vector<2x128xf32>
    %319 = vector.extract_strided_slice %304 {offsets = [0, 384], sizes = [2, 128], strides = [1, 1]} : vector<2x512xf32> to vector<2x128xf32>
    %320 = arith.negf %319 : vector<2x128xf32>
    %321 = math.exp %320 : vector<2x128xf32>
    %cst_101 = arith.constant 1.000000e+00 : f32
    %322 = vector.broadcast %cst_101 : f32 to vector<2x128xf32>
    %323 = arith.addf %322, %321 : vector<2x128xf32>
    %324 = arith.divf %322, %323 : vector<2x128xf32>
    %325 = arith.mulf %316, %299 : vector<2x128xf32>
    %326 = arith.mulf %310, %318 : vector<2x128xf32>
    %327 = arith.addf %325, %326 : vector<2x128xf32>
    %328 = math.tanh %327 : vector<2x128xf32>
    %329 = arith.mulf %324, %328 : vector<2x128xf32>
    %c0_102 = arith.constant 0 : index
    %330 = arith.index_cast %c0_i32_95 : i32 to index
    %c0_103 = arith.constant 0 : index
    %c0_104 = arith.constant 0 : index
    %331 = vector.load %arg6[%c0_102, %330, %c0_103, %c0_104] : memref<1x8x2x128xf32, #tpu.memory_space<vmem>>, vector<1x1x2x128xf32>
    %332 = vector.shape_cast %331 : vector<1x1x2x128xf32> to vector<2x128xf32>
    %333 = vector.shape_cast %329 : vector<2x128xf32> to vector<1x1x2x128xf32>
    tpu.vector_store %arg6[%c0_102, %330, %c0_103, %c0_104], %333 {strides = array<i32>} : memref<1x8x2x128xf32, #tpu.memory_space<vmem>>, vector<1x1x2x128xf32>,
    %c1_i32_105 = arith.constant 1 : i32
    %334 = arith.index_cast %c1_i32_105 : i32 to index
    %c0_106 = arith.constant 0 : index
    %c0_107 = arith.constant 0 : index
    %335 = vector.load %arg7[%334, %c0_106, %c0_107] : memref<8x2x512xf32, #tpu.memory_space<vmem>>, vector<1x2x512xf32>
    %336 = vector.shape_cast %335 : vector<1x2x512xf32> to vector<2x512xf32>
    %cst_108 = arith.constant dense<0.000000e+00> : vector<2x512xf32>
    %337 = tpu.matmul %329, %298, %cst_108 {dimension_numbers = #tpu.dot_dimension_numbers<[1], [0], [0], [1], [0, 0, 1, 1], [], []>} : vector<2x128xf32>, vector<128x512xf32>, vector<2x512xf32> -> vector<2x512xf32>
    %338 = arith.addf %336, %337 : vector<2x512xf32>
    %339 = vector.extract_strided_slice %338 {offsets = [0, 0], sizes = [2, 128], strides = [1, 1]} : vector<2x512xf32> to vector<2x128xf32>
    %340 = arith.negf %339 : vector<2x128xf32>
    %341 = math.exp %340 : vector<2x128xf32>
    %cst_109 = arith.constant 1.000000e+00 : f32
    %342 = vector.broadcast %cst_109 : f32 to vector<2x128xf32>
    %343 = arith.addf %342, %341 : vector<2x128xf32>
    %344 = arith.divf %342, %343 : vector<2x128xf32>
    %345 = vector.extract_strided_slice %338 {offsets = [0, 128], sizes = [2, 128], strides = [1, 1]} : vector<2x512xf32> to vector<2x128xf32>
    %346 = arith.negf %345 : vector<2x128xf32>
    %347 = math.exp %346 : vector<2x128xf32>
    %cst_110 = arith.constant 1.000000e+00 : f32
    %348 = vector.broadcast %cst_110 : f32 to vector<2x128xf32>
    %349 = arith.addf %348, %347 : vector<2x128xf32>
    %350 = arith.divf %348, %349 : vector<2x128xf32>
    %351 = vector.extract_strided_slice %338 {offsets = [0, 256], sizes = [2, 128], strides = [1, 1]} : vector<2x512xf32> to vector<2x128xf32>
    %352 = math.tanh %351 : vector<2x128xf32>
    %353 = vector.extract_strided_slice %338 {offsets = [0, 384], sizes = [2, 128], strides = [1, 1]} : vector<2x512xf32> to vector<2x128xf32>
    %354 = arith.negf %353 : vector<2x128xf32>
    %355 = math.exp %354 : vector<2x128xf32>
    %cst_111 = arith.constant 1.000000e+00 : f32
    %356 = vector.broadcast %cst_111 : f32 to vector<2x128xf32>
    %357 = arith.addf %356, %355 : vector<2x128xf32>
    %358 = arith.divf %356, %357 : vector<2x128xf32>
    %359 = arith.mulf %350, %327 : vector<2x128xf32>
    %360 = arith.mulf %344, %352 : vector<2x128xf32>
    %361 = arith.addf %359, %360 : vector<2x128xf32>
    %362 = math.tanh %361 : vector<2x128xf32>
    %363 = arith.mulf %358, %362 : vector<2x128xf32>
    %c0_112 = arith.constant 0 : index
    %364 = arith.index_cast %c1_i32_105 : i32 to index
    %c0_113 = arith.constant 0 : index
    %c0_114 = arith.constant 0 : index
    %365 = vector.load %arg6[%c0_112, %364, %c0_113, %c0_114] : memref<1x8x2x128xf32, #tpu.memory_space<vmem>>, vector<1x1x2x128xf32>
    %366 = vector.shape_cast %365 : vector<1x1x2x128xf32> to vector<2x128xf32>
    %367 = vector.shape_cast %363 : vector<2x128xf32> to vector<1x1x2x128xf32>
    tpu.vector_store %arg6[%c0_112, %364, %c0_113, %c0_114], %367 {strides = array<i32>} : memref<1x8x2x128xf32, #tpu.memory_space<vmem>>, vector<1x1x2x128xf32>,
    %c2_i32_115 = arith.constant 2 : i32
    %368 = arith.index_cast %c2_i32_115 : i32 to index
    %c0_116 = arith.constant 0 : index
    %c0_117 = arith.constant 0 : index
    %369 = vector.load %arg7[%368, %c0_116, %c0_117] : memref<8x2x512xf32, #tpu.memory_space<vmem>>, vector<1x2x512xf32>
    %370 = vector.shape_cast %369 : vector<1x2x512xf32> to vector<2x512xf32>
    %cst_118 = arith.constant dense<0.000000e+00> : vector<2x512xf32>
    %371 = tpu.matmul %363, %298, %cst_118 {dimension_numbers = #tpu.dot_dimension_numbers<[1], [0], [0], [1], [0, 0, 1, 1], [], []>} : vector<2x128xf32>, vector<128x512xf32>, vector<2x512xf32> -> vector<2x512xf32>
    %372 = arith.addf %370, %371 : vector<2x512xf32>
    %373 = vector.extract_strided_slice %372 {offsets = [0, 0], sizes = [2, 128], strides = [1, 1]} : vector<2x512xf32> to vector<2x128xf32>
    %374 = arith.negf %373 : vector<2x128xf32>
    %375 = math.exp %374 : vector<2x128xf32>
    %cst_119 = arith.constant 1.000000e+00 : f32
    %376 = vector.broadcast %cst_119 : f32 to vector<2x128xf32>
    %377 = arith.addf %376, %375 : vector<2x128xf32>
    %378 = arith.divf %376, %377 : vector<2x128xf32>
    %379 = vector.extract_strided_slice %372 {offsets = [0, 128], sizes = [2, 128], strides = [1, 1]} : vector<2x512xf32> to vector<2x128xf32>
    %380 = arith.negf %379 : vector<2x128xf32>
    %381 = math.exp %380 : vector<2x128xf32>
    %cst_120 = arith.constant 1.000000e+00 : f32
    %382 = vector.broadcast %cst_120 : f32 to vector<2x128xf32>
    %383 = arith.addf %382, %381 : vector<2x128xf32>
    %384 = arith.divf %382, %383 : vector<2x128xf32>
    %385 = vector.extract_strided_slice %372 {offsets = [0, 256], sizes = [2, 128], strides = [1, 1]} : vector<2x512xf32> to vector<2x128xf32>
    %386 = math.tanh %385 : vector<2x128xf32>
    %387 = vector.extract_strided_slice %372 {offsets = [0, 384], sizes = [2, 128], strides = [1, 1]} : vector<2x512xf32> to vector<2x128xf32>
    %388 = arith.negf %387 : vector<2x128xf32>
    %389 = math.exp %388 : vector<2x128xf32>
    %cst_121 = arith.constant 1.000000e+00 : f32
    %390 = vector.broadcast %cst_121 : f32 to vector<2x128xf32>
    %391 = arith.addf %390, %389 : vector<2x128xf32>
    %392 = arith.divf %390, %391 : vector<2x128xf32>
    %393 = arith.mulf %384, %361 : vector<2x128xf32>
    %394 = arith.mulf %378, %386 : vector<2x128xf32>
    %395 = arith.addf %393, %394 : vector<2x128xf32>
    %396 = math.tanh %395 : vector<2x128xf32>
    %397 = arith.mulf %392, %396 : vector<2x128xf32>
    %c0_122 = arith.constant 0 : index
    %398 = arith.index_cast %c2_i32_115 : i32 to index
    %c0_123 = arith.constant 0 : index
    %c0_124 = arith.constant 0 : index
    %399 = vector.load %arg6[%c0_122, %398, %c0_123, %c0_124] : memref<1x8x2x128xf32, #tpu.memory_space<vmem>>, vector<1x1x2x128xf32>
    %400 = vector.shape_cast %399 : vector<1x1x2x128xf32> to vector<2x128xf32>
    %401 = vector.shape_cast %397 : vector<2x128xf32> to vector<1x1x2x128xf32>
    tpu.vector_store %arg6[%c0_122, %398, %c0_123, %c0_124], %401 {strides = array<i32>} : memref<1x8x2x128xf32, #tpu.memory_space<vmem>>, vector<1x1x2x128xf32>,
    %c3_i32_125 = arith.constant 3 : i32
    %402 = arith.index_cast %c3_i32_125 : i32 to index
    %c0_126 = arith.constant 0 : index
    %c0_127 = arith.constant 0 : index
    %403 = vector.load %arg7[%402, %c0_126, %c0_127] : memref<8x2x512xf32, #tpu.memory_space<vmem>>, vector<1x2x512xf32>
    %404 = vector.shape_cast %403 : vector<1x2x512xf32> to vector<2x512xf32>
    %cst_128 = arith.constant dense<0.000000e+00> : vector<2x512xf32>
    %405 = tpu.matmul %397, %298, %cst_128 {dimension_numbers = #tpu.dot_dimension_numbers<[1], [0], [0], [1], [0, 0, 1, 1], [], []>} : vector<2x128xf32>, vector<128x512xf32>, vector<2x512xf32> -> vector<2x512xf32>
    %406 = arith.addf %404, %405 : vector<2x512xf32>
    %407 = vector.extract_strided_slice %406 {offsets = [0, 0], sizes = [2, 128], strides = [1, 1]} : vector<2x512xf32> to vector<2x128xf32>
    %408 = arith.negf %407 : vector<2x128xf32>
    %409 = math.exp %408 : vector<2x128xf32>
    %cst_129 = arith.constant 1.000000e+00 : f32
    %410 = vector.broadcast %cst_129 : f32 to vector<2x128xf32>
    %411 = arith.addf %410, %409 : vector<2x128xf32>
    %412 = arith.divf %410, %411 : vector<2x128xf32>
    %413 = vector.extract_strided_slice %406 {offsets = [0, 128], sizes = [2, 128], strides = [1, 1]} : vector<2x512xf32> to vector<2x128xf32>
    %414 = arith.negf %413 : vector<2x128xf32>
    %415 = math.exp %414 : vector<2x128xf32>
    %cst_130 = arith.constant 1.000000e+00 : f32
    %416 = vector.broadcast %cst_130 : f32 to vector<2x128xf32>
    %417 = arith.addf %416, %415 : vector<2x128xf32>
    %418 = arith.divf %416, %417 : vector<2x128xf32>
    %419 = vector.extract_strided_slice %406 {offsets = [0, 256], sizes = [2, 128], strides = [1, 1]} : vector<2x512xf32> to vector<2x128xf32>
    %420 = math.tanh %419 : vector<2x128xf32>
    %421 = vector.extract_strided_slice %406 {offsets = [0, 384], sizes = [2, 128], strides = [1, 1]} : vector<2x512xf32> to vector<2x128xf32>
    %422 = arith.negf %421 : vector<2x128xf32>
    %423 = math.exp %422 : vector<2x128xf32>
    %cst_131 = arith.constant 1.000000e+00 : f32
    %424 = vector.broadcast %cst_131 : f32 to vector<2x128xf32>
    %425 = arith.addf %424, %423 : vector<2x128xf32>
    %426 = arith.divf %424, %425 : vector<2x128xf32>
    %427 = arith.mulf %418, %395 : vector<2x128xf32>
    %428 = arith.mulf %412, %420 : vector<2x128xf32>
    %429 = arith.addf %427, %428 : vector<2x128xf32>
    %430 = math.tanh %429 : vector<2x128xf32>
    %431 = arith.mulf %426, %430 : vector<2x128xf32>
    %c0_132 = arith.constant 0 : index
    %432 = arith.index_cast %c3_i32_125 : i32 to index
    %c0_133 = arith.constant 0 : index
    %c0_134 = arith.constant 0 : index
    %433 = vector.load %arg6[%c0_132, %432, %c0_133, %c0_134] : memref<1x8x2x128xf32, #tpu.memory_space<vmem>>, vector<1x1x2x128xf32>
    %434 = vector.shape_cast %433 : vector<1x1x2x128xf32> to vector<2x128xf32>
    %435 = vector.shape_cast %431 : vector<2x128xf32> to vector<1x1x2x128xf32>
    tpu.vector_store %arg6[%c0_132, %432, %c0_133, %c0_134], %435 {strides = array<i32>} : memref<1x8x2x128xf32, #tpu.memory_space<vmem>>, vector<1x1x2x128xf32>,
    %c4_i32_135 = arith.constant 4 : i32
    %436 = arith.index_cast %c4_i32_135 : i32 to index
    %c0_136 = arith.constant 0 : index
    %c0_137 = arith.constant 0 : index
    %437 = vector.load %arg7[%436, %c0_136, %c0_137] : memref<8x2x512xf32, #tpu.memory_space<vmem>>, vector<1x2x512xf32>
    %438 = vector.shape_cast %437 : vector<1x2x512xf32> to vector<2x512xf32>
    %cst_138 = arith.constant dense<0.000000e+00> : vector<2x512xf32>
    %439 = tpu.matmul %431, %298, %cst_138 {dimension_numbers = #tpu.dot_dimension_numbers<[1], [0], [0], [1], [0, 0, 1, 1], [], []>} : vector<2x128xf32>, vector<128x512xf32>, vector<2x512xf32> -> vector<2x512xf32>
    %440 = arith.addf %438, %439 : vector<2x512xf32>
    %441 = vector.extract_strided_slice %440 {offsets = [0, 0], sizes = [2, 128], strides = [1, 1]} : vector<2x512xf32> to vector<2x128xf32>
    %442 = arith.negf %441 : vector<2x128xf32>
    %443 = math.exp %442 : vector<2x128xf32>
    %cst_139 = arith.constant 1.000000e+00 : f32
    %444 = vector.broadcast %cst_139 : f32 to vector<2x128xf32>
    %445 = arith.addf %444, %443 : vector<2x128xf32>
    %446 = arith.divf %444, %445 : vector<2x128xf32>
    %447 = vector.extract_strided_slice %440 {offsets = [0, 128], sizes = [2, 128], strides = [1, 1]} : vector<2x512xf32> to vector<2x128xf32>
    %448 = arith.negf %447 : vector<2x128xf32>
    %449 = math.exp %448 : vector<2x128xf32>
    %cst_140 = arith.constant 1.000000e+00 : f32
    %450 = vector.broadcast %cst_140 : f32 to vector<2x128xf32>
    %451 = arith.addf %450, %449 : vector<2x128xf32>
    %452 = arith.divf %450, %451 : vector<2x128xf32>
    %453 = vector.extract_strided_slice %440 {offsets = [0, 256], sizes = [2, 128], strides = [1, 1]} : vector<2x512xf32> to vector<2x128xf32>
    %454 = math.tanh %453 : vector<2x128xf32>
    %455 = vector.extract_strided_slice %440 {offsets = [0, 384], sizes = [2, 128], strides = [1, 1]} : vector<2x512xf32> to vector<2x128xf32>
    %456 = arith.negf %455 : vector<2x128xf32>
    %457 = math.exp %456 : vector<2x128xf32>
    %cst_141 = arith.constant 1.000000e+00 : f32
    %458 = vector.broadcast %cst_141 : f32 to vector<2x128xf32>
    %459 = arith.addf %458, %457 : vector<2x128xf32>
    %460 = arith.divf %458, %459 : vector<2x128xf32>
    %461 = arith.mulf %452, %429 : vector<2x128xf32>
    %462 = arith.mulf %446, %454 : vector<2x128xf32>
    %463 = arith.addf %461, %462 : vector<2x128xf32>
    %464 = math.tanh %463 : vector<2x128xf32>
    %465 = arith.mulf %460, %464 : vector<2x128xf32>
    %c0_142 = arith.constant 0 : index
    %466 = arith.index_cast %c4_i32_135 : i32 to index
    %c0_143 = arith.constant 0 : index
    %c0_144 = arith.constant 0 : index
    %467 = vector.load %arg6[%c0_142, %466, %c0_143, %c0_144] : memref<1x8x2x128xf32, #tpu.memory_space<vmem>>, vector<1x1x2x128xf32>
    %468 = vector.shape_cast %467 : vector<1x1x2x128xf32> to vector<2x128xf32>
    %469 = vector.shape_cast %465 : vector<2x128xf32> to vector<1x1x2x128xf32>
    tpu.vector_store %arg6[%c0_142, %466, %c0_143, %c0_144], %469 {strides = array<i32>} : memref<1x8x2x128xf32, #tpu.memory_space<vmem>>, vector<1x1x2x128xf32>,
    %c5_i32_145 = arith.constant 5 : i32
    %470 = arith.index_cast %c5_i32_145 : i32 to index
    %c0_146 = arith.constant 0 : index
    %c0_147 = arith.constant 0 : index
    %471 = vector.load %arg7[%470, %c0_146, %c0_147] : memref<8x2x512xf32, #tpu.memory_space<vmem>>, vector<1x2x512xf32>
    %472 = vector.shape_cast %471 : vector<1x2x512xf32> to vector<2x512xf32>
    %cst_148 = arith.constant dense<0.000000e+00> : vector<2x512xf32>
    %473 = tpu.matmul %465, %298, %cst_148 {dimension_numbers = #tpu.dot_dimension_numbers<[1], [0], [0], [1], [0, 0, 1, 1], [], []>} : vector<2x128xf32>, vector<128x512xf32>, vector<2x512xf32> -> vector<2x512xf32>
    %474 = arith.addf %472, %473 : vector<2x512xf32>
    %475 = vector.extract_strided_slice %474 {offsets = [0, 0], sizes = [2, 128], strides = [1, 1]} : vector<2x512xf32> to vector<2x128xf32>
    %476 = arith.negf %475 : vector<2x128xf32>
    %477 = math.exp %476 : vector<2x128xf32>
    %cst_149 = arith.constant 1.000000e+00 : f32
    %478 = vector.broadcast %cst_149 : f32 to vector<2x128xf32>
    %479 = arith.addf %478, %477 : vector<2x128xf32>
    %480 = arith.divf %478, %479 : vector<2x128xf32>
    %481 = vector.extract_strided_slice %474 {offsets = [0, 128], sizes = [2, 128], strides = [1, 1]} : vector<2x512xf32> to vector<2x128xf32>
    %482 = arith.negf %481 : vector<2x128xf32>
    %483 = math.exp %482 : vector<2x128xf32>
    %cst_150 = arith.constant 1.000000e+00 : f32
    %484 = vector.broadcast %cst_150 : f32 to vector<2x128xf32>
    %485 = arith.addf %484, %483 : vector<2x128xf32>
    %486 = arith.divf %484, %485 : vector<2x128xf32>
    %487 = vector.extract_strided_slice %474 {offsets = [0, 256], sizes = [2, 128], strides = [1, 1]} : vector<2x512xf32> to vector<2x128xf32>
    %488 = math.tanh %487 : vector<2x128xf32>
    %489 = vector.extract_strided_slice %474 {offsets = [0, 384], sizes = [2, 128], strides = [1, 1]} : vector<2x512xf32> to vector<2x128xf32>
    %490 = arith.negf %489 : vector<2x128xf32>
    %491 = math.exp %490 : vector<2x128xf32>
    %cst_151 = arith.constant 1.000000e+00 : f32
    %492 = vector.broadcast %cst_151 : f32 to vector<2x128xf32>
    %493 = arith.addf %492, %491 : vector<2x128xf32>
    %494 = arith.divf %492, %493 : vector<2x128xf32>
    %495 = arith.mulf %486, %463 : vector<2x128xf32>
    %496 = arith.mulf %480, %488 : vector<2x128xf32>
    %497 = arith.addf %495, %496 : vector<2x128xf32>
    %498 = math.tanh %497 : vector<2x128xf32>
    %499 = arith.mulf %494, %498 : vector<2x128xf32>
    %c0_152 = arith.constant 0 : index
    %500 = arith.index_cast %c5_i32_145 : i32 to index
    %c0_153 = arith.constant 0 : index
    %c0_154 = arith.constant 0 : index
    %501 = vector.load %arg6[%c0_152, %500, %c0_153, %c0_154] : memref<1x8x2x128xf32, #tpu.memory_space<vmem>>, vector<1x1x2x128xf32>
    %502 = vector.shape_cast %501 : vector<1x1x2x128xf32> to vector<2x128xf32>
    %503 = vector.shape_cast %499 : vector<2x128xf32> to vector<1x1x2x128xf32>
    tpu.vector_store %arg6[%c0_152, %500, %c0_153, %c0_154], %503 {strides = array<i32>} : memref<1x8x2x128xf32, #tpu.memory_space<vmem>>, vector<1x1x2x128xf32>,
    %c6_i32_155 = arith.constant 6 : i32
    %504 = arith.index_cast %c6_i32_155 : i32 to index
    %c0_156 = arith.constant 0 : index
    %c0_157 = arith.constant 0 : index
    %505 = vector.load %arg7[%504, %c0_156, %c0_157] : memref<8x2x512xf32, #tpu.memory_space<vmem>>, vector<1x2x512xf32>
    %506 = vector.shape_cast %505 : vector<1x2x512xf32> to vector<2x512xf32>
    %cst_158 = arith.constant dense<0.000000e+00> : vector<2x512xf32>
    %507 = tpu.matmul %499, %298, %cst_158 {dimension_numbers = #tpu.dot_dimension_numbers<[1], [0], [0], [1], [0, 0, 1, 1], [], []>} : vector<2x128xf32>, vector<128x512xf32>, vector<2x512xf32> -> vector<2x512xf32>
    %508 = arith.addf %506, %507 : vector<2x512xf32>
    %509 = vector.extract_strided_slice %508 {offsets = [0, 0], sizes = [2, 128], strides = [1, 1]} : vector<2x512xf32> to vector<2x128xf32>
    %510 = arith.negf %509 : vector<2x128xf32>
    %511 = math.exp %510 : vector<2x128xf32>
    %cst_159 = arith.constant 1.000000e+00 : f32
    %512 = vector.broadcast %cst_159 : f32 to vector<2x128xf32>
    %513 = arith.addf %512, %511 : vector<2x128xf32>
    %514 = arith.divf %512, %513 : vector<2x128xf32>
    %515 = vector.extract_strided_slice %508 {offsets = [0, 128], sizes = [2, 128], strides = [1, 1]} : vector<2x512xf32> to vector<2x128xf32>
    %516 = arith.negf %515 : vector<2x128xf32>
    %517 = math.exp %516 : vector<2x128xf32>
    %cst_160 = arith.constant 1.000000e+00 : f32
    %518 = vector.broadcast %cst_160 : f32 to vector<2x128xf32>
    %519 = arith.addf %518, %517 : vector<2x128xf32>
    %520 = arith.divf %518, %519 : vector<2x128xf32>
    %521 = vector.extract_strided_slice %508 {offsets = [0, 256], sizes = [2, 128], strides = [1, 1]} : vector<2x512xf32> to vector<2x128xf32>
    %522 = math.tanh %521 : vector<2x128xf32>
    %523 = vector.extract_strided_slice %508 {offsets = [0, 384], sizes = [2, 128], strides = [1, 1]} : vector<2x512xf32> to vector<2x128xf32>
    %524 = arith.negf %523 : vector<2x128xf32>
    %525 = math.exp %524 : vector<2x128xf32>
    %cst_161 = arith.constant 1.000000e+00 : f32
    %526 = vector.broadcast %cst_161 : f32 to vector<2x128xf32>
    %527 = arith.addf %526, %525 : vector<2x128xf32>
    %528 = arith.divf %526, %527 : vector<2x128xf32>
    %529 = arith.mulf %520, %497 : vector<2x128xf32>
    %530 = arith.mulf %514, %522 : vector<2x128xf32>
    %531 = arith.addf %529, %530 : vector<2x128xf32>
    %532 = math.tanh %531 : vector<2x128xf32>
    %533 = arith.mulf %528, %532 : vector<2x128xf32>
    %c0_162 = arith.constant 0 : index
    %534 = arith.index_cast %c6_i32_155 : i32 to index
    %c0_163 = arith.constant 0 : index
    %c0_164 = arith.constant 0 : index
    %535 = vector.load %arg6[%c0_162, %534, %c0_163, %c0_164] : memref<1x8x2x128xf32, #tpu.memory_space<vmem>>, vector<1x1x2x128xf32>
    %536 = vector.shape_cast %535 : vector<1x1x2x128xf32> to vector<2x128xf32>
    %537 = vector.shape_cast %533 : vector<2x128xf32> to vector<1x1x2x128xf32>
    tpu.vector_store %arg6[%c0_162, %534, %c0_163, %c0_164], %537 {strides = array<i32>} : memref<1x8x2x128xf32, #tpu.memory_space<vmem>>, vector<1x1x2x128xf32>,
    %c7_i32_165 = arith.constant 7 : i32
    %538 = arith.index_cast %c7_i32_165 : i32 to index
    %c0_166 = arith.constant 0 : index
    %c0_167 = arith.constant 0 : index
    %539 = vector.load %arg7[%538, %c0_166, %c0_167] : memref<8x2x512xf32, #tpu.memory_space<vmem>>, vector<1x2x512xf32>
    %540 = vector.shape_cast %539 : vector<1x2x512xf32> to vector<2x512xf32>
    %cst_168 = arith.constant dense<0.000000e+00> : vector<2x512xf32>
    %541 = tpu.matmul %533, %298, %cst_168 {dimension_numbers = #tpu.dot_dimension_numbers<[1], [0], [0], [1], [0, 0, 1, 1], [], []>} : vector<2x128xf32>, vector<128x512xf32>, vector<2x512xf32> -> vector<2x512xf32>
    %542 = arith.addf %540, %541 : vector<2x512xf32>
    %543 = vector.extract_strided_slice %542 {offsets = [0, 0], sizes = [2, 128], strides = [1, 1]} : vector<2x512xf32> to vector<2x128xf32>
    %544 = arith.negf %543 : vector<2x128xf32>
    %545 = math.exp %544 : vector<2x128xf32>
    %cst_169 = arith.constant 1.000000e+00 : f32
    %546 = vector.broadcast %cst_169 : f32 to vector<2x128xf32>
    %547 = arith.addf %546, %545 : vector<2x128xf32>
    %548 = arith.divf %546, %547 : vector<2x128xf32>
    %549 = vector.extract_strided_slice %542 {offsets = [0, 128], sizes = [2, 128], strides = [1, 1]} : vector<2x512xf32> to vector<2x128xf32>
    %550 = arith.negf %549 : vector<2x128xf32>
    %551 = math.exp %550 : vector<2x128xf32>
    %cst_170 = arith.constant 1.000000e+00 : f32
    %552 = vector.broadcast %cst_170 : f32 to vector<2x128xf32>
    %553 = arith.addf %552, %551 : vector<2x128xf32>
    %554 = arith.divf %552, %553 : vector<2x128xf32>
    %555 = vector.extract_strided_slice %542 {offsets = [0, 256], sizes = [2, 128], strides = [1, 1]} : vector<2x512xf32> to vector<2x128xf32>
    %556 = math.tanh %555 : vector<2x128xf32>
    %557 = vector.extract_strided_slice %542 {offsets = [0, 384], sizes = [2, 128], strides = [1, 1]} : vector<2x512xf32> to vector<2x128xf32>
    %558 = arith.negf %557 : vector<2x128xf32>
    %559 = math.exp %558 : vector<2x128xf32>
    %cst_171 = arith.constant 1.000000e+00 : f32
    %560 = vector.broadcast %cst_171 : f32 to vector<2x128xf32>
    %561 = arith.addf %560, %559 : vector<2x128xf32>
    %562 = arith.divf %560, %561 : vector<2x128xf32>
    %563 = arith.mulf %554, %531 : vector<2x128xf32>
    %564 = arith.mulf %548, %556 : vector<2x128xf32>
    %565 = arith.addf %563, %564 : vector<2x128xf32>
    %566 = math.tanh %565 : vector<2x128xf32>
    %567 = arith.mulf %562, %566 : vector<2x128xf32>
    %c0_172 = arith.constant 0 : index
    %568 = arith.index_cast %c7_i32_165 : i32 to index
    %c0_173 = arith.constant 0 : index
    %c0_174 = arith.constant 0 : index
    %569 = vector.load %arg6[%c0_172, %568, %c0_173, %c0_174] : memref<1x8x2x128xf32, #tpu.memory_space<vmem>>, vector<1x1x2x128xf32>
    %570 = vector.shape_cast %569 : vector<1x1x2x128xf32> to vector<2x128xf32>
    %571 = vector.shape_cast %567 : vector<2x128xf32> to vector<1x1x2x128xf32>
    tpu.vector_store %arg6[%c0_172, %568, %c0_173, %c0_174], %571 {strides = array<i32>} : memref<1x8x2x128xf32, #tpu.memory_space<vmem>>, vector<1x1x2x128xf32>,
    %c8_i32_175 = arith.constant 8 : i32
    return
  }
  func.func @transform_0(%arg0: i32) -> (i32, i32, i32, i32) {
    %c0_i32 = arith.constant 0 : i32
    %c0_i32_0 = arith.constant 0 : i32
    %c0_i32_1 = arith.constant 0 : i32
    %c0_i32_2 = arith.constant 0 : i32
    return %arg0, %c0_i32, %c0_i32_0, %c0_i32_1 : i32, i32, i32, i32
  }
  func.func @transform_1(%arg0: i32) -> (i32, i32) {
    %c0_i32 = arith.constant 0 : i32
    %c0_i32_0 = arith.constant 0 : i32
    %c0_i32_1 = arith.constant 0 : i32
    return %c0_i32, %c0_i32_0 : i32, i32
  }
  func.func @transform_2(%arg0: i32) -> (i32, i32, i32) {
    %c0_i32 = arith.constant 0 : i32
    %c0_i32_0 = arith.constant 0 : i32
    %c0_i32_1 = arith.constant 0 : i32
    %c0_i32_2 = arith.constant 0 : i32
    return %c0_i32, %c0_i32_0, %c0_i32_1 : i32, i32, i32
  }
  func.func @transform_3(%arg0: i32) -> (i32, i32, i32) {
    %c0_i32 = arith.constant 0 : i32
    %c0_i32_0 = arith.constant 0 : i32
    %c0_i32_1 = arith.constant 0 : i32
    %c0_i32_2 = arith.constant 0 : i32
    return %c0_i32, %c0_i32_0, %c0_i32_1 : i32, i32, i32
  }
  func.func @transform_4(%arg0: i32) -> (i32, i32, i32) {
    %c0_i32 = arith.constant 0 : i32
    %c0_i32_0 = arith.constant 0 : i32
    %c0_i32_1 = arith.constant 0 : i32
    %c0_i32_2 = arith.constant 0 : i32
    return %c0_i32, %c0_i32_0, %c0_i32_1 : i32, i32, i32
  }
  func.func @transform_5(%arg0: i32) -> (i32, i32, i32, i32) {
    %c0_i32 = arith.constant 0 : i32
    %c0_i32_0 = arith.constant 0 : i32
    %c0_i32_1 = arith.constant 0 : i32
    %c0_i32_2 = arith.constant 0 : i32
    return %arg0, %c0_i32, %c0_i32_0, %c0_i32_1 : i32, i32, i32, i32
  }
}

</mosaic_0001>

<llo_original>
// kernel: tpu_custom_call.1
$region0: #{tpu_custom_call.1}
  #allocation0 [shape = 'u32[]', space=smem, size = 0x4, offset = 0x4, fixed_abs, tag = 'smem constant byte address 0x4 - core index']
  #allocation1 [shape = 'u32[72,128]{1,0:T(1,128)}', space=vmem, size = 0x9000, scoped, tag = 'internal scratch']
  #allocation2 [shape = 'f32[8,2,512]{2,1,0:T(2,128)}', space=vmem, size = 0x8000, scoped, tag = 'scratch operand']
  #allocation3 [shape = 'f32[8,2,128]{2,1,0:T(2,128)}', space=vmem, size = 0x2000, scoped, tag = 'scratch operand']
  %s0 = inlined_call_operand.hbm [shape: f32[1,8,2,16], index: 0, kind: input, shape index: {}]
  %s1 = inlined_call_operand.hbm [shape: f32[16,512], index: 1, kind: input, shape index: {}]
  %s2 = inlined_call_operand.hbm [shape: f32[1,128,512], index: 2, kind: input, shape index: {}]
  %s3 = inlined_call_operand.hbm [shape: f32[2,128,512], index: 3, kind: input, shape index: {}]
  %s4 = inlined_call_operand.hbm [shape: f32[2,1,512], index: 4, kind: input, shape index: {}]
  %s5 = inlined_call_operand.hbm [shape: f32[1,8,2,128], index: 5, kind: output, shape index: {}]
  %s6 = sld [smem:[#allocation0]]
  $region50: #{tpu_custom_call.1} parent=0
    _
  %s8 = ssub.s32 1, %s6
  %s9 = scalar_select 0, %s8, %s6
  $region1: #{tpu_custom_call.1} parent=0
    #allocation4 [shape = 'u8[8192]{0}', space=vmem, size = 0x2000, scoped, tag = 'input window, operand 0, single buffered']
    #allocation5 [shape = 's32[1]{0}', space=sflag, size = 0x4, scoped, tag = 'scoped memory for tpu_custom_call.1']
    #allocation6 [shape = 's32[1]{0}', space=sflag, size = 0x4, scoped, tag = 'scoped memory for tpu_custom_call.1']
    #allocation7 [shape = 'u8[32768]{0}', space=vmem, size = 0x8000, scoped, tag = 'input window, operand 1, single buffered']
    #allocation8 [shape = 's32[1]{0}', space=sflag, size = 0x4, scoped, tag = 'scoped memory for tpu_custom_call.1']
    #allocation9 [shape = 'u8[262144]{0}', space=vmem, size = 0x40000, scoped, tag = 'input window, operand 2, single buffered']
    #allocation10 [shape = 'u8[524288]{0}', space=vmem, size = 0x80000, scoped, tag = 'input window, operand 3, single buffered']
    #allocation11 [shape = 's32[1]{0}', space=sflag, size = 0x4, scoped, tag = 'scoped memory for tpu_custom_call.1']
    #allocation12 [shape = 'u8[4096]{0}', space=vmem, size = 0x1000, scoped, tag = 'input window, operand 4, single buffered']
    #allocation13 [shape = 'u8[8192]{0}', space=vmem, size = 0x2000, scoped, tag = 'output window, operand 0, single buffered']
    %10 = vsyncpa [#allocation5], 0
    %11 = vsyncpa [#allocation8], 0
    %12 = vsyncpa [#allocation11], 0
    %13 = vsyncpa [#allocation6], 0
    // Predicated region
    $region2: #{tpu_custom_call.1} parent=1 // pred_check
      _
    $region3: #{tpu_custom_call.1} parent=1 // pred_check_branch
      %15 = sbr.rel (0) target = $region5
    $region4: #{tpu_custom_call.1} parent=1 // pred_region
      %17 = vsyncadd [#allocation5], 0
      %s18 = sshll.u32 %s0, 4
      %s19 = int_to_ptr.hbm [resolvable:$true] %s18
      %s20 = sshll.u32 [#allocation4], 4
      %s21 = int_to_ptr.vmem [resolvable:$true] %s20
      %26 = dma.hbm_to_vmem [thread:$0]  %s19, 256, %s21, [#allocation5], 32, 32, 2
    $region5: #{tpu_custom_call.1} parent=1 // pred_fallthru
      _
    // Predicated region
    $region6: #{tpu_custom_call.1} parent=1 // pred_check
      _
    $region7: #{tpu_custom_call.1} parent=1 // pred_check_branch
      %28 = sbr.rel (0) target = $region9
    $region8: #{tpu_custom_call.1} parent=1 // pred_region
      %30 = vsyncadd [#allocation8], 0
      %s31 = sshll.u32 %s1, 4
      %s32 = int_to_ptr.hbm [resolvable:$true] %s31
      %s33 = sshll.u32 [#allocation7], 4
      %s34 = int_to_ptr.vmem [resolvable:$true] %s33
      %39 = dma.hbm_to_vmem [thread:$0]  %s32, 1024, %s34, [#allocation8], 512, 512, 32
    $region9: #{tpu_custom_call.1} parent=1 // pred_fallthru
      _
    // Predicated region
    $region10: #{tpu_custom_call.1} parent=1 // pred_check
      _
    $region11: #{tpu_custom_call.1} parent=1 // pred_check_branch
      %41 = sbr.rel (0) target = $region13
    $region12: #{tpu_custom_call.1} parent=1 // pred_region
      %43 = vsyncadd [#allocation8], 0
      %s44 = sshll.u32 %s2, 4
      %s45 = int_to_ptr.hbm [resolvable:$true] %s44
      %s46 = sshll.u32 [#allocation9], 4
      %s47 = int_to_ptr.vmem [resolvable:$true] %s46
      %52 = dma.hbm_to_vmem [thread:$0]  %s45, 8192, %s47, [#allocation8], 512, 512, 32
    $region13: #{tpu_custom_call.1} parent=1 // pred_fallthru
      _
    // Predicated region
    $region14: #{tpu_custom_call.1} parent=1 // pred_check
      _
    $region15: #{tpu_custom_call.1} parent=1 // pred_check_branch
      %54 = sbr.rel (0) target = $region17
    $region16: #{tpu_custom_call.1} parent=1 // pred_region
      %56 = vsyncadd [#allocation11], 0
      %s57 = sshll.u32 %s3, 4
      %s58 = int_to_ptr.hbm [resolvable:$true] %s57
      %s59 = sshll.u32 [#allocation10], 4
      %s60 = int_to_ptr.vmem [resolvable:$true] %s59
      %65 = dma.hbm_to_vmem [thread:$0]  %s58, 16384, %s60, [#allocation11], 512, 512, 32
    $region17: #{tpu_custom_call.1} parent=1 // pred_fallthru
      _
    // Predicated region
    $region18: #{tpu_custom_call.1} parent=1 // pred_check
      _
    $region19: #{tpu_custom_call.1} parent=1 // pred_check_branch
      %67 = sbr.rel (0) target = $region21
    $region20: #{tpu_custom_call.1} parent=1 // pred_region
      %69 = vsyncadd [#allocation11], 0
      %s70 = sshll.u32 %s4, 4
      %s71 = int_to_ptr.hbm [resolvable:$true] %s70
      %s72 = sshll.u32 [#allocation12], 4
      %s73 = int_to_ptr.vmem [resolvable:$true] %s72
      %78 = dma.hbm_to_vmem [thread:$0]  %s71, 128, %s73, [#allocation11], 64, 64, 4
    $region21: #{tpu_custom_call.1} parent=1 // pred_fallthru
      _
    // Predicated region
    $region22: #{tpu_custom_call.1} parent=1 // pred_check
      _
    $region23: #{tpu_custom_call.1} parent=1 // pred_check_branch
      %80 = sbr.rel (0) target = $region25
    $region24: #{tpu_custom_call.1} parent=1 // pred_region
      %82 = dma.done [#allocation5], 256
    $region25: #{tpu_custom_call.1} parent=1 // pred_fallthru
      _
    // Predicated region
    $region26: #{tpu_custom_call.1} parent=1 // pred_check
      _
    $region27: #{tpu_custom_call.1} parent=1 // pred_check_branch
      %84 = sbr.rel (0) target = $region29
    $region28: #{tpu_custom_call.1} parent=1 // pred_region
      %86 = dma.done [#allocation8], 1024
    $region29: #{tpu_custom_call.1} parent=1 // pred_fallthru
      _
    // Predicated region
    $region30: #{tpu_custom_call.1} parent=1 // pred_check
      _
    $region31: #{tpu_custom_call.1} parent=1 // pred_check_branch
      %88 = sbr.rel (0) target = $region33
    $region32: #{tpu_custom_call.1} parent=1 // pred_region
      %90 = dma.done [#allocation8], 8192
    $region33: #{tpu_custom_call.1} parent=1 // pred_fallthru
      _
    // Predicated region
    $region34: #{tpu_custom_call.1} parent=1 // pred_check
      _
    $region35: #{tpu_custom_call.1} parent=1 // pred_check_branch
      %92 = sbr.rel (0) target = $region37
    $region36: #{tpu_custom_call.1} parent=1 // pred_region
      %94 = dma.done [#allocation11], 16384
    $region37: #{tpu_custom_call.1} parent=1 // pred_fallthru
      _
    // Predicated region
    $region38: #{tpu_custom_call.1} parent=1 // pred_check
      _
    $region39: #{tpu_custom_call.1} parent=1 // pred_check_branch
      %96 = sbr.rel (0) target = $region41
    $region40: #{tpu_custom_call.1} parent=1 // pred_region
      %98 = dma.done [#allocation11], 128
    $region41: #{tpu_custom_call.1} parent=1 // pred_fallthru
      _
    %v99 = vld [vmem:[#allocation4] sm:$0x3]
    %v100 = vld [vmem:[#allocation4 + $0x2] sm:$0x3]
    %v101 = vld [vmem:[#allocation4 + $0x4] sm:$0x3]
    %v102 = vld [vmem:[#allocation4 + $0x6] sm:$0x3]
    %v103 = vld [vmem:[#allocation4 + $0x8] sm:$0x3]
    %v104 = vld [vmem:[#allocation4 + $0xa] sm:$0x3]
    %v105 = vld [vmem:[#allocation4 + $0xc] sm:$0x3]
    %v106 = vld [vmem:[#allocation4 + $0xe] sm:$0x3]
    %v107 = vld [vmem:[#allocation7] sm:$0xff]
    %v108 = vld [vmem:[#allocation7 + $0x8] sm:$0xff]
    %v109 = vld [vmem:[#allocation7 + $0x10] sm:$0xff]
    %v110 = vld [vmem:[#allocation7 + $0x18] sm:$0xff]
    %v111 = vld [vmem:[#allocation7 + $0x20] sm:$0xff]
    %v112 = vld [vmem:[#allocation7 + $0x28] sm:$0xff]
    %v113 = vld [vmem:[#allocation7 + $0x30] sm:$0xff]
    %v114 = vld [vmem:[#allocation7 + $0x38] sm:$0xff]
    %v115 = vld [vmem:[#allocation12] sm:$0xf]
    %v117 = vperm.slane %v115, 0
    %v118 = vperm.slane %v115, 1
    %v119 = vperm.slane %v115, 2
    %v120 = vperm.slane %v115, 3
    %133 = vst [vmem:[#allocation1] ss:$4 sm:$0xff] %v99
    %s134 = scalar_lea.vmem [#allocation1], 1
    %135 = vst [vmem:[%s134] ss:$4 sm:$0xff] %v100
    %s136 = scalar_lea.vmem [#allocation1], 2
    %137 = vst [vmem:[%s136] ss:$4 sm:$0xff] %v101
    %s138 = scalar_lea.vmem [#allocation1], 3
    %139 = vst [vmem:[%s138] ss:$4 sm:$0xff] %v102
    %s140 = scalar_lea.vmem [#allocation1], 32
    %141 = vst [vmem:[%s140] ss:$4 sm:$0xff] %v103
    %s142 = scalar_lea.vmem [#allocation1], 33
    %143 = vst [vmem:[%s142] ss:$4 sm:$0xff] %v104
    %s144 = scalar_lea.vmem [#allocation1], 34
    %145 = vst [vmem:[%s144] ss:$4 sm:$0xff] %v105
    %s146 = scalar_lea.vmem [#allocation1], 35
    %147 = vst [vmem:[%s146] ss:$4 sm:$0xff] %v106
    %v148 = vld.sshfl [vmem:[#allocation1] sm:$0xff pattern:$0x73625140]
    %v149 = vld.sshfl [vmem:[#allocation1 + $0x20] sm:$0xff pattern:$0x73625140]
    %vm150 = vcmask 130048
    %v151 = vsel %vm150, %v148, 0
    %v153 = vsel %vm150, %v149, 0
    %155 = vmatpush.msra.mxu0 0.0
    %156 = vmatpush.msra.mxu0 0.0
    %157 = vmatpush.msra.mxu0 0.0
    %158 = vmatpush.msra.mxu0 0.0
    %159 = vmatpush.msra.mxu0 0.0
    %160 = vmatpush.msra.mxu0 0.0
    %161 = vmatpush.msra.mxu0 0.0
    %162 = vmatpush.msra.mxu0 0.0
    %163 = vmatpush.msra.mxu0 0.0
    %164 = vmatpush.msra.mxu0 0.0
    %165 = vmatpush.msra.mxu0 0.0
    %166 = vmatpush.msra.mxu0 0.0
    %167 = vmatpush.msra.mxu0 0.0
    %168 = vmatpush.msra.mxu0 0.0
    %169 = vmatpush.msra.mxu0 %v111
    %170 = vmatpush.msra.mxu0 %v107
    %171 = vmatmul.f32.gmra.mxu0 %v151
    %v172 = vpop.f32.mrf.mxu0
    %v173 = vadd.f32 %v117, %v172
    %174 = vmatmul.f32.gmra.mxu0 %v153
    %v175 = vpop.f32.mrf.mxu0
    %v176 = vadd.f32 %v117, %v175
    %177 = vdwg.mxu0
    %178 = vmatpush.msra.mxu0 0.0
    %179 = vmatpush.msra.mxu0 0.0
    %180 = vmatpush.msra.mxu0 0.0
    %181 = vmatpush.msra.mxu0 0.0
    %182 = vmatpush.msra.mxu0 0.0
    %183 = vmatpush.msra.mxu0 0.0
    %184 = vmatpush.msra.mxu0 0.0
    %185 = vmatpush.msra.mxu0 0.0
    %186 = vmatpush.msra.mxu0 0.0
    %187 = vmatpush.msra.mxu0 0.0
    %188 = vmatpush.msra.mxu0 0.0
    %189 = vmatpush.msra.mxu0 0.0
    %190 = vmatpush.msra.mxu0 0.0
    %191 = vmatpush.msra.mxu0 0.0
    %192 = vmatpush.msra.mxu0 %v112
    %193 = vmatpush.msra.mxu0 %v108
    %194 = vmatmul.f32.gmra.mxu0 %v151
    %v195 = vpop.f32.mrf.mxu0
    %v196 = vadd.f32 %v118, %v195
    %197 = vmatmul.f32.gmra.mxu0 %v153
    %v198 = vpop.f32.mrf.mxu0
    %v199 = vadd.f32 %v118, %v198
    %200 = vdwg.mxu0
    %201 = vmatpush.msra.mxu0 0.0
    %202 = vmatpush.msra.mxu0 0.0
    %203 = vmatpush.msra.mxu0 0.0
    %204 = vmatpush.msra.mxu0 0.0
    %205 = vmatpush.msra.mxu0 0.0
    %206 = vmatpush.msra.mxu0 0.0
    %207 = vmatpush.msra.mxu0 0.0
    %208 = vmatpush.msra.mxu0 0.0
    %209 = vmatpush.msra.mxu0 0.0
    %210 = vmatpush.msra.mxu0 0.0
    %211 = vmatpush.msra.mxu0 0.0
    %212 = vmatpush.msra.mxu0 0.0
    %213 = vmatpush.msra.mxu0 0.0
    %214 = vmatpush.msra.mxu0 0.0
    %215 = vmatpush.msra.mxu0 %v113
    %216 = vmatpush.msra.mxu0 %v109
    %217 = vmatmul.f32.gmra.mxu0 %v151
    %v218 = vpop.f32.mrf.mxu0
    %v219 = vadd.f32 %v119, %v218
    %220 = vmatmul.f32.gmra.mxu0 %v153
    %v221 = vpop.f32.mrf.mxu0
    %v222 = vadd.f32 %v119, %v221
    %223 = vdwg.mxu0
    %224 = vmatpush.msra.mxu0 0.0
    %225 = vmatpush.msra.mxu0 0.0
    %226 = vmatpush.msra.mxu0 0.0
    %227 = vmatpush.msra.mxu0 0.0
    %228 = vmatpush.msra.mxu0 0.0
    %229 = vmatpush.msra.mxu0 0.0
    %230 = vmatpush.msra.mxu0 0.0
    %231 = vmatpush.msra.mxu0 0.0
    %232 = vmatpush.msra.mxu0 0.0
    %233 = vmatpush.msra.mxu0 0.0
    %234 = vmatpush.msra.mxu0 0.0
    %235 = vmatpush.msra.mxu0 0.0
    %236 = vmatpush.msra.mxu0 0.0
    %237 = vmatpush.msra.mxu0 0.0
    %238 = vmatpush.msra.mxu0 %v114
    %239 = vmatpush.msra.mxu0 %v110
    %240 = vmatmul.f32.gmra.mxu0 %v151
    %v241 = vpop.f32.mrf.mxu0
    %v242 = vadd.f32 %v120, %v241
    %243 = vmatmul.f32.gmra.mxu0 %v153
    %v244 = vpop.f32.mrf.mxu0
    %v245 = vadd.f32 %v120, %v244
    %246 = vdwg.mxu0
    %v255 = vrot.slane %v196, 6
    %v256 = vrot.slane %v219, 4
    %v257 = vrot.slane %v242, 2
    %v258 = vrot.slane %v199, 6
    %v259 = vrot.slane %v222, 4
    %v260 = vrot.slane %v245, 2
    %vm261 = vcmask 1041408
    %v262 = vsel %vm261, %v173, %v255
    %vm263 = vcmask 1045508
    %v264 = vsel %vm263, %v256, %v257
    %vm265 = vcmask 1043456
    %v266 = vsel %vm265, %v262, %v264
    %vm267 = vcmask 1043458
    %v268 = vsel %vm267, %v173, %v255
    %vm269 = vcmask 1045504
    %v270 = vsel %vm269, %v257, %v256
    %vm271 = vcmask 1045506
    %v272 = vsel %vm271, %v268, %v270
    %v273 = vrot.slane %v272, 2
    %v274 = vsel %vm263, %v173, %v255
    %v275 = vsel %vm261, %v256, %v257
    %v276 = vsel %vm265, %v275, %v274
    %v277 = vrot.slane %v276, 4
    %v278 = vsel %vm269, %v255, %v173
    %v279 = vsel %vm267, %v256, %v257
    %v280 = vsel %vm271, %v279, %v278
    %v281 = vrot.slane %v280, 6
    %v282 = vsel %vm261, %v176, %v258
    %v283 = vsel %vm263, %v259, %v260
    %v284 = vsel %vm265, %v282, %v283
    %v285 = vsel %vm267, %v176, %v258
    %v286 = vsel %vm269, %v260, %v259
    %v287 = vsel %vm271, %v285, %v286
    %v288 = vrot.slane %v287, 2
    %v289 = vsel %vm263, %v176, %v258
    %v290 = vsel %vm261, %v259, %v260
    %v291 = vsel %vm265, %v290, %v289
    %v292 = vrot.slane %v291, 4
    %v293 = vsel %vm269, %v258, %v176
    %v294 = vsel %vm267, %v259, %v260
    %v295 = vsel %vm271, %v294, %v293
    %v296 = vrot.slane %v295, 6
    %305 = vst [vmem:[#allocation2] sm:$0xff] %v266
    %306 = vst [vmem:[#allocation2 + $0x8] sm:$0xff] %v273
    %307 = vst [vmem:[#allocation2 + $0x10] sm:$0xff] %v277
    %308 = vst [vmem:[#allocation2 + $0x18] sm:$0xff] %v281
    %309 = vst [vmem:[#allocation2 + $0x20] sm:$0xff] %v284
    %310 = vst [vmem:[#allocation2 + $0x28] sm:$0xff] %v288
    %311 = vst [vmem:[#allocation2 + $0x30] sm:$0xff] %v292
    %312 = vst [vmem:[#allocation2 + $0x38] sm:$0xff] %v296
    %v313 = vld [vmem:[#allocation10] sm:$0xff]
    %v314 = vld [vmem:[#allocation10 + $0x8] sm:$0xff]
    %v315 = vld [vmem:[#allocation10 + $0x10] sm:$0xff]
    %v316 = vld [vmem:[#allocation10 + $0x18] sm:$0xff]
    %v317 = vld [vmem:[#allocation10 + $0x20] sm:$0xff]
    %v318 = vld [vmem:[#allocation10 + $0x28] sm:$0xff]
    %v319 = vld [vmem:[#allocation10 + $0x30] sm:$0xff]
    %v320 = vld [vmem:[#allocation10 + $0x38] sm:$0xff]
    %v321 = vld [vmem:[#allocation10 + $0x40] sm:$0xff]
    %v322 = vld [vmem:[#allocation10 + $0x48] sm:$0xff]
    %v323 = vld [vmem:[#allocation10 + $0x50] sm:$0xff]
    %v324 = vld [vmem:[#allocation10 + $0x58] sm:$0xff]
    %v325 = vld [vmem:[#allocation10 + $0x60] sm:$0xff]
    %v326 = vld [vmem:[#allocation10 + $0x68] sm:$0xff]
    %v327 = vld [vmem:[#allocation10 + $0x70] sm:$0xff]
    %v328 = vld [vmem:[#allocation10 + $0x78] sm:$0xff]
    %v329 = vld [vmem:[#allocation10 + $0x80] sm:$0xff]
    %v330 = vld [vmem:[#allocation10 + $0x88] sm:$0xff]
    %v331 = vld [vmem:[#allocation10 + $0x90] sm:$0xff]
    %v332 = vld [vmem:[#allocation10 + $0x98] sm:$0xff]
    %v333 = vld [vmem:[#allocation10 + $0xa0] sm:$0xff]
    %v334 = vld [vmem:[#allocation10 + $0xa8] sm:$0xff]
    %v335 = vld [vmem:[#allocation10 + $0xb0] sm:$0xff]
    %v336 = vld [vmem:[#allocation10 + $0xb8] sm:$0xff]
    %v337 = vld [vmem:[#allocation10 + $0xc0] sm:$0xff]
    %v338 = vld [vmem:[#allocation10 + $0xc8] sm:$0xff]
    %v339 = vld [vmem:[#allocation10 + $0xd0] sm:$0xff]
    %v340 = vld [vmem:[#allocation10 + $0xd8] sm:$0xff]
    %v341 = vld [vmem:[#allocation10 + $0xe0] sm:$0xff]
    %v342 = vld [vmem:[#allocation10 + $0xe8] sm:$0xff]
    %v343 = vld [vmem:[#allocation10 + $0xf0] sm:$0xff]
    %v344 = vld [vmem:[#allocation10 + $0xf8] sm:$0xff]
    %v345 = vld [vmem:[#allocation10 + $0x100] sm:$0xff]
    %v346 = vld [vmem:[#allocation10 + $0x108] sm:$0xff]
    %v347 = vld [vmem:[#allocation10 + $0x110] sm:$0xff]
    %v348 = vld [vmem:[#allocation10 + $0x118] sm:$0xff]
    %v349 = vld [vmem:[#allocation10 + $0x120] sm:$0xff]
    %v350 = vld [vmem:[#allocation10 + $0x128] sm:$0xff]
    %v351 = vld [vmem:[#allocation10 + $0x130] sm:$0xff]
    %v352 = vld [vmem:[#allocation10 + $0x138] sm:$0xff]
    %v353 = vld [vmem:[#allocation10 + $0x140] sm:$0xff]
    %v354 = vld [vmem:[#allocation10 + $0x148] sm:$0xff]
    %v355 = vld [vmem:[#allocation10 + $0x150] sm:$0xff]
    %v356 = vld [vmem:[#allocation10 + $0x158] sm:$0xff]
    %v357 = vld [vmem:[#allocation10 + $0x160] sm:$0xff]
    %v358 = vld [vmem:[#allocation10 + $0x168] sm:$0xff]
    %v359 = vld [vmem:[#allocation10 + $0x170] sm:$0xff]
    %v360 = vld [vmem:[#allocation10 + $0x178] sm:$0xff]
    %v361 = vld [vmem:[#allocation10 + $0x180] sm:$0xff]
    %v362 = vld [vmem:[#allocation10 + $0x188] sm:$0xff]
    %v363 = vld [vmem:[#allocation10 + $0x190] sm:$0xff]
    %v364 = vld [vmem:[#allocation10 + $0x198] sm:$0xff]
    %v365 = vld [vmem:[#allocation10 + $0x1a0] sm:$0xff]
    %v366 = vld [vmem:[#allocation10 + $0x1a8] sm:$0xff]
    %v367 = vld [vmem:[#allocation10 + $0x1b0] sm:$0xff]
    %v368 = vld [vmem:[#allocation10 + $0x1b8] sm:$0xff]
    %v369 = vld [vmem:[#allocation10 + $0x1c0] sm:$0xff]
    %v370 = vld [vmem:[#allocation10 + $0x1c8] sm:$0xff]
    %v371 = vld [vmem:[#allocation10 + $0x1d0] sm:$0xff]
    %v372 = vld [vmem:[#allocation10 + $0x1d8] sm:$0xff]
    %v373 = vld [vmem:[#allocation10 + $0x1e0] sm:$0xff]
    %v374 = vld [vmem:[#allocation10 + $0x1e8] sm:$0xff]
    %v375 = vld [vmem:[#allocation10 + $0x1f0] sm:$0xff]
    %v376 = vld [vmem:[#allocation10 + $0x1f8] sm:$0xff]
    %v377 = vld [vmem:[#allocation2] sm:$0xff]
    %378 = vmatpush.msra.mxu0 %v373
    %379 = vmatpush.msra.mxu0 %v369
    %380 = vmatpush.msra.mxu0 %v365
    %381 = vmatpush.msra.mxu0 %v361
    %382 = vmatpush.msra.mxu0 %v357
    %383 = vmatpush.msra.mxu0 %v353
    %384 = vmatpush.msra.mxu0 %v349
    %385 = vmatpush.msra.mxu0 %v345
    %386 = vmatpush.msra.mxu0 %v341
    %387 = vmatpush.msra.mxu0 %v337
    %388 = vmatpush.msra.mxu0 %v333
    %389 = vmatpush.msra.mxu0 %v329
    %390 = vmatpush.msra.mxu0 %v325
    %391 = vmatpush.msra.mxu0 %v321
    %392 = vmatpush.msra.mxu0 %v317
    %393 = vmatpush.msra.mxu0 %v313
    %394 = vmatmul.f32.gmra.mxu0 0.0
    %v395 = vpop.f32.mrf.mxu0
    %v396 = vadd.f32 0.0, %v395
    %397 = vdwg.mxu0
    %398 = vmatpush.msra.mxu0 %v374
    %399 = vmatpush.msra.mxu0 %v370
    %400 = vmatpush.msra.mxu0 %v366
    %401 = vmatpush.msra.mxu0 %v362
    %402 = vmatpush.msra.mxu0 %v358
    %403 = vmatpush.msra.mxu0 %v354
    %404 = vmatpush.msra.mxu0 %v350
    %405 = vmatpush.msra.mxu0 %v346
    %406 = vmatpush.msra.mxu0 %v342
    %407 = vmatpush.msra.mxu0 %v338
    %408 = vmatpush.msra.mxu0 %v334
    %409 = vmatpush.msra.mxu0 %v330
    %410 = vmatpush.msra.mxu0 %v326
    %411 = vmatpush.msra.mxu0 %v322
    %412 = vmatpush.msra.mxu0 %v318
    %413 = vmatpush.msra.mxu0 %v314
    %414 = vmatmul.f32.gmra.mxu0 0.0
    %v415 = vpop.f32.mrf.mxu0
    %v416 = vadd.f32 0.0, %v415
    %417 = vdwg.mxu0
    %418 = vmatpush.msra.mxu0 %v375
    %419 = vmatpush.msra.mxu0 %v371
    %420 = vmatpush.msra.mxu0 %v367
    %421 = vmatpush.msra.mxu0 %v363
    %422 = vmatpush.msra.mxu0 %v359
    %423 = vmatpush.msra.mxu0 %v355
    %424 = vmatpush.msra.mxu0 %v351
    %425 = vmatpush.msra.mxu0 %v347
    %426 = vmatpush.msra.mxu0 %v343
    %427 = vmatpush.msra.mxu0 %v339
    %428 = vmatpush.msra.mxu0 %v335
    %429 = vmatpush.msra.mxu0 %v331
    %430 = vmatpush.msra.mxu0 %v327
    %431 = vmatpush.msra.mxu0 %v323
    %432 = vmatpush.msra.mxu0 %v319
    %433 = vmatpush.msra.mxu0 %v315
    %434 = vmatmul.f32.gmra.mxu0 0.0
    %v435 = vpop.f32.mrf.mxu0
    %v436 = vadd.f32 0.0, %v435
    %437 = vdwg.mxu0
    %438 = vmatpush.msra.mxu0 %v376
    %439 = vmatpush.msra.mxu0 %v372
    %440 = vmatpush.msra.mxu0 %v368
    %441 = vmatpush.msra.mxu0 %v364
    %442 = vmatpush.msra.mxu0 %v360
    %443 = vmatpush.msra.mxu0 %v356
    %444 = vmatpush.msra.mxu0 %v352
    %445 = vmatpush.msra.mxu0 %v348
    %446 = vmatpush.msra.mxu0 %v344
    %447 = vmatpush.msra.mxu0 %v340
    %448 = vmatpush.msra.mxu0 %v336
    %449 = vmatpush.msra.mxu0 %v332
    %450 = vmatpush.msra.mxu0 %v328
    %451 = vmatpush.msra.mxu0 %v324
    %452 = vmatpush.msra.mxu0 %v320
    %453 = vmatpush.msra.mxu0 %v316
    %454 = vmatmul.f32.gmra.mxu0 0.0
    %v455 = vpop.f32.mrf.mxu0
    %v456 = vadd.f32 0.0, %v455
    %457 = vdwg.mxu0
    %v462 = vrot.slane %v416, 6
    %v463 = vrot.slane %v436, 4
    %v464 = vrot.slane %v456, 2
    %v465 = vsel %vm261, %v396, %v462
    %v466 = vsel %vm263, %v463, %v464
    %v467 = vsel %vm265, %v465, %v466
    %v469 = vadd.f32 %v377, %v467
    %v470 = vxor.u32 %v469, 2147483648
    %v471 = vmul.f32 %v470, 1.442695
    %v472 = vpow.pop %v471
    %v473 = vadd.f32 %v472, 1.0
    %v474 = vrcp.pop %v473
    %v475 = vmul.f32 %v473, %v474
    %v476 = vsub.f32 1.0, %v475
    %v477 = vmul.f32 %v474, %v476
    %v478 = vadd.f32 %v474, %v477
    %vm479 = vweird.f32 %v473
    %vm480 = vweird.f32 %v474
    %vm481 = vmor %vm479, %vm480
    %v482 = vsel %vm481, %v474, %v478
    %v483 = vand.u32 2147483647, %v473
    %vm484 = vcmp.eq.f32.partialorder %v483, 8.507059e+37
    %v485 = vand.u32 %v473, 2147483648
    %v486 = vor.u32 1.1754944e-38, %v485
    %v487 = vsel %vm484, %v486, %v482
    %v488 = vmul.f32 1.0, %v487
    %v490 = vrot.slane %v469, 2
    %v492 = vxor.u32 %v490, 2147483648
    %v493 = vmul.f32 %v492, 1.442695
    %v494 = vpow.pop %v493
    %v495 = vadd.f32 %v494, 1.0
    %v496 = vrcp.pop %v495
    %v497 = vmul.f32 %v495, %v496
    %v498 = vsub.f32 1.0, %v497
    %v499 = vmul.f32 %v496, %v498
    %v500 = vadd.f32 %v496, %v499
    %vm501 = vweird.f32 %v495
    %vm502 = vweird.f32 %v496
    %vm503 = vmor %vm501, %vm502
    %v504 = vsel %vm503, %v496, %v500
    %v505 = vand.u32 2147483647, %v495
    %vm506 = vcmp.eq.f32.partialorder %v505, 8.507059e+37
    %v507 = vand.u32 %v495, 2147483648
    %v508 = vor.u32 1.1754944e-38, %v507
    %v509 = vsel %vm506, %v508, %v504
    %v510 = vmul.f32 1.0, %v509
    %v511 = vrot.slane %v469, 4
    %v513 = vtanh.pop %v511
    %v514 = vrot.slane %v469, 6
    %v516 = vxor.u32 %v514, 2147483648
    %v517 = vmul.f32 %v516, 1.442695
    %v518 = vpow.pop %v517
    %v519 = vadd.f32 %v518, 1.0
    %v520 = vrcp.pop %v519
    %v521 = vmul.f32 %v519, %v520
    %v522 = vsub.f32 1.0, %v521
    %v523 = vmul.f32 %v520, %v522
    %v524 = vadd.f32 %v520, %v523
    %vm525 = vweird.f32 %v519
    %vm526 = vweird.f32 %v520
    %vm527 = vmor %vm525, %vm526
    %v528 = vsel %vm527, %v520, %v524
    %v529 = vand.u32 2147483647, %v519
    %vm530 = vcmp.eq.f32.partialorder %v529, 8.507059e+37
    %v531 = vand.u32 %v519, 2147483648
    %v532 = vor.u32 1.1754944e-38, %v531
    %v533 = vsel %vm530, %v532, %v528
    %v534 = vmul.f32 1.0, %v533
    %v535 = vmul.f32 %v510, 0.0
    %v536 = vmul.f32 %v488, %v513
    %v537 = vadd.f32 %v535, %v536
    %v538 = vtanh.pop %v537
    %v539 = vmul.f32 %v534, %v538
    %540 = vst [vmem:[#allocation3] sm:$0x3] %v539
    %s541 = scalar_lea.vmem [#allocation2], 8
    %v542 = vld [vmem:[%s541] sm:$0xff]
    %543 = vmatpush.msra.mxu0 %v373
    %544 = vmatpush.msra.mxu0 %v369
    %545 = vmatpush.msra.mxu0 %v365
    %546 = vmatpush.msra.mxu0 %v361
    %547 = vmatpush.msra.mxu0 %v357
    %548 = vmatpush.msra.mxu0 %v353
    %549 = vmatpush.msra.mxu0 %v349
    %550 = vmatpush.msra.mxu0 %v345
    %551 = vmatpush.msra.mxu0 %v341
    %552 = vmatpush.msra.mxu0 %v337
    %553 = vmatpush.msra.mxu0 %v333
    %554 = vmatpush.msra.mxu0 %v329
    %555 = vmatpush.msra.mxu0 %v325
    %556 = vmatpush.msra.mxu0 %v321
    %557 = vmatpush.msra.mxu0 %v317
    %558 = vmatpush.msra.mxu0 %v313
    %559 = vmatmul.f32.gmra.mxu0 %v539
    %v560 = vpop.f32.mrf.mxu0
    %v561 = vadd.f32 0.0, %v560
    %562 = vdwg.mxu0
    %563 = vmatpush.msra.mxu0 %v374
    %564 = vmatpush.msra.mxu0 %v370
    %565 = vmatpush.msra.mxu0 %v366
    %566 = vmatpush.msra.mxu0 %v362
    %567 = vmatpush.msra.mxu0 %v358
    %568 = vmatpush.msra.mxu0 %v354
    %569 = vmatpush.msra.mxu0 %v350
    %570 = vmatpush.msra.mxu0 %v346
    %571 = vmatpush.msra.mxu0 %v342
    %572 = vmatpush.msra.mxu0 %v338
    %573 = vmatpush.msra.mxu0 %v334
    %574 = vmatpush.msra.mxu0 %v330
    %575 = vmatpush.msra.mxu0 %v326
    %576 = vmatpush.msra.mxu0 %v322
    %577 = vmatpush.msra.mxu0 %v318
    %578 = vmatpush.msra.mxu0 %v314
    %579 = vmatmul.f32.gmra.mxu0 %v539
    %v580 = vpop.f32.mrf.mxu0
    %v581 = vadd.f32 0.0, %v580
    %582 = vdwg.mxu0
    %583 = vmatpush.msra.mxu0 %v375
    %584 = vmatpush.msra.mxu0 %v371
    %585 = vmatpush.msra.mxu0 %v367
    %586 = vmatpush.msra.mxu0 %v363
    %587 = vmatpush.msra.mxu0 %v359
    %588 = vmatpush.msra.mxu0 %v355
    %589 = vmatpush.msra.mxu0 %v351
    %590 = vmatpush.msra.mxu0 %v347
    %591 = vmatpush.msra.mxu0 %v343
    %592 = vmatpush.msra.mxu0 %v339
    %593 = vmatpush.msra.mxu0 %v335
    %594 = vmatpush.msra.mxu0 %v331
    %595 = vmatpush.msra.mxu0 %v327
    %596 = vmatpush.msra.mxu0 %v323
    %597 = vmatpush.msra.mxu0 %v319
    %598 = vmatpush.msra.mxu0 %v315
    %599 = vmatmul.f32.gmra.mxu0 %v539
    %v600 = vpop.f32.mrf.mxu0
    %v601 = vadd.f32 0.0, %v600
    %602 = vdwg.mxu0
    %603 = vmatpush.msra.mxu0 %v376
    %604 = vmatpush.msra.mxu0 %v372
    %605 = vmatpush.msra.mxu0 %v368
    %606 = vmatpush.msra.mxu0 %v364
    %607 = vmatpush.msra.mxu0 %v360
    %608 = vmatpush.msra.mxu0 %v356
    %609 = vmatpush.msra.mxu0 %v352
    %610 = vmatpush.msra.mxu0 %v348
    %611 = vmatpush.msra.mxu0 %v344
    %612 = vmatpush.msra.mxu0 %v340
    %613 = vmatpush.msra.mxu0 %v336
    %614 = vmatpush.msra.mxu0 %v332
    %615 = vmatpush.msra.mxu0 %v328
    %616 = vmatpush.msra.mxu0 %v324
    %617 = vmatpush.msra.mxu0 %v320
    %618 = vmatpush.msra.mxu0 %v316
    %619 = vmatmul.f32.gmra.mxu0 %v539
    %v620 = vpop.f32.mrf.mxu0
    %v621 = vadd.f32 0.0, %v620
    %622 = vdwg.mxu0
    %v627 = vrot.slane %v581, 6
    %v628 = vrot.slane %v601, 4
    %v629 = vrot.slane %v621, 2
    %v630 = vsel %vm261, %v561, %v627
    %v631 = vsel %vm263, %v628, %v629
    %v632 = vsel %vm265, %v630, %v631
    %v634 = vadd.f32 %v542, %v632
    %v635 = vxor.u32 %v634, 2147483648
    %v636 = vmul.f32 %v635, 1.442695
    %v637 = vpow.pop %v636
    %v638 = vadd.f32 %v637, 1.0
    %v639 = vrcp.pop %v638
    %v640 = vmul.f32 %v638, %v639
    %v641 = vsub.f32 1.0, %v640
    %v642 = vmul.f32 %v639, %v641
    %v643 = vadd.f32 %v639, %v642
    %vm644 = vweird.f32 %v638
    %vm645 = vweird.f32 %v639
    %vm646 = vmor %vm644, %vm645
    %v647 = vsel %vm646, %v639, %v643
    %v648 = vand.u32 2147483647, %v638
    %vm649 = vcmp.eq.f32.partialorder %v648, 8.507059e+37
    %v650 = vand.u32 %v638, 2147483648
    %v651 = vor.u32 1.1754944e-38, %v650
    %v652 = vsel %vm649, %v651, %v647
    %v653 = vmul.f32 1.0, %v652
    %v655 = vrot.slane %v634, 2
    %v657 = vxor.u32 %v655, 2147483648
    %v658 = vmul.f32 %v657, 1.442695
    %v659 = vpow.pop %v658
    %v660 = vadd.f32 %v659, 1.0
    %v661 = vrcp.pop %v660
    %v662 = vmul.f32 %v660, %v661
    %v663 = vsub.f32 1.0, %v662
    %v664 = vmul.f32 %v661, %v663
    %v665 = vadd.f32 %v661, %v664
    %vm666 = vweird.f32 %v660
    %vm667 = vweird.f32 %v661
    %vm668 = vmor %vm666, %vm667
    %v669 = vsel %vm668, %v661, %v665
    %v670 = vand.u32 2147483647, %v660
    %vm671 = vcmp.eq.f32.partialorder %v670, 8.507059e+37
    %v672 = vand.u32 %v660, 2147483648
    %v673 = vor.u32 1.1754944e-38, %v672
    %v674 = vsel %vm671, %v673, %v669
    %v675 = vmul.f32 1.0, %v674
    %v676 = vrot.slane %v634, 4
    %v678 = vtanh.pop %v676
    %v679 = vrot.slane %v634, 6
    %v681 = vxor.u32 %v679, 2147483648
    %v682 = vmul.f32 %v681, 1.442695
    %v683 = vpow.pop %v682
    %v684 = vadd.f32 %v683, 1.0
    %v685 = vrcp.pop %v684
    %v686 = vmul.f32 %v684, %v685
    %v687 = vsub.f32 1.0, %v686
    %v688 = vmul.f32 %v685, %v687
    %v689 = vadd.f32 %v685, %v688
    %vm690 = vweird.f32 %v684
    %vm691 = vweird.f32 %v685
    %vm692 = vmor %vm690, %vm691
    %v693 = vsel %vm692, %v685, %v689
    %v694 = vand.u32 2147483647, %v684
    %vm695 = vcmp.eq.f32.partialorder %v694, 8.507059e+37
    %v696 = vand.u32 %v684, 2147483648
    %v697 = vor.u32 1.1754944e-38, %v696
    %v698 = vsel %vm695, %v697, %v693
    %v699 = vmul.f32 1.0, %v698
    %v700 = vmul.f32 %v675, %v537
    %v701 = vmul.f32 %v653, %v678
    %v702 = vadd.f32 %v700, %v701
    %v703 = vtanh.pop %v702
    %v704 = vmul.f32 %v699, %v703
    %s705 = scalar_lea.vmem [#allocation3], 2
    %706 = vst [vmem:[%s705] sm:$0x3] %v704
    %s707 = scalar_lea.vmem [#allocation2], 16
    %v708 = vld [vmem:[%s707] sm:$0xff]
    %709 = vmatpush.msra.mxu0 %v373
    %710 = vmatpush.msra.mxu0 %v369
    %711 = vmatpush.msra.mxu0 %v365
    %712 = vmatpush.msra.mxu0 %v361
    %713 = vmatpush.msra.mxu0 %v357
    %714 = vmatpush.msra.mxu0 %v353
    %715 = vmatpush.msra.mxu0 %v349
    %716 = vmatpush.msra.mxu0 %v345
    %717 = vmatpush.msra.mxu0 %v341
    %718 = vmatpush.msra.mxu0 %v337
    %719 = vmatpush.msra.mxu0 %v333
    %720 = vmatpush.msra.mxu0 %v329
    %721 = vmatpush.msra.mxu0 %v325
    %722 = vmatpush.msra.mxu0 %v321
    %723 = vmatpush.msra.mxu0 %v317
    %724 = vmatpush.msra.mxu0 %v313
    %725 = vmatmul.f32.gmra.mxu0 %v704
    %v726 = vpop.f32.mrf.mxu0
    %v727 = vadd.f32 0.0, %v726
    %728 = vdwg.mxu0
    %729 = vmatpush.msra.mxu0 %v374
    %730 = vmatpush.msra.mxu0 %v370
    %731 = vmatpush.msra.mxu0 %v366
    %732 = vmatpush.msra.mxu0 %v362
    %733 = vmatpush.msra.mxu0 %v358
    %734 = vmatpush.msra.mxu0 %v354
    %735 = vmatpush.msra.mxu0 %v350
    %736 = vmatpush.msra.mxu0 %v346
    %737 = vmatpush.msra.mxu0 %v342
    %738 = vmatpush.msra.mxu0 %v338
    %739 = vmatpush.msra.mxu0 %v334
    %740 = vmatpush.msra.mxu0 %v330
    %741 = vmatpush.msra.mxu0 %v326
    %742 = vmatpush.msra.mxu0 %v322
    %743 = vmatpush.msra.mxu0 %v318
    %744 = vmatpush.msra.mxu0 %v314
    %745 = vmatmul.f32.gmra.mxu0 %v704
    %v746 = vpop.f32.mrf.mxu0
    %v747 = vadd.f32 0.0, %v746
    %748 = vdwg.mxu0
    %749 = vmatpush.msra.mxu0 %v375
    %750 = vmatpush.msra.mxu0 %v371
    %751 = vmatpush.msra.mxu0 %v367
    %752 = vmatpush.msra.mxu0 %v363
    %753 = vmatpush.msra.mxu0 %v359
    %754 = vmatpush.msra.mxu0 %v355
    %755 = vmatpush.msra.mxu0 %v351
    %756 = vmatpush.msra.mxu0 %v347
    %757 = vmatpush.msra.mxu0 %v343
    %758 = vmatpush.msra.mxu0 %v339
    %759 = vmatpush.msra.mxu0 %v335
    %760 = vmatpush.msra.mxu0 %v331
    %761 = vmatpush.msra.mxu0 %v327
    %762 = vmatpush.msra.mxu0 %v323
    %763 = vmatpush.msra.mxu0 %v319
    %764 = vmatpush.msra.mxu0 %v315
    %765 = vmatmul.f32.gmra.mxu0 %v704
    %v766 = vpop.f32.mrf.mxu0
    %v767 = vadd.f32 0.0, %v766
    %768 = vdwg.mxu0
    %769 = vmatpush.msra.mxu0 %v376
    %770 = vmatpush.msra.mxu0 %v372
    %771 = vmatpush.msra.mxu0 %v368
    %772 = vmatpush.msra.mxu0 %v364
    %773 = vmatpush.msra.mxu0 %v360
    %774 = vmatpush.msra.mxu0 %v356
    %775 = vmatpush.msra.mxu0 %v352
    %776 = vmatpush.msra.mxu0 %v348
    %777 = vmatpush.msra.mxu0 %v344
    %778 = vmatpush.msra.mxu0 %v340
    %779 = vmatpush.msra.mxu0 %v336
    %780 = vmatpush.msra.mxu0 %v332
    %781 = vmatpush.msra.mxu0 %v328
    %782 = vmatpush.msra.mxu0 %v324
    %783 = vmatpush.msra.mxu0 %v320
    %784 = vmatpush.msra.mxu0 %v316
    %785 = vmatmul.f32.gmra.mxu0 %v704
    %v786 = vpop.f32.mrf.mxu0
    %v787 = vadd.f32 0.0, %v786
    %788 = vdwg.mxu0
    %v793 = vrot.slane %v747, 6
    %v794 = vrot.slane %v767, 4
    %v795 = vrot.slane %v787, 2
    %v796 = vsel %vm261, %v727, %v793
    %v797 = vsel %vm263, %v794, %v795
    %v798 = vsel %vm265, %v796, %v797
    %v800 = vadd.f32 %v708, %v798
    %v801 = vxor.u32 %v800, 2147483648
    %v802 = vmul.f32 %v801, 1.442695
    %v803 = vpow.pop %v802
    %v804 = vadd.f32 %v803, 1.0
    %v805 = vrcp.pop %v804
    %v806 = vmul.f32 %v804, %v805
    %v807 = vsub.f32 1.0, %v806
    %v808 = vmul.f32 %v805, %v807
    %v809 = vadd.f32 %v805, %v808
    %vm810 = vweird.f32 %v804
    %vm811 = vweird.f32 %v805
    %vm812 = vmor %vm810, %vm811
    %v813 = vsel %vm812, %v805, %v809
    %v814 = vand.u32 2147483647, %v804
    %vm815 = vcmp.eq.f32.partialorder %v814, 8.507059e+37
    %v816 = vand.u32 %v804, 2147483648
    %v817 = vor.u32 1.1754944e-38, %v816
    %v818 = vsel %vm815, %v817, %v813
    %v819 = vmul.f32 1.0, %v818
    %v821 = vrot.slane %v800, 2
    %v823 = vxor.u32 %v821, 2147483648
    %v824 = vmul.f32 %v823, 1.442695
    %v825 = vpow.pop %v824
    %v826 = vadd.f32 %v825, 1.0
    %v827 = vrcp.pop %v826
    %v828 = vmul.f32 %v826, %v827
    %v829 = vsub.f32 1.0, %v828
    %v830 = vmul.f32 %v827, %v829
    %v831 = vadd.f32 %v827, %v830
    %vm832 = vweird.f32 %v826
    %vm833 = vweird.f32 %v827
    %vm834 = vmor %vm832, %vm833
    %v835 = vsel %vm834, %v827, %v831
    %v836 = vand.u32 2147483647, %v826
    %vm837 = vcmp.eq.f32.partialorder %v836, 8.507059e+37
    %v838 = vand.u32 %v826, 2147483648
    %v839 = vor.u32 1.1754944e-38, %v838
    %v840 = vsel %vm837, %v839, %v835
    %v841 = vmul.f32 1.0, %v840
    %v842 = vrot.slane %v800, 4
    %v844 = vtanh.pop %v842
    %v845 = vrot.slane %v800, 6
    %v847 = vxor.u32 %v845, 2147483648
    %v848 = vmul.f32 %v847, 1.442695
    %v849 = vpow.pop %v848
    %v850 = vadd.f32 %v849, 1.0
    %v851 = vrcp.pop %v850
    %v852 = vmul.f32 %v850, %v851
    %v853 = vsub.f32 1.0, %v852
    %v854 = vmul.f32 %v851, %v853
    %v855 = vadd.f32 %v851, %v854
    %vm856 = vweird.f32 %v850
    %vm857 = vweird.f32 %v851
    %vm858 = vmor %vm856, %vm857
    %v859 = vsel %vm858, %v851, %v855
    %v860 = vand.u32 2147483647, %v850
    %vm861 = vcmp.eq.f32.partialorder %v860, 8.507059e+37
    %v862 = vand.u32 %v850, 2147483648
    %v863 = vor.u32 1.1754944e-38, %v862
    %v864 = vsel %vm861, %v863, %v859
    %v865 = vmul.f32 1.0, %v864
    %v866 = vmul.f32 %v841, %v702
    %v867 = vmul.f32 %v819, %v844
    %v868 = vadd.f32 %v866, %v867
    %v869 = vtanh.pop %v868
    %v870 = vmul.f32 %v865, %v869
    %s871 = scalar_lea.vmem [#allocation3], 4
    %872 = vst [vmem:[%s871] sm:$0x3] %v870
    %s873 = scalar_lea.vmem [#allocation2], 24
    %v874 = vld [vmem:[%s873] sm:$0xff]
    %875 = vmatpush.msra.mxu0 %v373
    %876 = vmatpush.msra.mxu0 %v369
    %877 = vmatpush.msra.mxu0 %v365
    %878 = vmatpush.msra.mxu0 %v361
    %879 = vmatpush.msra.mxu0 %v357
    %880 = vmatpush.msra.mxu0 %v353
    %881 = vmatpush.msra.mxu0 %v349
    %882 = vmatpush.msra.mxu0 %v345
    %883 = vmatpush.msra.mxu0 %v341
    %884 = vmatpush.msra.mxu0 %v337
    %885 = vmatpush.msra.mxu0 %v333
    %886 = vmatpush.msra.mxu0 %v329
    %887 = vmatpush.msra.mxu0 %v325
    %888 = vmatpush.msra.mxu0 %v321
    %889 = vmatpush.msra.mxu0 %v317
    %890 = vmatpush.msra.mxu0 %v313
    %891 = vmatmul.f32.gmra.mxu0 %v870
    %v892 = vpop.f32.mrf.mxu0
    %v893 = vadd.f32 0.0, %v892
    %894 = vdwg.mxu0
    %895 = vmatpush.msra.mxu0 %v374
    %896 = vmatpush.msra.mxu0 %v370
    %897 = vmatpush.msra.mxu0 %v366
    %898 = vmatpush.msra.mxu0 %v362
    %899 = vmatpush.msra.mxu0 %v358
    %900 = vmatpush.msra.mxu0 %v354
    %901 = vmatpush.msra.mxu0 %v350
    %902 = vmatpush.msra.mxu0 %v346
    %903 = vmatpush.msra.mxu0 %v342
    %904 = vmatpush.msra.mxu0 %v338
    %905 = vmatpush.msra.mxu0 %v334
    %906 = vmatpush.msra.mxu0 %v330
    %907 = vmatpush.msra.mxu0 %v326
    %908 = vmatpush.msra.mxu0 %v322
    %909 = vmatpush.msra.mxu0 %v318
    %910 = vmatpush.msra.mxu0 %v314
    %911 = vmatmul.f32.gmra.mxu0 %v870
    %v912 = vpop.f32.mrf.mxu0
    %v913 = vadd.f32 0.0, %v912
    %914 = vdwg.mxu0
    %915 = vmatpush.msra.mxu0 %v375
    %916 = vmatpush.msra.mxu0 %v371
    %917 = vmatpush.msra.mxu0 %v367
    %918 = vmatpush.msra.mxu0 %v363
    %919 = vmatpush.msra.mxu0 %v359
    %920 = vmatpush.msra.mxu0 %v355
    %921 = vmatpush.msra.mxu0 %v351
    %922 = vmatpush.msra.mxu0 %v347
    %923 = vmatpush.msra.mxu0 %v343
    %924 = vmatpush.msra.mxu0 %v339
    %925 = vmatpush.msra.mxu0 %v335
    %926 = vmatpush.msra.mxu0 %v331
    %927 = vmatpush.msra.mxu0 %v327
    %928 = vmatpush.msra.mxu0 %v323
    %929 = vmatpush.msra.mxu0 %v319
    %930 = vmatpush.msra.mxu0 %v315
    %931 = vmatmul.f32.gmra.mxu0 %v870
    %v932 = vpop.f32.mrf.mxu0
    %v933 = vadd.f32 0.0, %v932
    %934 = vdwg.mxu0
    %935 = vmatpush.msra.mxu0 %v376
    %936 = vmatpush.msra.mxu0 %v372
    %937 = vmatpush.msra.mxu0 %v368
    %938 = vmatpush.msra.mxu0 %v364
    %939 = vmatpush.msra.mxu0 %v360
    %940 = vmatpush.msra.mxu0 %v356
    %941 = vmatpush.msra.mxu0 %v352
    %942 = vmatpush.msra.mxu0 %v348
    %943 = vmatpush.msra.mxu0 %v344
    %944 = vmatpush.msra.mxu0 %v340
    %945 = vmatpush.msra.mxu0 %v336
    %946 = vmatpush.msra.mxu0 %v332
    %947 = vmatpush.msra.mxu0 %v328
    %948 = vmatpush.msra.mxu0 %v324
    %949 = vmatpush.msra.mxu0 %v320
    %950 = vmatpush.msra.mxu0 %v316
    %951 = vmatmul.f32.gmra.mxu0 %v870
    %v952 = vpop.f32.mrf.mxu0
    %v953 = vadd.f32 0.0, %v952
    %954 = vdwg.mxu0
    %v959 = vrot.slane %v913, 6
    %v960 = vrot.slane %v933, 4
    %v961 = vrot.slane %v953, 2
    %v962 = vsel %vm261, %v893, %v959
    %v963 = vsel %vm263, %v960, %v961
    %v964 = vsel %vm265, %v962, %v963
    %v966 = vadd.f32 %v874, %v964
    %v967 = vxor.u32 %v966, 2147483648
    %v968 = vmul.f32 %v967, 1.442695
    %v969 = vpow.pop %v968
    %v970 = vadd.f32 %v969, 1.0
    %v971 = vrcp.pop %v970
    %v972 = vmul.f32 %v970, %v971
    %v973 = vsub.f32 1.0, %v972
    %v974 = vmul.f32 %v971, %v973
    %v975 = vadd.f32 %v971, %v974
    %vm976 = vweird.f32 %v970
    %vm977 = vweird.f32 %v971
    %vm978 = vmor %vm976, %vm977
    %v979 = vsel %vm978, %v971, %v975
    %v980 = vand.u32 2147483647, %v970
    %vm981 = vcmp.eq.f32.partialorder %v980, 8.507059e+37
    %v982 = vand.u32 %v970, 2147483648
    %v983 = vor.u32 1.1754944e-38, %v982
    %v984 = vsel %vm981, %v983, %v979
    %v985 = vmul.f32 1.0, %v984
    %v987 = vrot.slane %v966, 2
    %v989 = vxor.u32 %v987, 2147483648
    %v990 = vmul.f32 %v989, 1.442695
    %v991 = vpow.pop %v990
    %v992 = vadd.f32 %v991, 1.0
    %v993 = vrcp.pop %v992
    %v994 = vmul.f32 %v992, %v993
    %v995 = vsub.f32 1.0, %v994
    %v996 = vmul.f32 %v993, %v995
    %v997 = vadd.f32 %v993, %v996
    %vm998 = vweird.f32 %v992
    %vm999 = vweird.f32 %v993
    %vm1000 = vmor %vm998, %vm999
    %v1001 = vsel %vm1000, %v993, %v997
    %v1002 = vand.u32 2147483647, %v992
    %vm1003 = vcmp.eq.f32.partialorder %v1002, 8.507059e+37
    %v1004 = vand.u32 %v992, 2147483648
    %v1005 = vor.u32 1.1754944e-38, %v1004
    %v1006 = vsel %vm1003, %v1005, %v1001
    %v1007 = vmul.f32 1.0, %v1006
    %v1008 = vrot.slane %v966, 4
    %v1010 = vtanh.pop %v1008
    %v1011 = vrot.slane %v966, 6
    %v1013 = vxor.u32 %v1011, 2147483648
    %v1014 = vmul.f32 %v1013, 1.442695
    %v1015 = vpow.pop %v1014
    %v1016 = vadd.f32 %v1015, 1.0
    %v1017 = vrcp.pop %v1016
    %v1018 = vmul.f32 %v1016, %v1017
    %v1019 = vsub.f32 1.0, %v1018
    %v1020 = vmul.f32 %v1017, %v1019
    %v1021 = vadd.f32 %v1017, %v1020
    %vm1022 = vweird.f32 %v1016
    %vm1023 = vweird.f32 %v1017
    %vm1024 = vmor %vm1022, %vm1023
    %v1025 = vsel %vm1024, %v1017, %v1021
    %v1026 = vand.u32 2147483647, %v1016
    %vm1027 = vcmp.eq.f32.partialorder %v1026, 8.507059e+37
    %v1028 = vand.u32 %v1016, 2147483648
    %v1029 = vor.u32 1.1754944e-38, %v1028
    %v1030 = vsel %vm1027, %v1029, %v1025
    %v1031 = vmul.f32 1.0, %v1030
    %v1032 = vmul.f32 %v1007, %v868
    %v1033 = vmul.f32 %v985, %v1010
    %v1034 = vadd.f32 %v1032, %v1033
    %v1035 = vtanh.pop %v1034
    %v1036 = vmul.f32 %v1031, %v1035
    %s1037 = scalar_lea.vmem [#allocation3], 6
    %1038 = vst [vmem:[%s1037] sm:$0x3] %v1036
    %s1039 = scalar_lea.vmem [#allocation2], 32
    %v1040 = vld [vmem:[%s1039] sm:$0xff]
    %1041 = vmatpush.msra.mxu0 %v373
    %1042 = vmatpush.msra.mxu0 %v369
    %1043 = vmatpush.msra.mxu0 %v365
    %1044 = vmatpush.msra.mxu0 %v361
    %1045 = vmatpush.msra.mxu0 %v357
    %1046 = vmatpush.msra.mxu0 %v353
    %1047 = vmatpush.msra.mxu0 %v349
    %1048 = vmatpush.msra.mxu0 %v345
    %1049 = vmatpush.msra.mxu0 %v341
    %1050 = vmatpush.msra.mxu0 %v337
    %1051 = vmatpush.msra.mxu0 %v333
    %1052 = vmatpush.msra.mxu0 %v329
    %1053 = vmatpush.msra.mxu0 %v325
    %1054 = vmatpush.msra.mxu0 %v321
    %1055 = vmatpush.msra.mxu0 %v317
    %1056 = vmatpush.msra.mxu0 %v313
    %1057 = vmatmul.f32.gmra.mxu0 %v1036
    %v1058 = vpop.f32.mrf.mxu0
    %v1059 = vadd.f32 0.0, %v1058
    %1060 = vdwg.mxu0
    %1061 = vmatpush.msra.mxu0 %v374
    %1062 = vmatpush.msra.mxu0 %v370
    %1063 = vmatpush.msra.mxu0 %v366
    %1064 = vmatpush.msra.mxu0 %v362
    %1065 = vmatpush.msra.mxu0 %v358
    %1066 = vmatpush.msra.mxu0 %v354
    %1067 = vmatpush.msra.mxu0 %v350
    %1068 = vmatpush.msra.mxu0 %v346
    %1069 = vmatpush.msra.mxu0 %v342
    %1070 = vmatpush.msra.mxu0 %v338
    %1071 = vmatpush.msra.mxu0 %v334
    %1072 = vmatpush.msra.mxu0 %v330
    %1073 = vmatpush.msra.mxu0 %v326
    %1074 = vmatpush.msra.mxu0 %v322
    %1075 = vmatpush.msra.mxu0 %v318
    %1076 = vmatpush.msra.mxu0 %v314
    %1077 = vmatmul.f32.gmra.mxu0 %v1036
    %v1078 = vpop.f32.mrf.mxu0
    %v1079 = vadd.f32 0.0, %v1078
    %1080 = vdwg.mxu0
    %1081 = vmatpush.msra.mxu0 %v375
    %1082 = vmatpush.msra.mxu0 %v371
    %1083 = vmatpush.msra.mxu0 %v367
    %1084 = vmatpush.msra.mxu0 %v363
    %1085 = vmatpush.msra.mxu0 %v359
    %1086 = vmatpush.msra.mxu0 %v355
    %1087 = vmatpush.msra.mxu0 %v351
    %1088 = vmatpush.msra.mxu0 %v347
    %1089 = vmatpush.msra.mxu0 %v343
    %1090 = vmatpush.msra.mxu0 %v339
    %1091 = vmatpush.msra.mxu0 %v335
    %1092 = vmatpush.msra.mxu0 %v331
    %1093 = vmatpush.msra.mxu0 %v327
    %1094 = vmatpush.msra.mxu0 %v323
    %1095 = vmatpush.msra.mxu0 %v319
    %1096 = vmatpush.msra.mxu0 %v315
    %1097 = vmatmul.f32.gmra.mxu0 %v1036
    %v1098 = vpop.f32.mrf.mxu0
    %v1099 = vadd.f32 0.0, %v1098
    %1100 = vdwg.mxu0
    %1101 = vmatpush.msra.mxu0 %v376
    %1102 = vmatpush.msra.mxu0 %v372
    %1103 = vmatpush.msra.mxu0 %v368
    %1104 = vmatpush.msra.mxu0 %v364
    %1105 = vmatpush.msra.mxu0 %v360
    %1106 = vmatpush.msra.mxu0 %v356
    %1107 = vmatpush.msra.mxu0 %v352
    %1108 = vmatpush.msra.mxu0 %v348
    %1109 = vmatpush.msra.mxu0 %v344
    %1110 = vmatpush.msra.mxu0 %v340
    %1111 = vmatpush.msra.mxu0 %v336
    %1112 = vmatpush.msra.mxu0 %v332
    %1113 = vmatpush.msra.mxu0 %v328
    %1114 = vmatpush.msra.mxu0 %v324
    %1115 = vmatpush.msra.mxu0 %v320
    %1116 = vmatpush.msra.mxu0 %v316
    %1117 = vmatmul.f32.gmra.mxu0 %v1036
    %v1118 = vpop.f32.mrf.mxu0
    %v1119 = vadd.f32 0.0, %v1118
    %1120 = vdwg.mxu0
    %v1125 = vrot.slane %v1079, 6
    %v1126 = vrot.slane %v1099, 4
    %v1127 = vrot.slane %v1119, 2
    %v1128 = vsel %vm261, %v1059, %v1125
    %v1129 = vsel %vm263, %v1126, %v1127
    %v1130 = vsel %vm265, %v1128, %v1129
    %v1132 = vadd.f32 %v1040, %v1130
    %v1133 = vxor.u32 %v1132, 2147483648
    %v1134 = vmul.f32 %v1133, 1.442695
    %v1135 = vpow.pop %v1134
    %v1136 = vadd.f32 %v1135, 1.0
    %v1137 = vrcp.pop %v1136
    %v1138 = vmul.f32 %v1136, %v1137
    %v1139 = vsub.f32 1.0, %v1138
    %v1140 = vmul.f32 %v1137, %v1139
    %v1141 = vadd.f32 %v1137, %v1140
    %vm1142 = vweird.f32 %v1136
    %vm1143 = vweird.f32 %v1137
    %vm1144 = vmor %vm1142, %vm1143
    %v1145 = vsel %vm1144, %v1137, %v1141
    %v1146 = vand.u32 2147483647, %v1136
    %vm1147 = vcmp.eq.f32.partialorder %v1146, 8.507059e+37
    %v1148 = vand.u32 %v1136, 2147483648
    %v1149 = vor.u32 1.1754944e-38, %v1148
    %v1150 = vsel %vm1147, %v1149, %v1145
    %v1151 = vmul.f32 1.0, %v1150
    %v1153 = vrot.slane %v1132, 2
    %v1155 = vxor.u32 %v1153, 2147483648
    %v1156 = vmul.f32 %v1155, 1.442695
    %v1157 = vpow.pop %v1156
    %v1158 = vadd.f32 %v1157, 1.0
    %v1159 = vrcp.pop %v1158
    %v1160 = vmul.f32 %v1158, %v1159
    %v1161 = vsub.f32 1.0, %v1160
    %v1162 = vmul.f32 %v1159, %v1161
    %v1163 = vadd.f32 %v1159, %v1162
    %vm1164 = vweird.f32 %v1158
    %vm1165 = vweird.f32 %v1159
    %vm1166 = vmor %vm1164, %vm1165
    %v1167 = vsel %vm1166, %v1159, %v1163
    %v1168 = vand.u32 2147483647, %v1158
    %vm1169 = vcmp.eq.f32.partialorder %v1168, 8.507059e+37
    %v1170 = vand.u32 %v1158, 2147483648
    %v1171 = vor.u32 1.1754944e-38, %v1170
    %v1172 = vsel %vm1169, %v1171, %v1167
    %v1173 = vmul.f32 1.0, %v1172
    %v1174 = vrot.slane %v1132, 4
    %v1176 = vtanh.pop %v1174
    %v1177 = vrot.slane %v1132, 6
    %v1179 = vxor.u32 %v1177, 2147483648
    %v1180 = vmul.f32 %v1179, 1.442695
    %v1181 = vpow.pop %v1180
    %v1182 = vadd.f32 %v1181, 1.0
    %v1183 = vrcp.pop %v1182
    %v1184 = vmul.f32 %v1182, %v1183
    %v1185 = vsub.f32 1.0, %v1184
    %v1186 = vmul.f32 %v1183, %v1185
    %v1187 = vadd.f32 %v1183, %v1186
    %vm1188 = vweird.f32 %v1182
    %vm1189 = vweird.f32 %v1183
    %vm1190 = vmor %vm1188, %vm1189
    %v1191 = vsel %vm1190, %v1183, %v1187
    %v1192 = vand.u32 2147483647, %v1182
    %vm1193 = vcmp.eq.f32.partialorder %v1192, 8.507059e+37
    %v1194 = vand.u32 %v1182, 2147483648
    %v1195 = vor.u32 1.1754944e-38, %v1194
    %v1196 = vsel %vm1193, %v1195, %v1191
    %v1197 = vmul.f32 1.0, %v1196
    %v1198 = vmul.f32 %v1173, %v1034
    %v1199 = vmul.f32 %v1151, %v1176
    %v1200 = vadd.f32 %v1198, %v1199
    %v1201 = vtanh.pop %v1200
    %v1202 = vmul.f32 %v1197, %v1201
    %s1203 = scalar_lea.vmem [#allocation3], 8
    %1204 = vst [vmem:[%s1203] sm:$0x3] %v1202
    %s1205 = scalar_lea.vmem [#allocation2], 40
    %v1206 = vld [vmem:[%s1205] sm:$0xff]
    %1207 = vmatpush.msra.mxu0 %v373
    %1208 = vmatpush.msra.mxu0 %v369
    %1209 = vmatpush.msra.mxu0 %v365
    %1210 = vmatpush.msra.mxu0 %v361
    %1211 = vmatpush.msra.mxu0 %v357
    %1212 = vmatpush.msra.mxu0 %v353
    %1213 = vmatpush.msra.mxu0 %v349
    %1214 = vmatpush.msra.mxu0 %v345
    %1215 = vmatpush.msra.mxu0 %v341
    %1216 = vmatpush.msra.mxu0 %v337
    %1217 = vmatpush.msra.mxu0 %v333
    %1218 = vmatpush.msra.mxu0 %v329
    %1219 = vmatpush.msra.mxu0 %v325
    %1220 = vmatpush.msra.mxu0 %v321
    %1221 = vmatpush.msra.mxu0 %v317
    %1222 = vmatpush.msra.mxu0 %v313
    %1223 = vmatmul.f32.gmra.mxu0 %v1202
    %v1224 = vpop.f32.mrf.mxu0
    %v1225 = vadd.f32 0.0, %v1224
    %1226 = vdwg.mxu0
    %1227 = vmatpush.msra.mxu0 %v374
    %1228 = vmatpush.msra.mxu0 %v370
    %1229 = vmatpush.msra.mxu0 %v366
    %1230 = vmatpush.msra.mxu0 %v362
    %1231 = vmatpush.msra.mxu0 %v358
    %1232 = vmatpush.msra.mxu0 %v354
    %1233 = vmatpush.msra.mxu0 %v350
    %1234 = vmatpush.msra.mxu0 %v346
    %1235 = vmatpush.msra.mxu0 %v342
    %1236 = vmatpush.msra.mxu0 %v338
    %1237 = vmatpush.msra.mxu0 %v334
    %1238 = vmatpush.msra.mxu0 %v330
    %1239 = vmatpush.msra.mxu0 %v326
    %1240 = vmatpush.msra.mxu0 %v322
    %1241 = vmatpush.msra.mxu0 %v318
    %1242 = vmatpush.msra.mxu0 %v314
    %1243 = vmatmul.f32.gmra.mxu0 %v1202
    %v1244 = vpop.f32.mrf.mxu0
    %v1245 = vadd.f32 0.0, %v1244
    %1246 = vdwg.mxu0
    %1247 = vmatpush.msra.mxu0 %v375
    %1248 = vmatpush.msra.mxu0 %v371
    %1249 = vmatpush.msra.mxu0 %v367
    %1250 = vmatpush.msra.mxu0 %v363
    %1251 = vmatpush.msra.mxu0 %v359
    %1252 = vmatpush.msra.mxu0 %v355
    %1253 = vmatpush.msra.mxu0 %v351
    %1254 = vmatpush.msra.mxu0 %v347
    %1255 = vmatpush.msra.mxu0 %v343
    %1256 = vmatpush.msra.mxu0 %v339
    %1257 = vmatpush.msra.mxu0 %v335
    %1258 = vmatpush.msra.mxu0 %v331
    %1259 = vmatpush.msra.mxu0 %v327
    %1260 = vmatpush.msra.mxu0 %v323
    %1261 = vmatpush.msra.mxu0 %v319
    %1262 = vmatpush.msra.mxu0 %v315
    %1263 = vmatmul.f32.gmra.mxu0 %v1202
    %v1264 = vpop.f32.mrf.mxu0
    %v1265 = vadd.f32 0.0, %v1264
    %1266 = vdwg.mxu0
    %1267 = vmatpush.msra.mxu0 %v376
    %1268 = vmatpush.msra.mxu0 %v372
    %1269 = vmatpush.msra.mxu0 %v368
    %1270 = vmatpush.msra.mxu0 %v364
    %1271 = vmatpush.msra.mxu0 %v360
    %1272 = vmatpush.msra.mxu0 %v356
    %1273 = vmatpush.msra.mxu0 %v352
    %1274 = vmatpush.msra.mxu0 %v348
    %1275 = vmatpush.msra.mxu0 %v344
    %1276 = vmatpush.msra.mxu0 %v340
    %1277 = vmatpush.msra.mxu0 %v336
    %1278 = vmatpush.msra.mxu0 %v332
    %1279 = vmatpush.msra.mxu0 %v328
    %1280 = vmatpush.msra.mxu0 %v324
    %1281 = vmatpush.msra.mxu0 %v320
    %1282 = vmatpush.msra.mxu0 %v316
    %1283 = vmatmul.f32.gmra.mxu0 %v1202
    %v1284 = vpop.f32.mrf.mxu0
    %v1285 = vadd.f32 0.0, %v1284
    %1286 = vdwg.mxu0
    %v1291 = vrot.slane %v1245, 6
    %v1292 = vrot.slane %v1265, 4
    %v1293 = vrot.slane %v1285, 2
    %v1294 = vsel %vm261, %v1225, %v1291
    %v1295 = vsel %vm263, %v1292, %v1293
    %v1296 = vsel %vm265, %v1294, %v1295
    %v1298 = vadd.f32 %v1206, %v1296
    %v1299 = vxor.u32 %v1298, 2147483648
    %v1300 = vmul.f32 %v1299, 1.442695
    %v1301 = vpow.pop %v1300
    %v1302 = vadd.f32 %v1301, 1.0
    %v1303 = vrcp.pop %v1302
    %v1304 = vmul.f32 %v1302, %v1303
    %v1305 = vsub.f32 1.0, %v1304
    %v1306 = vmul.f32 %v1303, %v1305
    %v1307 = vadd.f32 %v1303, %v1306
    %vm1308 = vweird.f32 %v1302
    %vm1309 = vweird.f32 %v1303
    %vm1310 = vmor %vm1308, %vm1309
    %v1311 = vsel %vm1310, %v1303, %v1307
    %v1312 = vand.u32 2147483647, %v1302
    %vm1313 = vcmp.eq.f32.partialorder %v1312, 8.507059e+37
    %v1314 = vand.u32 %v1302, 2147483648
    %v1315 = vor.u32 1.1754944e-38, %v1314
    %v1316 = vsel %vm1313, %v1315, %v1311
    %v1317 = vmul.f32 1.0, %v1316
    %v1319 = vrot.slane %v1298, 2
    %v1321 = vxor.u32 %v1319, 2147483648
    %v1322 = vmul.f32 %v1321, 1.442695
    %v1323 = vpow.pop %v1322
    %v1324 = vadd.f32 %v1323, 1.0
    %v1325 = vrcp.pop %v1324
    %v1326 = vmul.f32 %v1324, %v1325
    %v1327 = vsub.f32 1.0, %v1326
    %v1328 = vmul.f32 %v1325, %v1327
    %v1329 = vadd.f32 %v1325, %v1328
    %vm1330 = vweird.f32 %v1324
    %vm1331 = vweird.f32 %v1325
    %vm1332 = vmor %vm1330, %vm1331
    %v1333 = vsel %vm1332, %v1325, %v1329
    %v1334 = vand.u32 2147483647, %v1324
    %vm1335 = vcmp.eq.f32.partialorder %v1334, 8.507059e+37
    %v1336 = vand.u32 %v1324, 2147483648
    %v1337 = vor.u32 1.1754944e-38, %v1336
    %v1338 = vsel %vm1335, %v1337, %v1333
    %v1339 = vmul.f32 1.0, %v1338
    %v1340 = vrot.slane %v1298, 4
    %v1342 = vtanh.pop %v1340
    %v1343 = vrot.slane %v1298, 6
    %v1345 = vxor.u32 %v1343, 2147483648
    %v1346 = vmul.f32 %v1345, 1.442695
    %v1347 = vpow.pop %v1346
    %v1348 = vadd.f32 %v1347, 1.0
    %v1349 = vrcp.pop %v1348
    %v1350 = vmul.f32 %v1348, %v1349
    %v1351 = vsub.f32 1.0, %v1350
    %v1352 = vmul.f32 %v1349, %v1351
    %v1353 = vadd.f32 %v1349, %v1352
    %vm1354 = vweird.f32 %v1348
    %vm1355 = vweird.f32 %v1349
    %vm1356 = vmor %vm1354, %vm1355
    %v1357 = vsel %vm1356, %v1349, %v1353
    %v1358 = vand.u32 2147483647, %v1348
    %vm1359 = vcmp.eq.f32.partialorder %v1358, 8.507059e+37
    %v1360 = vand.u32 %v1348, 2147483648
    %v1361 = vor.u32 1.1754944e-38, %v1360
    %v1362 = vsel %vm1359, %v1361, %v1357
    %v1363 = vmul.f32 1.0, %v1362
    %v1364 = vmul.f32 %v1339, %v1200
    %v1365 = vmul.f32 %v1317, %v1342
    %v1366 = vadd.f32 %v1364, %v1365
    %v1367 = vtanh.pop %v1366
    %v1368 = vmul.f32 %v1363, %v1367
    %s1369 = scalar_lea.vmem [#allocation3], 10
    %1370 = vst [vmem:[%s1369] sm:$0x3] %v1368
    %s1371 = scalar_lea.vmem [#allocation2], 48
    %v1372 = vld [vmem:[%s1371] sm:$0xff]
    %1373 = vmatpush.msra.mxu0 %v373
    %1374 = vmatpush.msra.mxu0 %v369
    %1375 = vmatpush.msra.mxu0 %v365
    %1376 = vmatpush.msra.mxu0 %v361
    %1377 = vmatpush.msra.mxu0 %v357
    %1378 = vmatpush.msra.mxu0 %v353
    %1379 = vmatpush.msra.mxu0 %v349
    %1380 = vmatpush.msra.mxu0 %v345
    %1381 = vmatpush.msra.mxu0 %v341
    %1382 = vmatpush.msra.mxu0 %v337
    %1383 = vmatpush.msra.mxu0 %v333
    %1384 = vmatpush.msra.mxu0 %v329
    %1385 = vmatpush.msra.mxu0 %v325
    %1386 = vmatpush.msra.mxu0 %v321
    %1387 = vmatpush.msra.mxu0 %v317
    %1388 = vmatpush.msra.mxu0 %v313
    %1389 = vmatmul.f32.gmra.mxu0 %v1368
    %v1390 = vpop.f32.mrf.mxu0
    %v1391 = vadd.f32 0.0, %v1390
    %1392 = vdwg.mxu0
    %1393 = vmatpush.msra.mxu0 %v374
    %1394 = vmatpush.msra.mxu0 %v370
    %1395 = vmatpush.msra.mxu0 %v366
    %1396 = vmatpush.msra.mxu0 %v362
    %1397 = vmatpush.msra.mxu0 %v358
    %1398 = vmatpush.msra.mxu0 %v354
    %1399 = vmatpush.msra.mxu0 %v350
    %1400 = vmatpush.msra.mxu0 %v346
    %1401 = vmatpush.msra.mxu0 %v342
    %1402 = vmatpush.msra.mxu0 %v338
    %1403 = vmatpush.msra.mxu0 %v334
    %1404 = vmatpush.msra.mxu0 %v330
    %1405 = vmatpush.msra.mxu0 %v326
    %1406 = vmatpush.msra.mxu0 %v322
    %1407 = vmatpush.msra.mxu0 %v318
    %1408 = vmatpush.msra.mxu0 %v314
    %1409 = vmatmul.f32.gmra.mxu0 %v1368
    %v1410 = vpop.f32.mrf.mxu0
    %v1411 = vadd.f32 0.0, %v1410
    %1412 = vdwg.mxu0
    %1413 = vmatpush.msra.mxu0 %v375
    %1414 = vmatpush.msra.mxu0 %v371
    %1415 = vmatpush.msra.mxu0 %v367
    %1416 = vmatpush.msra.mxu0 %v363
    %1417 = vmatpush.msra.mxu0 %v359
    %1418 = vmatpush.msra.mxu0 %v355
    %1419 = vmatpush.msra.mxu0 %v351
    %1420 = vmatpush.msra.mxu0 %v347
    %1421 = vmatpush.msra.mxu0 %v343
    %1422 = vmatpush.msra.mxu0 %v339
    %1423 = vmatpush.msra.mxu0 %v335
    %1424 = vmatpush.msra.mxu0 %v331
    %1425 = vmatpush.msra.mxu0 %v327
    %1426 = vmatpush.msra.mxu0 %v323
    %1427 = vmatpush.msra.mxu0 %v319
    %1428 = vmatpush.msra.mxu0 %v315
    %1429 = vmatmul.f32.gmra.mxu0 %v1368
    %v1430 = vpop.f32.mrf.mxu0
    %v1431 = vadd.f32 0.0, %v1430
    %1432 = vdwg.mxu0
    %1433 = vmatpush.msra.mxu0 %v376
    %1434 = vmatpush.msra.mxu0 %v372
    %1435 = vmatpush.msra.mxu0 %v368
    %1436 = vmatpush.msra.mxu0 %v364
    %1437 = vmatpush.msra.mxu0 %v360
    %1438 = vmatpush.msra.mxu0 %v356
    %1439 = vmatpush.msra.mxu0 %v352
    %1440 = vmatpush.msra.mxu0 %v348
    %1441 = vmatpush.msra.mxu0 %v344
    %1442 = vmatpush.msra.mxu0 %v340
    %1443 = vmatpush.msra.mxu0 %v336
    %1444 = vmatpush.msra.mxu0 %v332
    %1445 = vmatpush.msra.mxu0 %v328
    %1446 = vmatpush.msra.mxu0 %v324
    %1447 = vmatpush.msra.mxu0 %v320
    %1448 = vmatpush.msra.mxu0 %v316
    %1449 = vmatmul.f32.gmra.mxu0 %v1368
    %v1450 = vpop.f32.mrf.mxu0
    %v1451 = vadd.f32 0.0, %v1450
    %1452 = vdwg.mxu0
    %v1457 = vrot.slane %v1411, 6
    %v1458 = vrot.slane %v1431, 4
    %v1459 = vrot.slane %v1451, 2
    %v1460 = vsel %vm261, %v1391, %v1457
    %v1461 = vsel %vm263, %v1458, %v1459
    %v1462 = vsel %vm265, %v1460, %v1461
    %v1464 = vadd.f32 %v1372, %v1462
    %v1465 = vxor.u32 %v1464, 2147483648
    %v1466 = vmul.f32 %v1465, 1.442695
    %v1467 = vpow.pop %v1466
    %v1468 = vadd.f32 %v1467, 1.0
    %v1469 = vrcp.pop %v1468
    %v1470 = vmul.f32 %v1468, %v1469
    %v1471 = vsub.f32 1.0, %v1470
    %v1472 = vmul.f32 %v1469, %v1471
    %v1473 = vadd.f32 %v1469, %v1472
    %vm1474 = vweird.f32 %v1468
    %vm1475 = vweird.f32 %v1469
    %vm1476 = vmor %vm1474, %vm1475
    %v1477 = vsel %vm1476, %v1469, %v1473
    %v1478 = vand.u32 2147483647, %v1468
    %vm1479 = vcmp.eq.f32.partialorder %v1478, 8.507059e+37
    %v1480 = vand.u32 %v1468, 2147483648
    %v1481 = vor.u32 1.1754944e-38, %v1480
    %v1482 = vsel %vm1479, %v1481, %v1477
    %v1483 = vmul.f32 1.0, %v1482
    %v1485 = vrot.slane %v1464, 2
    %v1487 = vxor.u32 %v1485, 2147483648
    %v1488 = vmul.f32 %v1487, 1.442695
    %v1489 = vpow.pop %v1488
    %v1490 = vadd.f32 %v1489, 1.0
    %v1491 = vrcp.pop %v1490
    %v1492 = vmul.f32 %v1490, %v1491
    %v1493 = vsub.f32 1.0, %v1492
    %v1494 = vmul.f32 %v1491, %v1493
    %v1495 = vadd.f32 %v1491, %v1494
    %vm1496 = vweird.f32 %v1490
    %vm1497 = vweird.f32 %v1491
    %vm1498 = vmor %vm1496, %vm1497
    %v1499 = vsel %vm1498, %v1491, %v1495
    %v1500 = vand.u32 2147483647, %v1490
    %vm1501 = vcmp.eq.f32.partialorder %v1500, 8.507059e+37
    %v1502 = vand.u32 %v1490, 2147483648
    %v1503 = vor.u32 1.1754944e-38, %v1502
    %v1504 = vsel %vm1501, %v1503, %v1499
    %v1505 = vmul.f32 1.0, %v1504
    %v1506 = vrot.slane %v1464, 4
    %v1508 = vtanh.pop %v1506
    %v1509 = vrot.slane %v1464, 6
    %v1511 = vxor.u32 %v1509, 2147483648
    %v1512 = vmul.f32 %v1511, 1.442695
    %v1513 = vpow.pop %v1512
    %v1514 = vadd.f32 %v1513, 1.0
    %v1515 = vrcp.pop %v1514
    %v1516 = vmul.f32 %v1514, %v1515
    %v1517 = vsub.f32 1.0, %v1516
    %v1518 = vmul.f32 %v1515, %v1517
    %v1519 = vadd.f32 %v1515, %v1518
    %vm1520 = vweird.f32 %v1514
    %vm1521 = vweird.f32 %v1515
    %vm1522 = vmor %vm1520, %vm1521
    %v1523 = vsel %vm1522, %v1515, %v1519
    %v1524 = vand.u32 2147483647, %v1514
    %vm1525 = vcmp.eq.f32.partialorder %v1524, 8.507059e+37
    %v1526 = vand.u32 %v1514, 2147483648
    %v1527 = vor.u32 1.1754944e-38, %v1526
    %v1528 = vsel %vm1525, %v1527, %v1523
    %v1529 = vmul.f32 1.0, %v1528
    %v1530 = vmul.f32 %v1505, %v1366
    %v1531 = vmul.f32 %v1483, %v1508
    %v1532 = vadd.f32 %v1530, %v1531
    %v1533 = vtanh.pop %v1532
    %v1534 = vmul.f32 %v1529, %v1533
    %s1535 = scalar_lea.vmem [#allocation3], 12
    %1536 = vst [vmem:[%s1535] sm:$0x3] %v1534
    %s1537 = scalar_lea.vmem [#allocation2], 56
    %v1538 = vld [vmem:[%s1537] sm:$0xff]
    %1539 = vmatpush.msra.mxu0 %v373
    %1540 = vmatpush.msra.mxu0 %v369
    %1541 = vmatpush.msra.mxu0 %v365
    %1542 = vmatpush.msra.mxu0 %v361
    %1543 = vmatpush.msra.mxu0 %v357
    %1544 = vmatpush.msra.mxu0 %v353
    %1545 = vmatpush.msra.mxu0 %v349
    %1546 = vmatpush.msra.mxu0 %v345
    %1547 = vmatpush.msra.mxu0 %v341
    %1548 = vmatpush.msra.mxu0 %v337
    %1549 = vmatpush.msra.mxu0 %v333
    %1550 = vmatpush.msra.mxu0 %v329
    %1551 = vmatpush.msra.mxu0 %v325
    %1552 = vmatpush.msra.mxu0 %v321
    %1553 = vmatpush.msra.mxu0 %v317
    %1554 = vmatpush.msra.mxu0 %v313
    %1555 = vmatmul.f32.gmra.mxu0 %v1534
    %v1556 = vpop.f32.mrf.mxu0
    %v1557 = vadd.f32 0.0, %v1556
    %1558 = vdwg.mxu0
    %1559 = vmatpush.msra.mxu0 %v374
    %1560 = vmatpush.msra.mxu0 %v370
    %1561 = vmatpush.msra.mxu0 %v366
    %1562 = vmatpush.msra.mxu0 %v362
    %1563 = vmatpush.msra.mxu0 %v358
    %1564 = vmatpush.msra.mxu0 %v354
    %1565 = vmatpush.msra.mxu0 %v350
    %1566 = vmatpush.msra.mxu0 %v346
    %1567 = vmatpush.msra.mxu0 %v342
    %1568 = vmatpush.msra.mxu0 %v338
    %1569 = vmatpush.msra.mxu0 %v334
    %1570 = vmatpush.msra.mxu0 %v330
    %1571 = vmatpush.msra.mxu0 %v326
    %1572 = vmatpush.msra.mxu0 %v322
    %1573 = vmatpush.msra.mxu0 %v318
    %1574 = vmatpush.msra.mxu0 %v314
    %1575 = vmatmul.f32.gmra.mxu0 %v1534
    %v1576 = vpop.f32.mrf.mxu0
    %v1577 = vadd.f32 0.0, %v1576
    %1578 = vdwg.mxu0
    %1579 = vmatpush.msra.mxu0 %v375
    %1580 = vmatpush.msra.mxu0 %v371
    %1581 = vmatpush.msra.mxu0 %v367
    %1582 = vmatpush.msra.mxu0 %v363
    %1583 = vmatpush.msra.mxu0 %v359
    %1584 = vmatpush.msra.mxu0 %v355
    %1585 = vmatpush.msra.mxu0 %v351
    %1586 = vmatpush.msra.mxu0 %v347
    %1587 = vmatpush.msra.mxu0 %v343
    %1588 = vmatpush.msra.mxu0 %v339
    %1589 = vmatpush.msra.mxu0 %v335
    %1590 = vmatpush.msra.mxu0 %v331
    %1591 = vmatpush.msra.mxu0 %v327
    %1592 = vmatpush.msra.mxu0 %v323
    %1593 = vmatpush.msra.mxu0 %v319
    %1594 = vmatpush.msra.mxu0 %v315
    %1595 = vmatmul.f32.gmra.mxu0 %v1534
    %v1596 = vpop.f32.mrf.mxu0
    %v1597 = vadd.f32 0.0, %v1596
    %1598 = vdwg.mxu0
    %1599 = vmatpush.msra.mxu0 %v376
    %1600 = vmatpush.msra.mxu0 %v372
    %1601 = vmatpush.msra.mxu0 %v368
    %1602 = vmatpush.msra.mxu0 %v364
    %1603 = vmatpush.msra.mxu0 %v360
    %1604 = vmatpush.msra.mxu0 %v356
    %1605 = vmatpush.msra.mxu0 %v352
    %1606 = vmatpush.msra.mxu0 %v348
    %1607 = vmatpush.msra.mxu0 %v344
    %1608 = vmatpush.msra.mxu0 %v340
    %1609 = vmatpush.msra.mxu0 %v336
    %1610 = vmatpush.msra.mxu0 %v332
    %1611 = vmatpush.msra.mxu0 %v328
    %1612 = vmatpush.msra.mxu0 %v324
    %1613 = vmatpush.msra.mxu0 %v320
    %1614 = vmatpush.msra.mxu0 %v316
    %1615 = vmatmul.f32.gmra.mxu0 %v1534
    %v1616 = vpop.f32.mrf.mxu0
    %v1617 = vadd.f32 0.0, %v1616
    %1618 = vdwg.mxu0
    %v1623 = vrot.slane %v1577, 6
    %v1624 = vrot.slane %v1597, 4
    %v1625 = vrot.slane %v1617, 2
    %v1626 = vsel %vm261, %v1557, %v1623
    %v1627 = vsel %vm263, %v1624, %v1625
    %v1628 = vsel %vm265, %v1626, %v1627
    %v1630 = vadd.f32 %v1538, %v1628
    %v1631 = vxor.u32 %v1630, 2147483648
    %v1632 = vmul.f32 %v1631, 1.442695
    %v1633 = vpow.pop %v1632
    %v1634 = vadd.f32 %v1633, 1.0
    %v1635 = vrcp.pop %v1634
    %v1636 = vmul.f32 %v1634, %v1635
    %v1637 = vsub.f32 1.0, %v1636
    %v1638 = vmul.f32 %v1635, %v1637
    %v1639 = vadd.f32 %v1635, %v1638
    %vm1640 = vweird.f32 %v1634
    %vm1641 = vweird.f32 %v1635
    %vm1642 = vmor %vm1640, %vm1641
    %v1643 = vsel %vm1642, %v1635, %v1639
    %v1644 = vand.u32 2147483647, %v1634
    %vm1645 = vcmp.eq.f32.partialorder %v1644, 8.507059e+37
    %v1646 = vand.u32 %v1634, 2147483648
    %v1647 = vor.u32 1.1754944e-38, %v1646
    %v1648 = vsel %vm1645, %v1647, %v1643
    %v1649 = vmul.f32 1.0, %v1648
    %v1651 = vrot.slane %v1630, 2
    %v1653 = vxor.u32 %v1651, 2147483648
    %v1654 = vmul.f32 %v1653, 1.442695
    %v1655 = vpow.pop %v1654
    %v1656 = vadd.f32 %v1655, 1.0
    %v1657 = vrcp.pop %v1656
    %v1658 = vmul.f32 %v1656, %v1657
    %v1659 = vsub.f32 1.0, %v1658
    %v1660 = vmul.f32 %v1657, %v1659
    %v1661 = vadd.f32 %v1657, %v1660
    %vm1662 = vweird.f32 %v1656
    %vm1663 = vweird.f32 %v1657
    %vm1664 = vmor %vm1662, %vm1663
    %v1665 = vsel %vm1664, %v1657, %v1661
    %v1666 = vand.u32 2147483647, %v1656
    %vm1667 = vcmp.eq.f32.partialorder %v1666, 8.507059e+37
    %v1668 = vand.u32 %v1656, 2147483648
    %v1669 = vor.u32 1.1754944e-38, %v1668
    %v1670 = vsel %vm1667, %v1669, %v1665
    %v1671 = vmul.f32 1.0, %v1670
    %v1672 = vrot.slane %v1630, 4
    %v1674 = vtanh.pop %v1672
    %v1675 = vrot.slane %v1630, 6
    %v1677 = vxor.u32 %v1675, 2147483648
    %v1678 = vmul.f32 %v1677, 1.442695
    %v1679 = vpow.pop %v1678
    %v1680 = vadd.f32 %v1679, 1.0
    %v1681 = vrcp.pop %v1680
    %v1682 = vmul.f32 %v1680, %v1681
    %v1683 = vsub.f32 1.0, %v1682
    %v1684 = vmul.f32 %v1681, %v1683
    %v1685 = vadd.f32 %v1681, %v1684
    %vm1686 = vweird.f32 %v1680
    %vm1687 = vweird.f32 %v1681
    %vm1688 = vmor %vm1686, %vm1687
    %v1689 = vsel %vm1688, %v1681, %v1685
    %v1690 = vand.u32 2147483647, %v1680
    %vm1691 = vcmp.eq.f32.partialorder %v1690, 8.507059e+37
    %v1692 = vand.u32 %v1680, 2147483648
    %v1693 = vor.u32 1.1754944e-38, %v1692
    %v1694 = vsel %vm1691, %v1693, %v1689
    %v1695 = vmul.f32 1.0, %v1694
    %v1696 = vmul.f32 %v1671, %v1532
    %v1697 = vmul.f32 %v1649, %v1674
    %v1698 = vadd.f32 %v1696, %v1697
    %v1699 = vtanh.pop %v1698
    %v1700 = vmul.f32 %v1695, %v1699
    %s1701 = scalar_lea.vmem [#allocation3], 14
    %1702 = vst [vmem:[%s1701] sm:$0x3] %v1700
    %v1703 = vld [vmem:[#allocation3] sm:$0x3]
    %v1704 = vld [vmem:[#allocation3 + $0x2] sm:$0x3]
    %v1705 = vld [vmem:[#allocation3 + $0x4] sm:$0x3]
    %v1706 = vld [vmem:[#allocation3 + $0x6] sm:$0x3]
    %v1707 = vld [vmem:[#allocation3 + $0x8] sm:$0x3]
    %v1708 = vld [vmem:[#allocation3 + $0xa] sm:$0x3]
    %v1709 = vld [vmem:[#allocation3 + $0xc] sm:$0x3]
    %v1710 = vld [vmem:[#allocation3 + $0xe] sm:$0x3]
    %v1711 = vld [vmem:[#allocation9] sm:$0xff]
    %v1712 = vld [vmem:[#allocation9 + $0x8] sm:$0xff]
    %v1713 = vld [vmem:[#allocation9 + $0x10] sm:$0xff]
    %v1714 = vld [vmem:[#allocation9 + $0x18] sm:$0xff]
    %v1715 = vld [vmem:[#allocation9 + $0x20] sm:$0xff]
    %v1716 = vld [vmem:[#allocation9 + $0x28] sm:$0xff]
    %v1717 = vld [vmem:[#allocation9 + $0x30] sm:$0xff]
    %v1718 = vld [vmem:[#allocation9 + $0x38] sm:$0xff]
    %v1719 = vld [vmem:[#allocation9 + $0x40] sm:$0xff]
    %v1720 = vld [vmem:[#allocation9 + $0x48] sm:$0xff]
    %v1721 = vld [vmem:[#allocation9 + $0x50] sm:$0xff]
    %v1722 = vld [vmem:[#allocation9 + $0x58] sm:$0xff]
    %v1723 = vld [vmem:[#allocation9 + $0x60] sm:$0xff]
    %v1724 = vld [vmem:[#allocation9 + $0x68] sm:$0xff]
    %v1725 = vld [vmem:[#allocation9 + $0x70] sm:$0xff]
    %v1726 = vld [vmem:[#allocation9 + $0x78] sm:$0xff]
    %v1727 = vld [vmem:[#allocation9 + $0x80] sm:$0xff]
    %v1728 = vld [vmem:[#allocation9 + $0x88] sm:$0xff]
    %v1729 = vld [vmem:[#allocation9 + $0x90] sm:$0xff]
    %v1730 = vld [vmem:[#allocation9 + $0x98] sm:$0xff]
    %v1731 = vld [vmem:[#allocation9 + $0xa0] sm:$0xff]
    %v1732 = vld [vmem:[#allocation9 + $0xa8] sm:$0xff]
    %v1733 = vld [vmem:[#allocation9 + $0xb0] sm:$0xff]
    %v1734 = vld [vmem:[#allocation9 + $0xb8] sm:$0xff]
    %v1735 = vld [vmem:[#allocation9 + $0xc0] sm:$0xff]
    %v1736 = vld [vmem:[#allocation9 + $0xc8] sm:$0xff]
    %v1737 = vld [vmem:[#allocation9 + $0xd0] sm:$0xff]
    %v1738 = vld [vmem:[#allocation9 + $0xd8] sm:$0xff]
    %v1739 = vld [vmem:[#allocation9 + $0xe0] sm:$0xff]
    %v1740 = vld [vmem:[#allocation9 + $0xe8] sm:$0xff]
    %v1741 = vld [vmem:[#allocation9 + $0xf0] sm:$0xff]
    %v1742 = vld [vmem:[#allocation9 + $0xf8] sm:$0xff]
    %v1743 = vld [vmem:[#allocation9 + $0x100] sm:$0xff]
    %v1744 = vld [vmem:[#allocation9 + $0x108] sm:$0xff]
    %v1745 = vld [vmem:[#allocation9 + $0x110] sm:$0xff]
    %v1746 = vld [vmem:[#allocation9 + $0x118] sm:$0xff]
    %v1747 = vld [vmem:[#allocation9 + $0x120] sm:$0xff]
    %v1748 = vld [vmem:[#allocation9 + $0x128] sm:$0xff]
    %v1749 = vld [vmem:[#allocation9 + $0x130] sm:$0xff]
    %v1750 = vld [vmem:[#allocation9 + $0x138] sm:$0xff]
    %v1751 = vld [vmem:[#allocation9 + $0x140] sm:$0xff]
    %v1752 = vld [vmem:[#allocation9 + $0x148] sm:$0xff]
    %v1753 = vld [vmem:[#allocation9 + $0x150] sm:$0xff]
    %v1754 = vld [vmem:[#allocation9 + $0x158] sm:$0xff]
    %v1755 = vld [vmem:[#allocation9 + $0x160] sm:$0xff]
    %v1756 = vld [vmem:[#allocation9 + $0x168] sm:$0xff]
    %v1757 = vld [vmem:[#allocation9 + $0x170] sm:$0xff]
    %v1758 = vld [vmem:[#allocation9 + $0x178] sm:$0xff]
    %v1759 = vld [vmem:[#allocation9 + $0x180] sm:$0xff]
    %v1760 = vld [vmem:[#allocation9 + $0x188] sm:$0xff]
    %v1761 = vld [vmem:[#allocation9 + $0x190] sm:$0xff]
    %v1762 = vld [vmem:[#allocation9 + $0x198] sm:$0xff]
    %v1763 = vld [vmem:[#allocation9 + $0x1a0] sm:$0xff]
    %v1764 = vld [vmem:[#allocation9 + $0x1a8] sm:$0xff]
    %v1765 = vld [vmem:[#allocation9 + $0x1b0] sm:$0xff]
    %v1766 = vld [vmem:[#allocation9 + $0x1b8] sm:$0xff]
    %v1767 = vld [vmem:[#allocation9 + $0x1c0] sm:$0xff]
    %v1768 = vld [vmem:[#allocation9 + $0x1c8] sm:$0xff]
    %v1769 = vld [vmem:[#allocation9 + $0x1d0] sm:$0xff]
    %v1770 = vld [vmem:[#allocation9 + $0x1d8] sm:$0xff]
    %v1771 = vld [vmem:[#allocation9 + $0x1e0] sm:$0xff]
    %v1772 = vld [vmem:[#allocation9 + $0x1e8] sm:$0xff]
    %v1773 = vld [vmem:[#allocation9 + $0x1f0] sm:$0xff]
    %v1774 = vld [vmem:[#allocation9 + $0x1f8] sm:$0xff]
    %s1775 = scalar_lea.vmem [#allocation12], 4
    %v1776 = vld [vmem:[%s1775] sm:$0xf]
    %v1778 = vperm.slane %v1776, 0
    %v1779 = vperm.slane %v1776, 1
    %v1780 = vperm.slane %v1776, 2
    %v1781 = vperm.slane %v1776, 3
    %1794 = vst [vmem:[#allocation1] ss:$4 sm:$0xff] %v1703
    %s1795 = scalar_lea.vmem [#allocation1], 1
    %1796 = vst [vmem:[%s1795] ss:$4 sm:$0xff] %v1704
    %s1797 = scalar_lea.vmem [#allocation1], 2
    %1798 = vst [vmem:[%s1797] ss:$4 sm:$0xff] %v1705
    %s1799 = scalar_lea.vmem [#allocation1], 3
    %1800 = vst [vmem:[%s1799] ss:$4 sm:$0xff] %v1706
    %s1801 = scalar_lea.vmem [#allocation1], 32
    %1802 = vst [vmem:[%s1801] ss:$4 sm:$0xff] %v1707
    %s1803 = scalar_lea.vmem [#allocation1], 33
    %1804 = vst [vmem:[%s1803] ss:$4 sm:$0xff] %v1708
    %s1805 = scalar_lea.vmem [#allocation1], 34
    %1806 = vst [vmem:[%s1805] ss:$4 sm:$0xff] %v1709
    %s1807 = scalar_lea.vmem [#allocation1], 35
    %1808 = vst [vmem:[%s1807] ss:$4 sm:$0xff] %v1710
    %v1809 = vld.sshfl [vmem:[#allocation1] sm:$0xff pattern:$0x73625140]
    %v1810 = vld.sshfl [vmem:[#allocation1 + $0x20] sm:$0xff pattern:$0x73625140]
    %1813 = vmatpush.msra.mxu0 %v1771
    %1814 = vmatpush.msra.mxu0 %v1767
    %1815 = vmatpush.msra.mxu0 %v1763
    %1816 = vmatpush.msra.mxu0 %v1759
    %1817 = vmatpush.msra.mxu0 %v1755
    %1818 = vmatpush.msra.mxu0 %v1751
    %1819 = vmatpush.msra.mxu0 %v1747
    %1820 = vmatpush.msra.mxu0 %v1743
    %1821 = vmatpush.msra.mxu0 %v1739
    %1822 = vmatpush.msra.mxu0 %v1735
    %1823 = vmatpush.msra.mxu0 %v1731
    %1824 = vmatpush.msra.mxu0 %v1727
    %1825 = vmatpush.msra.mxu0 %v1723
    %1826 = vmatpush.msra.mxu0 %v1719
    %1827 = vmatpush.msra.mxu0 %v1715
    %1828 = vmatpush.msra.mxu0 %v1711
    %1829 = vmatmul.f32.gmra.mxu0 %v1809
    %v1830 = vpop.f32.mrf.mxu0
    %v1831 = vadd.f32 %v1778, %v1830
    %1832 = vmatmul.f32.gmra.mxu0 %v1810
    %v1833 = vpop.f32.mrf.mxu0
    %v1834 = vadd.f32 %v1778, %v1833
    %1835 = vdwg.mxu0
    %1836 = vmatpush.msra.mxu0 %v1772
    %1837 = vmatpush.msra.mxu0 %v1768
    %1838 = vmatpush.msra.mxu0 %v1764
    %1839 = vmatpush.msra.mxu0 %v1760
    %1840 = vmatpush.msra.mxu0 %v1756
    %1841 = vmatpush.msra.mxu0 %v1752
    %1842 = vmatpush.msra.mxu0 %v1748
    %1843 = vmatpush.msra.mxu0 %v1744
    %1844 = vmatpush.msra.mxu0 %v1740
    %1845 = vmatpush.msra.mxu0 %v1736
    %1846 = vmatpush.msra.mxu0 %v1732
    %1847 = vmatpush.msra.mxu0 %v1728
    %1848 = vmatpush.msra.mxu0 %v1724
    %1849 = vmatpush.msra.mxu0 %v1720
    %1850 = vmatpush.msra.mxu0 %v1716
    %1851 = vmatpush.msra.mxu0 %v1712
    %1852 = vmatmul.f32.gmra.mxu0 %v1809
    %v1853 = vpop.f32.mrf.mxu0
    %v1854 = vadd.f32 %v1779, %v1853
    %1855 = vmatmul.f32.gmra.mxu0 %v1810
    %v1856 = vpop.f32.mrf.mxu0
    %v1857 = vadd.f32 %v1779, %v1856
    %1858 = vdwg.mxu0
    %1859 = vmatpush.msra.mxu0 %v1773
    %1860 = vmatpush.msra.mxu0 %v1769
    %1861 = vmatpush.msra.mxu0 %v1765
    %1862 = vmatpush.msra.mxu0 %v1761
    %1863 = vmatpush.msra.mxu0 %v1757
    %1864 = vmatpush.msra.mxu0 %v1753
    %1865 = vmatpush.msra.mxu0 %v1749
    %1866 = vmatpush.msra.mxu0 %v1745
    %1867 = vmatpush.msra.mxu0 %v1741
    %1868 = vmatpush.msra.mxu0 %v1737
    %1869 = vmatpush.msra.mxu0 %v1733
    %1870 = vmatpush.msra.mxu0 %v1729
    %1871 = vmatpush.msra.mxu0 %v1725
    %1872 = vmatpush.msra.mxu0 %v1721
    %1873 = vmatpush.msra.mxu0 %v1717
    %1874 = vmatpush.msra.mxu0 %v1713
    %1875 = vmatmul.f32.gmra.mxu0 %v1809
    %v1876 = vpop.f32.mrf.mxu0
    %v1877 = vadd.f32 %v1780, %v1876
    %1878 = vmatmul.f32.gmra.mxu0 %v1810
    %v1879 = vpop.f32.mrf.mxu0
    %v1880 = vadd.f32 %v1780, %v1879
    %1881 = vdwg.mxu0
    %1882 = vmatpush.msra.mxu0 %v1774
    %1883 = vmatpush.msra.mxu0 %v1770
    %1884 = vmatpush.msra.mxu0 %v1766
    %1885 = vmatpush.msra.mxu0 %v1762
    %1886 = vmatpush.msra.mxu0 %v1758
    %1887 = vmatpush.msra.mxu0 %v1754
    %1888 = vmatpush.msra.mxu0 %v1750
    %1889 = vmatpush.msra.mxu0 %v1746
    %1890 = vmatpush.msra.mxu0 %v1742
    %1891 = vmatpush.msra.mxu0 %v1738
    %1892 = vmatpush.msra.mxu0 %v1734
    %1893 = vmatpush.msra.mxu0 %v1730
    %1894 = vmatpush.msra.mxu0 %v1726
    %1895 = vmatpush.msra.mxu0 %v1722
    %1896 = vmatpush.msra.mxu0 %v1718
    %1897 = vmatpush.msra.mxu0 %v1714
    %1898 = vmatmul.f32.gmra.mxu0 %v1809
    %v1899 = vpop.f32.mrf.mxu0
    %v1900 = vadd.f32 %v1781, %v1899
    %1901 = vmatmul.f32.gmra.mxu0 %v1810
    %v1902 = vpop.f32.mrf.mxu0
    %v1903 = vadd.f32 %v1781, %v1902
    %1904 = vdwg.mxu0
    %v1913 = vrot.slane %v1854, 6
    %v1914 = vrot.slane %v1877, 4
    %v1915 = vrot.slane %v1900, 2
    %v1916 = vrot.slane %v1857, 6
    %v1917 = vrot.slane %v1880, 4
    %v1918 = vrot.slane %v1903, 2
    %v1919 = vsel %vm261, %v1831, %v1913
    %v1920 = vsel %vm263, %v1914, %v1915
    %v1921 = vsel %vm265, %v1919, %v1920
    %v1922 = vsel %vm267, %v1831, %v1913
    %v1923 = vsel %vm269, %v1915, %v1914
    %v1924 = vsel %vm271, %v1922, %v1923
    %v1925 = vrot.slane %v1924, 2
    %v1926 = vsel %vm263, %v1831, %v1913
    %v1927 = vsel %vm261, %v1914, %v1915
    %v1928 = vsel %vm265, %v1927, %v1926
    %v1929 = vrot.slane %v1928, 4
    %v1930 = vsel %vm269, %v1913, %v1831
    %v1931 = vsel %vm267, %v1914, %v1915
    %v1932 = vsel %vm271, %v1931, %v1930
    %v1933 = vrot.slane %v1932, 6
    %v1934 = vsel %vm261, %v1834, %v1916
    %v1935 = vsel %vm263, %v1917, %v1918
    %v1936 = vsel %vm265, %v1934, %v1935
    %v1937 = vsel %vm267, %v1834, %v1916
    %v1938 = vsel %vm269, %v1918, %v1917
    %v1939 = vsel %vm271, %v1937, %v1938
    %v1940 = vrot.slane %v1939, 2
    %v1941 = vsel %vm263, %v1834, %v1916
    %v1942 = vsel %vm261, %v1917, %v1918
    %v1943 = vsel %vm265, %v1942, %v1941
    %v1944 = vrot.slane %v1943, 4
    %v1945 = vsel %vm269, %v1916, %v1834
    %v1946 = vsel %vm267, %v1917, %v1918
    %v1947 = vsel %vm271, %v1946, %v1945
    %v1948 = vrot.slane %v1947, 6
    %1957 = vst [vmem:[#allocation2] sm:$0xff] %v1921
    %1958 = vst [vmem:[#allocation2 + $0x8] sm:$0xff] %v1925
    %1959 = vst [vmem:[#allocation2 + $0x10] sm:$0xff] %v1929
    %1960 = vst [vmem:[#allocation2 + $0x18] sm:$0xff] %v1933
    %1961 = vst [vmem:[#allocation2 + $0x20] sm:$0xff] %v1936
    %1962 = vst [vmem:[#allocation2 + $0x28] sm:$0xff] %v1940
    %1963 = vst [vmem:[#allocation2 + $0x30] sm:$0xff] %v1944
    %1964 = vst [vmem:[#allocation2 + $0x38] sm:$0xff] %v1948
    %s1965 = scalar_lea.vmem [#allocation10], 512
    %v1966 = vld [vmem:[%s1965] sm:$0xff]
    %v1967 = vld [vmem:[%s1965 + $0x8] sm:$0xff]
    %v1968 = vld [vmem:[%s1965 + $0x10] sm:$0xff]
    %v1969 = vld [vmem:[%s1965 + $0x18] sm:$0xff]
    %v1970 = vld [vmem:[%s1965 + $0x20] sm:$0xff]
    %v1971 = vld [vmem:[%s1965 + $0x28] sm:$0xff]
    %v1972 = vld [vmem:[%s1965 + $0x30] sm:$0xff]
    %v1973 = vld [vmem:[%s1965 + $0x38] sm:$0xff]
    %v1974 = vld [vmem:[%s1965 + $0x40] sm:$0xff]
    %v1975 = vld [vmem:[%s1965 + $0x48] sm:$0xff]
    %v1976 = vld [vmem:[%s1965 + $0x50] sm:$0xff]
    %v1977 = vld [vmem:[%s1965 + $0x58] sm:$0xff]
    %v1978 = vld [vmem:[%s1965 + $0x60] sm:$0xff]
    %v1979 = vld [vmem:[%s1965 + $0x68] sm:$0xff]
    %v1980 = vld [vmem:[%s1965 + $0x70] sm:$0xff]
    %v1981 = vld [vmem:[%s1965 + $0x78] sm:$0xff]
    %v1982 = vld [vmem:[%s1965 + $0x80] sm:$0xff]
    %v1983 = vld [vmem:[%s1965 + $0x88] sm:$0xff]
    %v1984 = vld [vmem:[%s1965 + $0x90] sm:$0xff]
    %v1985 = vld [vmem:[%s1965 + $0x98] sm:$0xff]
    %v1986 = vld [vmem:[%s1965 + $0xa0] sm:$0xff]
    %v1987 = vld [vmem:[%s1965 + $0xa8] sm:$0xff]
    %v1988 = vld [vmem:[%s1965 + $0xb0] sm:$0xff]
    %v1989 = vld [vmem:[%s1965 + $0xb8] sm:$0xff]
    %v1990 = vld [vmem:[%s1965 + $0xc0] sm:$0xff]
    %v1991 = vld [vmem:[%s1965 + $0xc8] sm:$0xff]
    %v1992 = vld [vmem:[%s1965 + $0xd0] sm:$0xff]
    %v1993 = vld [vmem:[%s1965 + $0xd8] sm:$0xff]
    %v1994 = vld [vmem:[%s1965 + $0xe0] sm:$0xff]
    %v1995 = vld [vmem:[%s1965 + $0xe8] sm:$0xff]
    %v1996 = vld [vmem:[%s1965 + $0xf0] sm:$0xff]
    %v1997 = vld [vmem:[%s1965 + $0xf8] sm:$0xff]
    %v1998 = vld [vmem:[%s1965 + $0x100] sm:$0xff]
    %v1999 = vld [vmem:[%s1965 + $0x108] sm:$0xff]
    %v2000 = vld [vmem:[%s1965 + $0x110] sm:$0xff]
    %v2001 = vld [vmem:[%s1965 + $0x118] sm:$0xff]
    %v2002 = vld [vmem:[%s1965 + $0x120] sm:$0xff]
    %v2003 = vld [vmem:[%s1965 + $0x128] sm:$0xff]
    %v2004 = vld [vmem:[%s1965 + $0x130] sm:$0xff]
    %v2005 = vld [vmem:[%s1965 + $0x138] sm:$0xff]
    %v2006 = vld [vmem:[%s1965 + $0x140] sm:$0xff]
    %v2007 = vld [vmem:[%s1965 + $0x148] sm:$0xff]
    %v2008 = vld [vmem:[%s1965 + $0x150] sm:$0xff]
    %v2009 = vld [vmem:[%s1965 + $0x158] sm:$0xff]
    %v2010 = vld [vmem:[%s1965 + $0x160] sm:$0xff]
    %v2011 = vld [vmem:[%s1965 + $0x168] sm:$0xff]
    %v2012 = vld [vmem:[%s1965 + $0x170] sm:$0xff]
    %v2013 = vld [vmem:[%s1965 + $0x178] sm:$0xff]
    %v2014 = vld [vmem:[%s1965 + $0x180] sm:$0xff]
    %v2015 = vld [vmem:[%s1965 + $0x188] sm:$0xff]
    %v2016 = vld [vmem:[%s1965 + $0x190] sm:$0xff]
    %v2017 = vld [vmem:[%s1965 + $0x198] sm:$0xff]
    %v2018 = vld [vmem:[%s1965 + $0x1a0] sm:$0xff]
    %v2019 = vld [vmem:[%s1965 + $0x1a8] sm:$0xff]
    %v2020 = vld [vmem:[%s1965 + $0x1b0] sm:$0xff]
    %v2021 = vld [vmem:[%s1965 + $0x1b8] sm:$0xff]
    %v2022 = vld [vmem:[%s1965 + $0x1c0] sm:$0xff]
    %v2023 = vld [vmem:[%s1965 + $0x1c8] sm:$0xff]
    %v2024 = vld [vmem:[%s1965 + $0x1d0] sm:$0xff]
    %v2025 = vld [vmem:[%s1965 + $0x1d8] sm:$0xff]
    %v2026 = vld [vmem:[%s1965 + $0x1e0] sm:$0xff]
    %v2027 = vld [vmem:[%s1965 + $0x1e8] sm:$0xff]
    %v2028 = vld [vmem:[%s1965 + $0x1f0] sm:$0xff]
    %v2029 = vld [vmem:[%s1965 + $0x1f8] sm:$0xff]
    %v2030 = vld [vmem:[#allocation2] sm:$0xff]
    %2031 = vmatpush.msra.mxu0 %v2026
    %2032 = vmatpush.msra.mxu0 %v2022
    %2033 = vmatpush.msra.mxu0 %v2018
    %2034 = vmatpush.msra.mxu0 %v2014
    %2035 = vmatpush.msra.mxu0 %v2010
    %2036 = vmatpush.msra.mxu0 %v2006
    %2037 = vmatpush.msra.mxu0 %v2002
    %2038 = vmatpush.msra.mxu0 %v1998
    %2039 = vmatpush.msra.mxu0 %v1994
    %2040 = vmatpush.msra.mxu0 %v1990
    %2041 = vmatpush.msra.mxu0 %v1986
    %2042 = vmatpush.msra.mxu0 %v1982
    %2043 = vmatpush.msra.mxu0 %v1978
    %2044 = vmatpush.msra.mxu0 %v1974
    %2045 = vmatpush.msra.mxu0 %v1970
    %2046 = vmatpush.msra.mxu0 %v1966
    %2047 = vmatmul.f32.gmra.mxu0 0.0
    %v2048 = vpop.f32.mrf.mxu0
    %v2049 = vadd.f32 0.0, %v2048
    %2050 = vdwg.mxu0
    %2051 = vmatpush.msra.mxu0 %v2027
    %2052 = vmatpush.msra.mxu0 %v2023
    %2053 = vmatpush.msra.mxu0 %v2019
    %2054 = vmatpush.msra.mxu0 %v2015
    %2055 = vmatpush.msra.mxu0 %v2011
    %2056 = vmatpush.msra.mxu0 %v2007
    %2057 = vmatpush.msra.mxu0 %v2003
    %2058 = vmatpush.msra.mxu0 %v1999
    %2059 = vmatpush.msra.mxu0 %v1995
    %2060 = vmatpush.msra.mxu0 %v1991
    %2061 = vmatpush.msra.mxu0 %v1987
    %2062 = vmatpush.msra.mxu0 %v1983
    %2063 = vmatpush.msra.mxu0 %v1979
    %2064 = vmatpush.msra.mxu0 %v1975
    %2065 = vmatpush.msra.mxu0 %v1971
    %2066 = vmatpush.msra.mxu0 %v1967
    %2067 = vmatmul.f32.gmra.mxu0 0.0
    %v2068 = vpop.f32.mrf.mxu0
    %v2069 = vadd.f32 0.0, %v2068
    %2070 = vdwg.mxu0
    %2071 = vmatpush.msra.mxu0 %v2028
    %2072 = vmatpush.msra.mxu0 %v2024
    %2073 = vmatpush.msra.mxu0 %v2020
    %2074 = vmatpush.msra.mxu0 %v2016
    %2075 = vmatpush.msra.mxu0 %v2012
    %2076 = vmatpush.msra.mxu0 %v2008
    %2077 = vmatpush.msra.mxu0 %v2004
    %2078 = vmatpush.msra.mxu0 %v2000
    %2079 = vmatpush.msra.mxu0 %v1996
    %2080 = vmatpush.msra.mxu0 %v1992
    %2081 = vmatpush.msra.mxu0 %v1988
    %2082 = vmatpush.msra.mxu0 %v1984
    %2083 = vmatpush.msra.mxu0 %v1980
    %2084 = vmatpush.msra.mxu0 %v1976
    %2085 = vmatpush.msra.mxu0 %v1972
    %2086 = vmatpush.msra.mxu0 %v1968
    %2087 = vmatmul.f32.gmra.mxu0 0.0
    %v2088 = vpop.f32.mrf.mxu0
    %v2089 = vadd.f32 0.0, %v2088
    %2090 = vdwg.mxu0
    %2091 = vmatpush.msra.mxu0 %v2029
    %2092 = vmatpush.msra.mxu0 %v2025
    %2093 = vmatpush.msra.mxu0 %v2021
    %2094 = vmatpush.msra.mxu0 %v2017
    %2095 = vmatpush.msra.mxu0 %v2013
    %2096 = vmatpush.msra.mxu0 %v2009
    %2097 = vmatpush.msra.mxu0 %v2005
    %2098 = vmatpush.msra.mxu0 %v2001
    %2099 = vmatpush.msra.mxu0 %v1997
    %2100 = vmatpush.msra.mxu0 %v1993
    %2101 = vmatpush.msra.mxu0 %v1989
    %2102 = vmatpush.msra.mxu0 %v1985
    %2103 = vmatpush.msra.mxu0 %v1981
    %2104 = vmatpush.msra.mxu0 %v1977
    %2105 = vmatpush.msra.mxu0 %v1973
    %2106 = vmatpush.msra.mxu0 %v1969
    %2107 = vmatmul.f32.gmra.mxu0 0.0
    %v2108 = vpop.f32.mrf.mxu0
    %v2109 = vadd.f32 0.0, %v2108
    %2110 = vdwg.mxu0
    %v2115 = vrot.slane %v2069, 6
    %v2116 = vrot.slane %v2089, 4
    %v2117 = vrot.slane %v2109, 2
    %v2118 = vsel %vm261, %v2049, %v2115
    %v2119 = vsel %vm263, %v2116, %v2117
    %v2120 = vsel %vm265, %v2118, %v2119
    %v2122 = vadd.f32 %v2030, %v2120
    %v2123 = vxor.u32 %v2122, 2147483648
    %v2124 = vmul.f32 %v2123, 1.442695
    %v2125 = vpow.pop %v2124
    %v2126 = vadd.f32 %v2125, 1.0
    %v2127 = vrcp.pop %v2126
    %v2128 = vmul.f32 %v2126, %v2127
    %v2129 = vsub.f32 1.0, %v2128
    %v2130 = vmul.f32 %v2127, %v2129
    %v2131 = vadd.f32 %v2127, %v2130
    %vm2132 = vweird.f32 %v2126
    %vm2133 = vweird.f32 %v2127
    %vm2134 = vmor %vm2132, %vm2133
    %v2135 = vsel %vm2134, %v2127, %v2131
    %v2136 = vand.u32 2147483647, %v2126
    %vm2137 = vcmp.eq.f32.partialorder %v2136, 8.507059e+37
    %v2138 = vand.u32 %v2126, 2147483648
    %v2139 = vor.u32 1.1754944e-38, %v2138
    %v2140 = vsel %vm2137, %v2139, %v2135
    %v2141 = vmul.f32 1.0, %v2140
    %v2143 = vrot.slane %v2122, 2
    %v2145 = vxor.u32 %v2143, 2147483648
    %v2146 = vmul.f32 %v2145, 1.442695
    %v2147 = vpow.pop %v2146
    %v2148 = vadd.f32 %v2147, 1.0
    %v2149 = vrcp.pop %v2148
    %v2150 = vmul.f32 %v2148, %v2149
    %v2151 = vsub.f32 1.0, %v2150
    %v2152 = vmul.f32 %v2149, %v2151
    %v2153 = vadd.f32 %v2149, %v2152
    %vm2154 = vweird.f32 %v2148
    %vm2155 = vweird.f32 %v2149
    %vm2156 = vmor %vm2154, %vm2155
    %v2157 = vsel %vm2156, %v2149, %v2153
    %v2158 = vand.u32 2147483647, %v2148
    %vm2159 = vcmp.eq.f32.partialorder %v2158, 8.507059e+37
    %v2160 = vand.u32 %v2148, 2147483648
    %v2161 = vor.u32 1.1754944e-38, %v2160
    %v2162 = vsel %vm2159, %v2161, %v2157
    %v2163 = vmul.f32 1.0, %v2162
    %v2164 = vrot.slane %v2122, 4
    %v2166 = vtanh.pop %v2164
    %v2167 = vrot.slane %v2122, 6
    %v2169 = vxor.u32 %v2167, 2147483648
    %v2170 = vmul.f32 %v2169, 1.442695
    %v2171 = vpow.pop %v2170
    %v2172 = vadd.f32 %v2171, 1.0
    %v2173 = vrcp.pop %v2172
    %v2174 = vmul.f32 %v2172, %v2173
    %v2175 = vsub.f32 1.0, %v2174
    %v2176 = vmul.f32 %v2173, %v2175
    %v2177 = vadd.f32 %v2173, %v2176
    %vm2178 = vweird.f32 %v2172
    %vm2179 = vweird.f32 %v2173
    %vm2180 = vmor %vm2178, %vm2179
    %v2181 = vsel %vm2180, %v2173, %v2177
    %v2182 = vand.u32 2147483647, %v2172
    %vm2183 = vcmp.eq.f32.partialorder %v2182, 8.507059e+37
    %v2184 = vand.u32 %v2172, 2147483648
    %v2185 = vor.u32 1.1754944e-38, %v2184
    %v2186 = vsel %vm2183, %v2185, %v2181
    %v2187 = vmul.f32 1.0, %v2186
    %v2188 = vmul.f32 %v2163, 0.0
    %v2189 = vmul.f32 %v2141, %v2166
    %v2190 = vadd.f32 %v2188, %v2189
    %v2191 = vtanh.pop %v2190
    %v2192 = vmul.f32 %v2187, %v2191
    %2193 = vst [vmem:[#allocation13] sm:$0x3] %v2192
    %v2194 = vld [vmem:[%s541] sm:$0xff]
    %2195 = vmatpush.msra.mxu0 %v2026
    %2196 = vmatpush.msra.mxu0 %v2022
    %2197 = vmatpush.msra.mxu0 %v2018
    %2198 = vmatpush.msra.mxu0 %v2014
    %2199 = vmatpush.msra.mxu0 %v2010
    %2200 = vmatpush.msra.mxu0 %v2006
    %2201 = vmatpush.msra.mxu0 %v2002
    %2202 = vmatpush.msra.mxu0 %v1998
    %2203 = vmatpush.msra.mxu0 %v1994
    %2204 = vmatpush.msra.mxu0 %v1990
    %2205 = vmatpush.msra.mxu0 %v1986
    %2206 = vmatpush.msra.mxu0 %v1982
    %2207 = vmatpush.msra.mxu0 %v1978
    %2208 = vmatpush.msra.mxu0 %v1974
    %2209 = vmatpush.msra.mxu0 %v1970
    %2210 = vmatpush.msra.mxu0 %v1966
    %2211 = vmatmul.f32.gmra.mxu0 %v2192
    %v2212 = vpop.f32.mrf.mxu0
    %v2213 = vadd.f32 0.0, %v2212
    %2214 = vdwg.mxu0
    %2215 = vmatpush.msra.mxu0 %v2027
    %2216 = vmatpush.msra.mxu0 %v2023
    %2217 = vmatpush.msra.mxu0 %v2019
    %2218 = vmatpush.msra.mxu0 %v2015
    %2219 = vmatpush.msra.mxu0 %v2011
    %2220 = vmatpush.msra.mxu0 %v2007
    %2221 = vmatpush.msra.mxu0 %v2003
    %2222 = vmatpush.msra.mxu0 %v1999
    %2223 = vmatpush.msra.mxu0 %v1995
    %2224 = vmatpush.msra.mxu0 %v1991
    %2225 = vmatpush.msra.mxu0 %v1987
    %2226 = vmatpush.msra.mxu0 %v1983
    %2227 = vmatpush.msra.mxu0 %v1979
    %2228 = vmatpush.msra.mxu0 %v1975
    %2229 = vmatpush.msra.mxu0 %v1971
    %2230 = vmatpush.msra.mxu0 %v1967
    %2231 = vmatmul.f32.gmra.mxu0 %v2192
    %v2232 = vpop.f32.mrf.mxu0
    %v2233 = vadd.f32 0.0, %v2232
    %2234 = vdwg.mxu0
    %2235 = vmatpush.msra.mxu0 %v2028
    %2236 = vmatpush.msra.mxu0 %v2024
    %2237 = vmatpush.msra.mxu0 %v2020
    %2238 = vmatpush.msra.mxu0 %v2016
    %2239 = vmatpush.msra.mxu0 %v2012
    %2240 = vmatpush.msra.mxu0 %v2008
    %2241 = vmatpush.msra.mxu0 %v2004
    %2242 = vmatpush.msra.mxu0 %v2000
    %2243 = vmatpush.msra.mxu0 %v1996
    %2244 = vmatpush.msra.mxu0 %v1992
    %2245 = vmatpush.msra.mxu0 %v1988
    %2246 = vmatpush.msra.mxu0 %v1984
    %2247 = vmatpush.msra.mxu0 %v1980
    %2248 = vmatpush.msra.mxu0 %v1976
    %2249 = vmatpush.msra.mxu0 %v1972
    %2250 = vmatpush.msra.mxu0 %v1968
    %2251 = vmatmul.f32.gmra.mxu0 %v2192
    %v2252 = vpop.f32.mrf.mxu0
    %v2253 = vadd.f32 0.0, %v2252
    %2254 = vdwg.mxu0
    %2255 = vmatpush.msra.mxu0 %v2029
    %2256 = vmatpush.msra.mxu0 %v2025
    %2257 = vmatpush.msra.mxu0 %v2021
    %2258 = vmatpush.msra.mxu0 %v2017
    %2259 = vmatpush.msra.mxu0 %v2013
    %2260 = vmatpush.msra.mxu0 %v2009
    %2261 = vmatpush.msra.mxu0 %v2005
    %2262 = vmatpush.msra.mxu0 %v2001
    %2263 = vmatpush.msra.mxu0 %v1997
    %2264 = vmatpush.msra.mxu0 %v1993
    %2265 = vmatpush.msra.mxu0 %v1989
    %2266 = vmatpush.msra.mxu0 %v1985
    %2267 = vmatpush.msra.mxu0 %v1981
    %2268 = vmatpush.msra.mxu0 %v1977
    %2269 = vmatpush.msra.mxu0 %v1973
    %2270 = vmatpush.msra.mxu0 %v1969
    %2271 = vmatmul.f32.gmra.mxu0 %v2192
    %v2272 = vpop.f32.mrf.mxu0
    %v2273 = vadd.f32 0.0, %v2272
    %2274 = vdwg.mxu0
    %v2279 = vrot.slane %v2233, 6
    %v2280 = vrot.slane %v2253, 4
    %v2281 = vrot.slane %v2273, 2
    %v2282 = vsel %vm261, %v2213, %v2279
    %v2283 = vsel %vm263, %v2280, %v2281
    %v2284 = vsel %vm265, %v2282, %v2283
    %v2286 = vadd.f32 %v2194, %v2284
    %v2287 = vxor.u32 %v2286, 2147483648
    %v2288 = vmul.f32 %v2287, 1.442695
    %v2289 = vpow.pop %v2288
    %v2290 = vadd.f32 %v2289, 1.0
    %v2291 = vrcp.pop %v2290
    %v2292 = vmul.f32 %v2290, %v2291
    %v2293 = vsub.f32 1.0, %v2292
    %v2294 = vmul.f32 %v2291, %v2293
    %v2295 = vadd.f32 %v2291, %v2294
    %vm2296 = vweird.f32 %v2290
    %vm2297 = vweird.f32 %v2291
    %vm2298 = vmor %vm2296, %vm2297
    %v2299 = vsel %vm2298, %v2291, %v2295
    %v2300 = vand.u32 2147483647, %v2290
    %vm2301 = vcmp.eq.f32.partialorder %v2300, 8.507059e+37
    %v2302 = vand.u32 %v2290, 2147483648
    %v2303 = vor.u32 1.1754944e-38, %v2302
    %v2304 = vsel %vm2301, %v2303, %v2299
    %v2305 = vmul.f32 1.0, %v2304
    %v2307 = vrot.slane %v2286, 2
    %v2309 = vxor.u32 %v2307, 2147483648
    %v2310 = vmul.f32 %v2309, 1.442695
    %v2311 = vpow.pop %v2310
    %v2312 = vadd.f32 %v2311, 1.0
    %v2313 = vrcp.pop %v2312
    %v2314 = vmul.f32 %v2312, %v2313
    %v2315 = vsub.f32 1.0, %v2314
    %v2316 = vmul.f32 %v2313, %v2315
    %v2317 = vadd.f32 %v2313, %v2316
    %vm2318 = vweird.f32 %v2312
    %vm2319 = vweird.f32 %v2313
    %vm2320 = vmor %vm2318, %vm2319
    %v2321 = vsel %vm2320, %v2313, %v2317
    %v2322 = vand.u32 2147483647, %v2312
    %vm2323 = vcmp.eq.f32.partialorder %v2322, 8.507059e+37
    %v2324 = vand.u32 %v2312, 2147483648
    %v2325 = vor.u32 1.1754944e-38, %v2324
    %v2326 = vsel %vm2323, %v2325, %v2321
    %v2327 = vmul.f32 1.0, %v2326
    %v2328 = vrot.slane %v2286, 4
    %v2330 = vtanh.pop %v2328
    %v2331 = vrot.slane %v2286, 6
    %v2333 = vxor.u32 %v2331, 2147483648
    %v2334 = vmul.f32 %v2333, 1.442695
    %v2335 = vpow.pop %v2334
    %v2336 = vadd.f32 %v2335, 1.0
    %v2337 = vrcp.pop %v2336
    %v2338 = vmul.f32 %v2336, %v2337
    %v2339 = vsub.f32 1.0, %v2338
    %v2340 = vmul.f32 %v2337, %v2339
    %v2341 = vadd.f32 %v2337, %v2340
    %vm2342 = vweird.f32 %v2336
    %vm2343 = vweird.f32 %v2337
    %vm2344 = vmor %vm2342, %vm2343
    %v2345 = vsel %vm2344, %v2337, %v2341
    %v2346 = vand.u32 2147483647, %v2336
    %vm2347 = vcmp.eq.f32.partialorder %v2346, 8.507059e+37
    %v2348 = vand.u32 %v2336, 2147483648
    %v2349 = vor.u32 1.1754944e-38, %v2348
    %v2350 = vsel %vm2347, %v2349, %v2345
    %v2351 = vmul.f32 1.0, %v2350
    %v2352 = vmul.f32 %v2327, %v2190
    %v2353 = vmul.f32 %v2305, %v2330
    %v2354 = vadd.f32 %v2352, %v2353
    %v2355 = vtanh.pop %v2354
    %v2356 = vmul.f32 %v2351, %v2355
    %s2357 = scalar_lea.vmem [#allocation13], 2
    %2358 = vst [vmem:[%s2357] sm:$0x3] %v2356
    %v2359 = vld [vmem:[%s707] sm:$0xff]
    %2360 = vmatpush.msra.mxu0 %v2026
    %2361 = vmatpush.msra.mxu0 %v2022
    %2362 = vmatpush.msra.mxu0 %v2018
    %2363 = vmatpush.msra.mxu0 %v2014
    %2364 = vmatpush.msra.mxu0 %v2010
    %2365 = vmatpush.msra.mxu0 %v2006
    %2366 = vmatpush.msra.mxu0 %v2002
    %2367 = vmatpush.msra.mxu0 %v1998
    %2368 = vmatpush.msra.mxu0 %v1994
    %2369 = vmatpush.msra.mxu0 %v1990
    %2370 = vmatpush.msra.mxu0 %v1986
    %2371 = vmatpush.msra.mxu0 %v1982
    %2372 = vmatpush.msra.mxu0 %v1978
    %2373 = vmatpush.msra.mxu0 %v1974
    %2374 = vmatpush.msra.mxu0 %v1970
    %2375 = vmatpush.msra.mxu0 %v1966
    %2376 = vmatmul.f32.gmra.mxu0 %v2356
    %v2377 = vpop.f32.mrf.mxu0
    %v2378 = vadd.f32 0.0, %v2377
    %2379 = vdwg.mxu0
    %2380 = vmatpush.msra.mxu0 %v2027
    %2381 = vmatpush.msra.mxu0 %v2023
    %2382 = vmatpush.msra.mxu0 %v2019
    %2383 = vmatpush.msra.mxu0 %v2015
    %2384 = vmatpush.msra.mxu0 %v2011
    %2385 = vmatpush.msra.mxu0 %v2007
    %2386 = vmatpush.msra.mxu0 %v2003
    %2387 = vmatpush.msra.mxu0 %v1999
    %2388 = vmatpush.msra.mxu0 %v1995
    %2389 = vmatpush.msra.mxu0 %v1991
    %2390 = vmatpush.msra.mxu0 %v1987
    %2391 = vmatpush.msra.mxu0 %v1983
    %2392 = vmatpush.msra.mxu0 %v1979
    %2393 = vmatpush.msra.mxu0 %v1975
    %2394 = vmatpush.msra.mxu0 %v1971
    %2395 = vmatpush.msra.mxu0 %v1967
    %2396 = vmatmul.f32.gmra.mxu0 %v2356
    %v2397 = vpop.f32.mrf.mxu0
    %v2398 = vadd.f32 0.0, %v2397
    %2399 = vdwg.mxu0
    %2400 = vmatpush.msra.mxu0 %v2028
    %2401 = vmatpush.msra.mxu0 %v2024
    %2402 = vmatpush.msra.mxu0 %v2020
    %2403 = vmatpush.msra.mxu0 %v2016
    %2404 = vmatpush.msra.mxu0 %v2012
    %2405 = vmatpush.msra.mxu0 %v2008
    %2406 = vmatpush.msra.mxu0 %v2004
    %2407 = vmatpush.msra.mxu0 %v2000
    %2408 = vmatpush.msra.mxu0 %v1996
    %2409 = vmatpush.msra.mxu0 %v1992
    %2410 = vmatpush.msra.mxu0 %v1988
    %2411 = vmatpush.msra.mxu0 %v1984
    %2412 = vmatpush.msra.mxu0 %v1980
    %2413 = vmatpush.msra.mxu0 %v1976
    %2414 = vmatpush.msra.mxu0 %v1972
    %2415 = vmatpush.msra.mxu0 %v1968
    %2416 = vmatmul.f32.gmra.mxu0 %v2356
    %v2417 = vpop.f32.mrf.mxu0
    %v2418 = vadd.f32 0.0, %v2417
    %2419 = vdwg.mxu0
    %2420 = vmatpush.msra.mxu0 %v2029
    %2421 = vmatpush.msra.mxu0 %v2025
    %2422 = vmatpush.msra.mxu0 %v2021
    %2423 = vmatpush.msra.mxu0 %v2017
    %2424 = vmatpush.msra.mxu0 %v2013
    %2425 = vmatpush.msra.mxu0 %v2009
    %2426 = vmatpush.msra.mxu0 %v2005
    %2427 = vmatpush.msra.mxu0 %v2001
    %2428 = vmatpush.msra.mxu0 %v1997
    %2429 = vmatpush.msra.mxu0 %v1993
    %2430 = vmatpush.msra.mxu0 %v1989
    %2431 = vmatpush.msra.mxu0 %v1985
    %2432 = vmatpush.msra.mxu0 %v1981
    %2433 = vmatpush.msra.mxu0 %v1977
    %2434 = vmatpush.msra.mxu0 %v1973
    %2435 = vmatpush.msra.mxu0 %v1969
    %2436 = vmatmul.f32.gmra.mxu0 %v2356
    %v2437 = vpop.f32.mrf.mxu0
    %v2438 = vadd.f32 0.0, %v2437
    %2439 = vdwg.mxu0
    %v2444 = vrot.slane %v2398, 6
    %v2445 = vrot.slane %v2418, 4
    %v2446 = vrot.slane %v2438, 2
    %v2447 = vsel %vm261, %v2378, %v2444
    %v2448 = vsel %vm263, %v2445, %v2446
    %v2449 = vsel %vm265, %v2447, %v2448
    %v2451 = vadd.f32 %v2359, %v2449
    %v2452 = vxor.u32 %v2451, 2147483648
    %v2453 = vmul.f32 %v2452, 1.442695
    %v2454 = vpow.pop %v2453
    %v2455 = vadd.f32 %v2454, 1.0
    %v2456 = vrcp.pop %v2455
    %v2457 = vmul.f32 %v2455, %v2456
    %v2458 = vsub.f32 1.0, %v2457
    %v2459 = vmul.f32 %v2456, %v2458
    %v2460 = vadd.f32 %v2456, %v2459
    %vm2461 = vweird.f32 %v2455
    %vm2462 = vweird.f32 %v2456
    %vm2463 = vmor %vm2461, %vm2462
    %v2464 = vsel %vm2463, %v2456, %v2460
    %v2465 = vand.u32 2147483647, %v2455
    %vm2466 = vcmp.eq.f32.partialorder %v2465, 8.507059e+37
    %v2467 = vand.u32 %v2455, 2147483648
    %v2468 = vor.u32 1.1754944e-38, %v2467
    %v2469 = vsel %vm2466, %v2468, %v2464
    %v2470 = vmul.f32 1.0, %v2469
    %v2472 = vrot.slane %v2451, 2
    %v2474 = vxor.u32 %v2472, 2147483648
    %v2475 = vmul.f32 %v2474, 1.442695
    %v2476 = vpow.pop %v2475
    %v2477 = vadd.f32 %v2476, 1.0
    %v2478 = vrcp.pop %v2477
    %v2479 = vmul.f32 %v2477, %v2478
    %v2480 = vsub.f32 1.0, %v2479
    %v2481 = vmul.f32 %v2478, %v2480
    %v2482 = vadd.f32 %v2478, %v2481
    %vm2483 = vweird.f32 %v2477
    %vm2484 = vweird.f32 %v2478
    %vm2485 = vmor %vm2483, %vm2484
    %v2486 = vsel %vm2485, %v2478, %v2482
    %v2487 = vand.u32 2147483647, %v2477
    %vm2488 = vcmp.eq.f32.partialorder %v2487, 8.507059e+37
    %v2489 = vand.u32 %v2477, 2147483648
    %v2490 = vor.u32 1.1754944e-38, %v2489
    %v2491 = vsel %vm2488, %v2490, %v2486
    %v2492 = vmul.f32 1.0, %v2491
    %v2493 = vrot.slane %v2451, 4
    %v2495 = vtanh.pop %v2493
    %v2496 = vrot.slane %v2451, 6
    %v2498 = vxor.u32 %v2496, 2147483648
    %v2499 = vmul.f32 %v2498, 1.442695
    %v2500 = vpow.pop %v2499
    %v2501 = vadd.f32 %v2500, 1.0
    %v2502 = vrcp.pop %v2501
    %v2503 = vmul.f32 %v2501, %v2502
    %v2504 = vsub.f32 1.0, %v2503
    %v2505 = vmul.f32 %v2502, %v2504
    %v2506 = vadd.f32 %v2502, %v2505
    %vm2507 = vweird.f32 %v2501
    %vm2508 = vweird.f32 %v2502
    %vm2509 = vmor %vm2507, %vm2508
    %v2510 = vsel %vm2509, %v2502, %v2506
    %v2511 = vand.u32 2147483647, %v2501
    %vm2512 = vcmp.eq.f32.partialorder %v2511, 8.507059e+37
    %v2513 = vand.u32 %v2501, 2147483648
    %v2514 = vor.u32 1.1754944e-38, %v2513
    %v2515 = vsel %vm2512, %v2514, %v2510
    %v2516 = vmul.f32 1.0, %v2515
    %v2517 = vmul.f32 %v2492, %v2354
    %v2518 = vmul.f32 %v2470, %v2495
    %v2519 = vadd.f32 %v2517, %v2518
    %v2520 = vtanh.pop %v2519
    %v2521 = vmul.f32 %v2516, %v2520
    %s2522 = scalar_lea.vmem [#allocation13], 4
    %2523 = vst [vmem:[%s2522] sm:$0x3] %v2521
    %v2524 = vld [vmem:[%s873] sm:$0xff]
    %2525 = vmatpush.msra.mxu0 %v2026
    %2526 = vmatpush.msra.mxu0 %v2022
    %2527 = vmatpush.msra.mxu0 %v2018
    %2528 = vmatpush.msra.mxu0 %v2014
    %2529 = vmatpush.msra.mxu0 %v2010
    %2530 = vmatpush.msra.mxu0 %v2006
    %2531 = vmatpush.msra.mxu0 %v2002
    %2532 = vmatpush.msra.mxu0 %v1998
    %2533 = vmatpush.msra.mxu0 %v1994
    %2534 = vmatpush.msra.mxu0 %v1990
    %2535 = vmatpush.msra.mxu0 %v1986
    %2536 = vmatpush.msra.mxu0 %v1982
    %2537 = vmatpush.msra.mxu0 %v1978
    %2538 = vmatpush.msra.mxu0 %v1974
    %2539 = vmatpush.msra.mxu0 %v1970
    %2540 = vmatpush.msra.mxu0 %v1966
    %2541 = vmatmul.f32.gmra.mxu0 %v2521
    %v2542 = vpop.f32.mrf.mxu0
    %v2543 = vadd.f32 0.0, %v2542
    %2544 = vdwg.mxu0
    %2545 = vmatpush.msra.mxu0 %v2027
    %2546 = vmatpush.msra.mxu0 %v2023
    %2547 = vmatpush.msra.mxu0 %v2019
    %2548 = vmatpush.msra.mxu0 %v2015
    %2549 = vmatpush.msra.mxu0 %v2011
    %2550 = vmatpush.msra.mxu0 %v2007
    %2551 = vmatpush.msra.mxu0 %v2003
    %2552 = vmatpush.msra.mxu0 %v1999
    %2553 = vmatpush.msra.mxu0 %v1995
    %2554 = vmatpush.msra.mxu0 %v1991
    %2555 = vmatpush.msra.mxu0 %v1987
    %2556 = vmatpush.msra.mxu0 %v1983
    %2557 = vmatpush.msra.mxu0 %v1979
    %2558 = vmatpush.msra.mxu0 %v1975
    %2559 = vmatpush.msra.mxu0 %v1971
    %2560 = vmatpush.msra.mxu0 %v1967
    %2561 = vmatmul.f32.gmra.mxu0 %v2521
    %v2562 = vpop.f32.mrf.mxu0
    %v2563 = vadd.f32 0.0, %v2562
    %2564 = vdwg.mxu0
    %2565 = vmatpush.msra.mxu0 %v2028
    %2566 = vmatpush.msra.mxu0 %v2024
    %2567 = vmatpush.msra.mxu0 %v2020
    %2568 = vmatpush.msra.mxu0 %v2016
    %2569 = vmatpush.msra.mxu0 %v2012
    %2570 = vmatpush.msra.mxu0 %v2008
    %2571 = vmatpush.msra.mxu0 %v2004
    %2572 = vmatpush.msra.mxu0 %v2000
    %2573 = vmatpush.msra.mxu0 %v1996
    %2574 = vmatpush.msra.mxu0 %v1992
    %2575 = vmatpush.msra.mxu0 %v1988
    %2576 = vmatpush.msra.mxu0 %v1984
    %2577 = vmatpush.msra.mxu0 %v1980
    %2578 = vmatpush.msra.mxu0 %v1976
    %2579 = vmatpush.msra.mxu0 %v1972
    %2580 = vmatpush.msra.mxu0 %v1968
    %2581 = vmatmul.f32.gmra.mxu0 %v2521
    %v2582 = vpop.f32.mrf.mxu0
    %v2583 = vadd.f32 0.0, %v2582
    %2584 = vdwg.mxu0
    %2585 = vmatpush.msra.mxu0 %v2029
    %2586 = vmatpush.msra.mxu0 %v2025
    %2587 = vmatpush.msra.mxu0 %v2021
    %2588 = vmatpush.msra.mxu0 %v2017
    %2589 = vmatpush.msra.mxu0 %v2013
    %2590 = vmatpush.msra.mxu0 %v2009
    %2591 = vmatpush.msra.mxu0 %v2005
    %2592 = vmatpush.msra.mxu0 %v2001
    %2593 = vmatpush.msra.mxu0 %v1997
    %2594 = vmatpush.msra.mxu0 %v1993
    %2595 = vmatpush.msra.mxu0 %v1989
    %2596 = vmatpush.msra.mxu0 %v1985
    %2597 = vmatpush.msra.mxu0 %v1981
    %2598 = vmatpush.msra.mxu0 %v1977
    %2599 = vmatpush.msra.mxu0 %v1973
    %2600 = vmatpush.msra.mxu0 %v1969
    %2601 = vmatmul.f32.gmra.mxu0 %v2521
    %v2602 = vpop.f32.mrf.mxu0
    %v2603 = vadd.f32 0.0, %v2602
    %2604 = vdwg.mxu0
    %v2609 = vrot.slane %v2563, 6
    %v2610 = vrot.slane %v2583, 4
    %v2611 = vrot.slane %v2603, 2
    %v2612 = vsel %vm261, %v2543, %v2609
    %v2613 = vsel %vm263, %v2610, %v2611
    %v2614 = vsel %vm265, %v2612, %v2613
    %v2616 = vadd.f32 %v2524, %v2614
    %v2617 = vxor.u32 %v2616, 2147483648
    %v2618 = vmul.f32 %v2617, 1.442695
    %v2619 = vpow.pop %v2618
    %v2620 = vadd.f32 %v2619, 1.0
    %v2621 = vrcp.pop %v2620
    %v2622 = vmul.f32 %v2620, %v2621
    %v2623 = vsub.f32 1.0, %v2622
    %v2624 = vmul.f32 %v2621, %v2623
    %v2625 = vadd.f32 %v2621, %v2624
    %vm2626 = vweird.f32 %v2620
    %vm2627 = vweird.f32 %v2621
    %vm2628 = vmor %vm2626, %vm2627
    %v2629 = vsel %vm2628, %v2621, %v2625
    %v2630 = vand.u32 2147483647, %v2620
    %vm2631 = vcmp.eq.f32.partialorder %v2630, 8.507059e+37
    %v2632 = vand.u32 %v2620, 2147483648
    %v2633 = vor.u32 1.1754944e-38, %v2632
    %v2634 = vsel %vm2631, %v2633, %v2629
    %v2635 = vmul.f32 1.0, %v2634
    %v2637 = vrot.slane %v2616, 2
    %v2639 = vxor.u32 %v2637, 2147483648
    %v2640 = vmul.f32 %v2639, 1.442695
    %v2641 = vpow.pop %v2640
    %v2642 = vadd.f32 %v2641, 1.0
    %v2643 = vrcp.pop %v2642
    %v2644 = vmul.f32 %v2642, %v2643
    %v2645 = vsub.f32 1.0, %v2644
    %v2646 = vmul.f32 %v2643, %v2645
    %v2647 = vadd.f32 %v2643, %v2646
    %vm2648 = vweird.f32 %v2642
    %vm2649 = vweird.f32 %v2643
    %vm2650 = vmor %vm2648, %vm2649
    %v2651 = vsel %vm2650, %v2643, %v2647
    %v2652 = vand.u32 2147483647, %v2642
    %vm2653 = vcmp.eq.f32.partialorder %v2652, 8.507059e+37
    %v2654 = vand.u32 %v2642, 2147483648
    %v2655 = vor.u32 1.1754944e-38, %v2654
    %v2656 = vsel %vm2653, %v2655, %v2651
    %v2657 = vmul.f32 1.0, %v2656
    %v2658 = vrot.slane %v2616, 4
    %v2660 = vtanh.pop %v2658
    %v2661 = vrot.slane %v2616, 6
    %v2663 = vxor.u32 %v2661, 2147483648
    %v2664 = vmul.f32 %v2663, 1.442695
    %v2665 = vpow.pop %v2664
    %v2666 = vadd.f32 %v2665, 1.0
    %v2667 = vrcp.pop %v2666
    %v2668 = vmul.f32 %v2666, %v2667
    %v2669 = vsub.f32 1.0, %v2668
    %v2670 = vmul.f32 %v2667, %v2669
    %v2671 = vadd.f32 %v2667, %v2670
    %vm2672 = vweird.f32 %v2666
    %vm2673 = vweird.f32 %v2667
    %vm2674 = vmor %vm2672, %vm2673
    %v2675 = vsel %vm2674, %v2667, %v2671
    %v2676 = vand.u32 2147483647, %v2666
    %vm2677 = vcmp.eq.f32.partialorder %v2676, 8.507059e+37
    %v2678 = vand.u32 %v2666, 2147483648
    %v2679 = vor.u32 1.1754944e-38, %v2678
    %v2680 = vsel %vm2677, %v2679, %v2675
    %v2681 = vmul.f32 1.0, %v2680
    %v2682 = vmul.f32 %v2657, %v2519
    %v2683 = vmul.f32 %v2635, %v2660
    %v2684 = vadd.f32 %v2682, %v2683
    %v2685 = vtanh.pop %v2684
    %v2686 = vmul.f32 %v2681, %v2685
    %s2687 = scalar_lea.vmem [#allocation13], 6
    %2688 = vst [vmem:[%s2687] sm:$0x3] %v2686
    %v2689 = vld [vmem:[%s1039] sm:$0xff]
    %2690 = vmatpush.msra.mxu0 %v2026
    %2691 = vmatpush.msra.mxu0 %v2022
    %2692 = vmatpush.msra.mxu0 %v2018
    %2693 = vmatpush.msra.mxu0 %v2014
    %2694 = vmatpush.msra.mxu0 %v2010
    %2695 = vmatpush.msra.mxu0 %v2006
    %2696 = vmatpush.msra.mxu0 %v2002
    %2697 = vmatpush.msra.mxu0 %v1998
    %2698 = vmatpush.msra.mxu0 %v1994
    %2699 = vmatpush.msra.mxu0 %v1990
    %2700 = vmatpush.msra.mxu0 %v1986
    %2701 = vmatpush.msra.mxu0 %v1982
    %2702 = vmatpush.msra.mxu0 %v1978
    %2703 = vmatpush.msra.mxu0 %v1974
    %2704 = vmatpush.msra.mxu0 %v1970
    %2705 = vmatpush.msra.mxu0 %v1966
    %2706 = vmatmul.f32.gmra.mxu0 %v2686
    %v2707 = vpop.f32.mrf.mxu0
    %v2708 = vadd.f32 0.0, %v2707
    %2709 = vdwg.mxu0
    %2710 = vmatpush.msra.mxu0 %v2027
    %2711 = vmatpush.msra.mxu0 %v2023
    %2712 = vmatpush.msra.mxu0 %v2019
    %2713 = vmatpush.msra.mxu0 %v2015
    %2714 = vmatpush.msra.mxu0 %v2011
    %2715 = vmatpush.msra.mxu0 %v2007
    %2716 = vmatpush.msra.mxu0 %v2003
    %2717 = vmatpush.msra.mxu0 %v1999
    %2718 = vmatpush.msra.mxu0 %v1995
    %2719 = vmatpush.msra.mxu0 %v1991
    %2720 = vmatpush.msra.mxu0 %v1987
    %2721 = vmatpush.msra.mxu0 %v1983
    %2722 = vmatpush.msra.mxu0 %v1979
    %2723 = vmatpush.msra.mxu0 %v1975
    %2724 = vmatpush.msra.mxu0 %v1971
    %2725 = vmatpush.msra.mxu0 %v1967
    %2726 = vmatmul.f32.gmra.mxu0 %v2686
    %v2727 = vpop.f32.mrf.mxu0
    %v2728 = vadd.f32 0.0, %v2727
    %2729 = vdwg.mxu0
    %2730 = vmatpush.msra.mxu0 %v2028
    %2731 = vmatpush.msra.mxu0 %v2024
    %2732 = vmatpush.msra.mxu0 %v2020
    %2733 = vmatpush.msra.mxu0 %v2016
    %2734 = vmatpush.msra.mxu0 %v2012
    %2735 = vmatpush.msra.mxu0 %v2008
    %2736 = vmatpush.msra.mxu0 %v2004
    %2737 = vmatpush.msra.mxu0 %v2000
    %2738 = vmatpush.msra.mxu0 %v1996
    %2739 = vmatpush.msra.mxu0 %v1992
    %2740 = vmatpush.msra.mxu0 %v1988
    %2741 = vmatpush.msra.mxu0 %v1984
    %2742 = vmatpush.msra.mxu0 %v1980
    %2743 = vmatpush.msra.mxu0 %v1976
    %2744 = vmatpush.msra.mxu0 %v1972
    %2745 = vmatpush.msra.mxu0 %v1968
    %2746 = vmatmul.f32.gmra.mxu0 %v2686
    %v2747 = vpop.f32.mrf.mxu0
    %v2748 = vadd.f32 0.0, %v2747
    %2749 = vdwg.mxu0
    %2750 = vmatpush.msra.mxu0 %v2029
    %2751 = vmatpush.msra.mxu0 %v2025
    %2752 = vmatpush.msra.mxu0 %v2021
    %2753 = vmatpush.msra.mxu0 %v2017
    %2754 = vmatpush.msra.mxu0 %v2013
    %2755 = vmatpush.msra.mxu0 %v2009
    %2756 = vmatpush.msra.mxu0 %v2005
    %2757 = vmatpush.msra.mxu0 %v2001
    %2758 = vmatpush.msra.mxu0 %v1997
    %2759 = vmatpush.msra.mxu0 %v1993
    %2760 = vmatpush.msra.mxu0 %v1989
    %2761 = vmatpush.msra.mxu0 %v1985
    %2762 = vmatpush.msra.mxu0 %v1981
    %2763 = vmatpush.msra.mxu0 %v1977
    %2764 = vmatpush.msra.mxu0 %v1973
    %2765 = vmatpush.msra.mxu0 %v1969
    %2766 = vmatmul.f32.gmra.mxu0 %v2686
    %v2767 = vpop.f32.mrf.mxu0
    %v2768 = vadd.f32 0.0, %v2767
    %2769 = vdwg.mxu0
    %v2774 = vrot.slane %v2728, 6
    %v2775 = vrot.slane %v2748, 4
    %v2776 = vrot.slane %v2768, 2
    %v2777 = vsel %vm261, %v2708, %v2774
    %v2778 = vsel %vm263, %v2775, %v2776
    %v2779 = vsel %vm265, %v2777, %v2778
    %v2781 = vadd.f32 %v2689, %v2779
    %v2782 = vxor.u32 %v2781, 2147483648
    %v2783 = vmul.f32 %v2782, 1.442695
    %v2784 = vpow.pop %v2783
    %v2785 = vadd.f32 %v2784, 1.0
    %v2786 = vrcp.pop %v2785
    %v2787 = vmul.f32 %v2785, %v2786
    %v2788 = vsub.f32 1.0, %v2787
    %v2789 = vmul.f32 %v2786, %v2788
    %v2790 = vadd.f32 %v2786, %v2789
    %vm2791 = vweird.f32 %v2785
    %vm2792 = vweird.f32 %v2786
    %vm2793 = vmor %vm2791, %vm2792
    %v2794 = vsel %vm2793, %v2786, %v2790
    %v2795 = vand.u32 2147483647, %v2785
    %vm2796 = vcmp.eq.f32.partialorder %v2795, 8.507059e+37
    %v2797 = vand.u32 %v2785, 2147483648
    %v2798 = vor.u32 1.1754944e-38, %v2797
    %v2799 = vsel %vm2796, %v2798, %v2794
    %v2800 = vmul.f32 1.0, %v2799
    %v2802 = vrot.slane %v2781, 2
    %v2804 = vxor.u32 %v2802, 2147483648
    %v2805 = vmul.f32 %v2804, 1.442695
    %v2806 = vpow.pop %v2805
    %v2807 = vadd.f32 %v2806, 1.0
    %v2808 = vrcp.pop %v2807
    %v2809 = vmul.f32 %v2807, %v2808
    %v2810 = vsub.f32 1.0, %v2809
    %v2811 = vmul.f32 %v2808, %v2810
    %v2812 = vadd.f32 %v2808, %v2811
    %vm2813 = vweird.f32 %v2807
    %vm2814 = vweird.f32 %v2808
    %vm2815 = vmor %vm2813, %vm2814
    %v2816 = vsel %vm2815, %v2808, %v2812
    %v2817 = vand.u32 2147483647, %v2807
    %vm2818 = vcmp.eq.f32.partialorder %v2817, 8.507059e+37
    %v2819 = vand.u32 %v2807, 2147483648
    %v2820 = vor.u32 1.1754944e-38, %v2819
    %v2821 = vsel %vm2818, %v2820, %v2816
    %v2822 = vmul.f32 1.0, %v2821
    %v2823 = vrot.slane %v2781, 4
    %v2825 = vtanh.pop %v2823
    %v2826 = vrot.slane %v2781, 6
    %v2828 = vxor.u32 %v2826, 2147483648
    %v2829 = vmul.f32 %v2828, 1.442695
    %v2830 = vpow.pop %v2829
    %v2831 = vadd.f32 %v2830, 1.0
    %v2832 = vrcp.pop %v2831
    %v2833 = vmul.f32 %v2831, %v2832
    %v2834 = vsub.f32 1.0, %v2833
    %v2835 = vmul.f32 %v2832, %v2834
    %v2836 = vadd.f32 %v2832, %v2835
    %vm2837 = vweird.f32 %v2831
    %vm2838 = vweird.f32 %v2832
    %vm2839 = vmor %vm2837, %vm2838
    %v2840 = vsel %vm2839, %v2832, %v2836
    %v2841 = vand.u32 2147483647, %v2831
    %vm2842 = vcmp.eq.f32.partialorder %v2841, 8.507059e+37
    %v2843 = vand.u32 %v2831, 2147483648
    %v2844 = vor.u32 1.1754944e-38, %v2843
    %v2845 = vsel %vm2842, %v2844, %v2840
    %v2846 = vmul.f32 1.0, %v2845
    %v2847 = vmul.f32 %v2822, %v2684
    %v2848 = vmul.f32 %v2800, %v2825
    %v2849 = vadd.f32 %v2847, %v2848
    %v2850 = vtanh.pop %v2849
    %v2851 = vmul.f32 %v2846, %v2850
    %s2852 = scalar_lea.vmem [#allocation13], 8
    %2853 = vst [vmem:[%s2852] sm:$0x3] %v2851
    %v2854 = vld [vmem:[%s1205] sm:$0xff]
    %2855 = vmatpush.msra.mxu0 %v2026
    %2856 = vmatpush.msra.mxu0 %v2022
    %2857 = vmatpush.msra.mxu0 %v2018
    %2858 = vmatpush.msra.mxu0 %v2014
    %2859 = vmatpush.msra.mxu0 %v2010
    %2860 = vmatpush.msra.mxu0 %v2006
    %2861 = vmatpush.msra.mxu0 %v2002
    %2862 = vmatpush.msra.mxu0 %v1998
    %2863 = vmatpush.msra.mxu0 %v1994
    %2864 = vmatpush.msra.mxu0 %v1990
    %2865 = vmatpush.msra.mxu0 %v1986
    %2866 = vmatpush.msra.mxu0 %v1982
    %2867 = vmatpush.msra.mxu0 %v1978
    %2868 = vmatpush.msra.mxu0 %v1974
    %2869 = vmatpush.msra.mxu0 %v1970
    %2870 = vmatpush.msra.mxu0 %v1966
    %2871 = vmatmul.f32.gmra.mxu0 %v2851
    %v2872 = vpop.f32.mrf.mxu0
    %v2873 = vadd.f32 0.0, %v2872
    %2874 = vdwg.mxu0
    %2875 = vmatpush.msra.mxu0 %v2027
    %2876 = vmatpush.msra.mxu0 %v2023
    %2877 = vmatpush.msra.mxu0 %v2019
    %2878 = vmatpush.msra.mxu0 %v2015
    %2879 = vmatpush.msra.mxu0 %v2011
    %2880 = vmatpush.msra.mxu0 %v2007
    %2881 = vmatpush.msra.mxu0 %v2003
    %2882 = vmatpush.msra.mxu0 %v1999
    %2883 = vmatpush.msra.mxu0 %v1995
    %2884 = vmatpush.msra.mxu0 %v1991
    %2885 = vmatpush.msra.mxu0 %v1987
    %2886 = vmatpush.msra.mxu0 %v1983
    %2887 = vmatpush.msra.mxu0 %v1979
    %2888 = vmatpush.msra.mxu0 %v1975
    %2889 = vmatpush.msra.mxu0 %v1971
    %2890 = vmatpush.msra.mxu0 %v1967
    %2891 = vmatmul.f32.gmra.mxu0 %v2851
    %v2892 = vpop.f32.mrf.mxu0
    %v2893 = vadd.f32 0.0, %v2892
    %2894 = vdwg.mxu0
    %2895 = vmatpush.msra.mxu0 %v2028
    %2896 = vmatpush.msra.mxu0 %v2024
    %2897 = vmatpush.msra.mxu0 %v2020
    %2898 = vmatpush.msra.mxu0 %v2016
    %2899 = vmatpush.msra.mxu0 %v2012
    %2900 = vmatpush.msra.mxu0 %v2008
    %2901 = vmatpush.msra.mxu0 %v2004
    %2902 = vmatpush.msra.mxu0 %v2000
    %2903 = vmatpush.msra.mxu0 %v1996
    %2904 = vmatpush.msra.mxu0 %v1992
    %2905 = vmatpush.msra.mxu0 %v1988
    %2906 = vmatpush.msra.mxu0 %v1984
    %2907 = vmatpush.msra.mxu0 %v1980
    %2908 = vmatpush.msra.mxu0 %v1976
    %2909 = vmatpush.msra.mxu0 %v1972
    %2910 = vmatpush.msra.mxu0 %v1968
    %2911 = vmatmul.f32.gmra.mxu0 %v2851
    %v2912 = vpop.f32.mrf.mxu0
    %v2913 = vadd.f32 0.0, %v2912
    %2914 = vdwg.mxu0
    %2915 = vmatpush.msra.mxu0 %v2029
    %2916 = vmatpush.msra.mxu0 %v2025
    %2917 = vmatpush.msra.mxu0 %v2021
    %2918 = vmatpush.msra.mxu0 %v2017
    %2919 = vmatpush.msra.mxu0 %v2013
    %2920 = vmatpush.msra.mxu0 %v2009
    %2921 = vmatpush.msra.mxu0 %v2005
    %2922 = vmatpush.msra.mxu0 %v2001
    %2923 = vmatpush.msra.mxu0 %v1997
    %2924 = vmatpush.msra.mxu0 %v1993
    %2925 = vmatpush.msra.mxu0 %v1989
    %2926 = vmatpush.msra.mxu0 %v1985
    %2927 = vmatpush.msra.mxu0 %v1981
    %2928 = vmatpush.msra.mxu0 %v1977
    %2929 = vmatpush.msra.mxu0 %v1973
    %2930 = vmatpush.msra.mxu0 %v1969
    %2931 = vmatmul.f32.gmra.mxu0 %v2851
    %v2932 = vpop.f32.mrf.mxu0
    %v2933 = vadd.f32 0.0, %v2932
    %2934 = vdwg.mxu0
    %v2939 = vrot.slane %v2893, 6
    %v2940 = vrot.slane %v2913, 4
    %v2941 = vrot.slane %v2933, 2
    %v2942 = vsel %vm261, %v2873, %v2939
    %v2943 = vsel %vm263, %v2940, %v2941
    %v2944 = vsel %vm265, %v2942, %v2943
    %v2946 = vadd.f32 %v2854, %v2944
    %v2947 = vxor.u32 %v2946, 2147483648
    %v2948 = vmul.f32 %v2947, 1.442695
    %v2949 = vpow.pop %v2948
    %v2950 = vadd.f32 %v2949, 1.0
    %v2951 = vrcp.pop %v2950
    %v2952 = vmul.f32 %v2950, %v2951
    %v2953 = vsub.f32 1.0, %v2952
    %v2954 = vmul.f32 %v2951, %v2953
    %v2955 = vadd.f32 %v2951, %v2954
    %vm2956 = vweird.f32 %v2950
    %vm2957 = vweird.f32 %v2951
    %vm2958 = vmor %vm2956, %vm2957
    %v2959 = vsel %vm2958, %v2951, %v2955
    %v2960 = vand.u32 2147483647, %v2950
    %vm2961 = vcmp.eq.f32.partialorder %v2960, 8.507059e+37
    %v2962 = vand.u32 %v2950, 2147483648
    %v2963 = vor.u32 1.1754944e-38, %v2962
    %v2964 = vsel %vm2961, %v2963, %v2959
    %v2965 = vmul.f32 1.0, %v2964
    %v2967 = vrot.slane %v2946, 2
    %v2969 = vxor.u32 %v2967, 2147483648
    %v2970 = vmul.f32 %v2969, 1.442695
    %v2971 = vpow.pop %v2970
    %v2972 = vadd.f32 %v2971, 1.0
    %v2973 = vrcp.pop %v2972
    %v2974 = vmul.f32 %v2972, %v2973
    %v2975 = vsub.f32 1.0, %v2974
    %v2976 = vmul.f32 %v2973, %v2975
    %v2977 = vadd.f32 %v2973, %v2976
    %vm2978 = vweird.f32 %v2972
    %vm2979 = vweird.f32 %v2973
    %vm2980 = vmor %vm2978, %vm2979
    %v2981 = vsel %vm2980, %v2973, %v2977
    %v2982 = vand.u32 2147483647, %v2972
    %vm2983 = vcmp.eq.f32.partialorder %v2982, 8.507059e+37
    %v2984 = vand.u32 %v2972, 2147483648
    %v2985 = vor.u32 1.1754944e-38, %v2984
    %v2986 = vsel %vm2983, %v2985, %v2981
    %v2987 = vmul.f32 1.0, %v2986
    %v2988 = vrot.slane %v2946, 4
    %v2990 = vtanh.pop %v2988
    %v2991 = vrot.slane %v2946, 6
    %v2993 = vxor.u32 %v2991, 2147483648
    %v2994 = vmul.f32 %v2993, 1.442695
    %v2995 = vpow.pop %v2994
    %v2996 = vadd.f32 %v2995, 1.0
    %v2997 = vrcp.pop %v2996
    %v2998 = vmul.f32 %v2996, %v2997
    %v2999 = vsub.f32 1.0, %v2998
    %v3000 = vmul.f32 %v2997, %v2999
    %v3001 = vadd.f32 %v2997, %v3000
    %vm3002 = vweird.f32 %v2996
    %vm3003 = vweird.f32 %v2997
    %vm3004 = vmor %vm3002, %vm3003
    %v3005 = vsel %vm3004, %v2997, %v3001
    %v3006 = vand.u32 2147483647, %v2996
    %vm3007 = vcmp.eq.f32.partialorder %v3006, 8.507059e+37
    %v3008 = vand.u32 %v2996, 2147483648
    %v3009 = vor.u32 1.1754944e-38, %v3008
    %v3010 = vsel %vm3007, %v3009, %v3005
    %v3011 = vmul.f32 1.0, %v3010
    %v3012 = vmul.f32 %v2987, %v2849
    %v3013 = vmul.f32 %v2965, %v2990
    %v3014 = vadd.f32 %v3012, %v3013
    %v3015 = vtanh.pop %v3014
    %v3016 = vmul.f32 %v3011, %v3015
    %s3017 = scalar_lea.vmem [#allocation13], 10
    %3018 = vst [vmem:[%s3017] sm:$0x3] %v3016
    %v3019 = vld [vmem:[%s1371] sm:$0xff]
    %3020 = vmatpush.msra.mxu0 %v2026
    %3021 = vmatpush.msra.mxu0 %v2022
    %3022 = vmatpush.msra.mxu0 %v2018
    %3023 = vmatpush.msra.mxu0 %v2014
    %3024 = vmatpush.msra.mxu0 %v2010
    %3025 = vmatpush.msra.mxu0 %v2006
    %3026 = vmatpush.msra.mxu0 %v2002
    %3027 = vmatpush.msra.mxu0 %v1998
    %3028 = vmatpush.msra.mxu0 %v1994
    %3029 = vmatpush.msra.mxu0 %v1990
    %3030 = vmatpush.msra.mxu0 %v1986
    %3031 = vmatpush.msra.mxu0 %v1982
    %3032 = vmatpush.msra.mxu0 %v1978
    %3033 = vmatpush.msra.mxu0 %v1974
    %3034 = vmatpush.msra.mxu0 %v1970
    %3035 = vmatpush.msra.mxu0 %v1966
    %3036 = vmatmul.f32.gmra.mxu0 %v3016
    %v3037 = vpop.f32.mrf.mxu0
    %v3038 = vadd.f32 0.0, %v3037
    %3039 = vdwg.mxu0
    %3040 = vmatpush.msra.mxu0 %v2027
    %3041 = vmatpush.msra.mxu0 %v2023
    %3042 = vmatpush.msra.mxu0 %v2019
    %3043 = vmatpush.msra.mxu0 %v2015
    %3044 = vmatpush.msra.mxu0 %v2011
    %3045 = vmatpush.msra.mxu0 %v2007
    %3046 = vmatpush.msra.mxu0 %v2003
    %3047 = vmatpush.msra.mxu0 %v1999
    %3048 = vmatpush.msra.mxu0 %v1995
    %3049 = vmatpush.msra.mxu0 %v1991
    %3050 = vmatpush.msra.mxu0 %v1987
    %3051 = vmatpush.msra.mxu0 %v1983
    %3052 = vmatpush.msra.mxu0 %v1979
    %3053 = vmatpush.msra.mxu0 %v1975
    %3054 = vmatpush.msra.mxu0 %v1971
    %3055 = vmatpush.msra.mxu0 %v1967
    %3056 = vmatmul.f32.gmra.mxu0 %v3016
    %v3057 = vpop.f32.mrf.mxu0
    %v3058 = vadd.f32 0.0, %v3057
    %3059 = vdwg.mxu0
    %3060 = vmatpush.msra.mxu0 %v2028
    %3061 = vmatpush.msra.mxu0 %v2024
    %3062 = vmatpush.msra.mxu0 %v2020
    %3063 = vmatpush.msra.mxu0 %v2016
    %3064 = vmatpush.msra.mxu0 %v2012
    %3065 = vmatpush.msra.mxu0 %v2008
    %3066 = vmatpush.msra.mxu0 %v2004
    %3067 = vmatpush.msra.mxu0 %v2000
    %3068 = vmatpush.msra.mxu0 %v1996
    %3069 = vmatpush.msra.mxu0 %v1992
    %3070 = vmatpush.msra.mxu0 %v1988
    %3071 = vmatpush.msra.mxu0 %v1984
    %3072 = vmatpush.msra.mxu0 %v1980
    %3073 = vmatpush.msra.mxu0 %v1976
    %3074 = vmatpush.msra.mxu0 %v1972
    %3075 = vmatpush.msra.mxu0 %v1968
    %3076 = vmatmul.f32.gmra.mxu0 %v3016
    %v3077 = vpop.f32.mrf.mxu0
    %v3078 = vadd.f32 0.0, %v3077
    %3079 = vdwg.mxu0
    %3080 = vmatpush.msra.mxu0 %v2029
    %3081 = vmatpush.msra.mxu0 %v2025
    %3082 = vmatpush.msra.mxu0 %v2021
    %3083 = vmatpush.msra.mxu0 %v2017
    %3084 = vmatpush.msra.mxu0 %v2013
    %3085 = vmatpush.msra.mxu0 %v2009
    %3086 = vmatpush.msra.mxu0 %v2005
    %3087 = vmatpush.msra.mxu0 %v2001
    %3088 = vmatpush.msra.mxu0 %v1997
    %3089 = vmatpush.msra.mxu0 %v1993
    %3090 = vmatpush.msra.mxu0 %v1989
    %3091 = vmatpush.msra.mxu0 %v1985
    %3092 = vmatpush.msra.mxu0 %v1981
    %3093 = vmatpush.msra.mxu0 %v1977
    %3094 = vmatpush.msra.mxu0 %v1973
    %3095 = vmatpush.msra.mxu0 %v1969
    %3096 = vmatmul.f32.gmra.mxu0 %v3016
    %v3097 = vpop.f32.mrf.mxu0
    %v3098 = vadd.f32 0.0, %v3097
    %3099 = vdwg.mxu0
    %v3104 = vrot.slane %v3058, 6
    %v3105 = vrot.slane %v3078, 4
    %v3106 = vrot.slane %v3098, 2
    %v3107 = vsel %vm261, %v3038, %v3104
    %v3108 = vsel %vm263, %v3105, %v3106
    %v3109 = vsel %vm265, %v3107, %v3108
    %v3111 = vadd.f32 %v3019, %v3109
    %v3112 = vxor.u32 %v3111, 2147483648
    %v3113 = vmul.f32 %v3112, 1.442695
    %v3114 = vpow.pop %v3113
    %v3115 = vadd.f32 %v3114, 1.0
    %v3116 = vrcp.pop %v3115
    %v3117 = vmul.f32 %v3115, %v3116
    %v3118 = vsub.f32 1.0, %v3117
    %v3119 = vmul.f32 %v3116, %v3118
    %v3120 = vadd.f32 %v3116, %v3119
    %vm3121 = vweird.f32 %v3115
    %vm3122 = vweird.f32 %v3116
    %vm3123 = vmor %vm3121, %vm3122
    %v3124 = vsel %vm3123, %v3116, %v3120
    %v3125 = vand.u32 2147483647, %v3115
    %vm3126 = vcmp.eq.f32.partialorder %v3125, 8.507059e+37
    %v3127 = vand.u32 %v3115, 2147483648
    %v3128 = vor.u32 1.1754944e-38, %v3127
    %v3129 = vsel %vm3126, %v3128, %v3124
    %v3130 = vmul.f32 1.0, %v3129
    %v3132 = vrot.slane %v3111, 2
    %v3134 = vxor.u32 %v3132, 2147483648
    %v3135 = vmul.f32 %v3134, 1.442695
    %v3136 = vpow.pop %v3135
    %v3137 = vadd.f32 %v3136, 1.0
    %v3138 = vrcp.pop %v3137
    %v3139 = vmul.f32 %v3137, %v3138
    %v3140 = vsub.f32 1.0, %v3139
    %v3141 = vmul.f32 %v3138, %v3140
    %v3142 = vadd.f32 %v3138, %v3141
    %vm3143 = vweird.f32 %v3137
    %vm3144 = vweird.f32 %v3138
    %vm3145 = vmor %vm3143, %vm3144
    %v3146 = vsel %vm3145, %v3138, %v3142
    %v3147 = vand.u32 2147483647, %v3137
    %vm3148 = vcmp.eq.f32.partialorder %v3147, 8.507059e+37
    %v3149 = vand.u32 %v3137, 2147483648
    %v3150 = vor.u32 1.1754944e-38, %v3149
    %v3151 = vsel %vm3148, %v3150, %v3146
    %v3152 = vmul.f32 1.0, %v3151
    %v3153 = vrot.slane %v3111, 4
    %v3155 = vtanh.pop %v3153
    %v3156 = vrot.slane %v3111, 6
    %v3158 = vxor.u32 %v3156, 2147483648
    %v3159 = vmul.f32 %v3158, 1.442695
    %v3160 = vpow.pop %v3159
    %v3161 = vadd.f32 %v3160, 1.0
    %v3162 = vrcp.pop %v3161
    %v3163 = vmul.f32 %v3161, %v3162
    %v3164 = vsub.f32 1.0, %v3163
    %v3165 = vmul.f32 %v3162, %v3164
    %v3166 = vadd.f32 %v3162, %v3165
    %vm3167 = vweird.f32 %v3161
    %vm3168 = vweird.f32 %v3162
    %vm3169 = vmor %vm3167, %vm3168
    %v3170 = vsel %vm3169, %v3162, %v3166
    %v3171 = vand.u32 2147483647, %v3161
    %vm3172 = vcmp.eq.f32.partialorder %v3171, 8.507059e+37
    %v3173 = vand.u32 %v3161, 2147483648
    %v3174 = vor.u32 1.1754944e-38, %v3173
    %v3175 = vsel %vm3172, %v3174, %v3170
    %v3176 = vmul.f32 1.0, %v3175
    %v3177 = vmul.f32 %v3152, %v3014
    %v3178 = vmul.f32 %v3130, %v3155
    %v3179 = vadd.f32 %v3177, %v3178
    %v3180 = vtanh.pop %v3179
    %v3181 = vmul.f32 %v3176, %v3180
    %s3182 = scalar_lea.vmem [#allocation13], 12
    %3183 = vst [vmem:[%s3182] sm:$0x3] %v3181
    %v3184 = vld [vmem:[%s1537] sm:$0xff]
    %3185 = vmatpush.msra.mxu0 %v2026
    %3186 = vmatpush.msra.mxu0 %v2022
    %3187 = vmatpush.msra.mxu0 %v2018
    %3188 = vmatpush.msra.mxu0 %v2014
    %3189 = vmatpush.msra.mxu0 %v2010
    %3190 = vmatpush.msra.mxu0 %v2006
    %3191 = vmatpush.msra.mxu0 %v2002
    %3192 = vmatpush.msra.mxu0 %v1998
    %3193 = vmatpush.msra.mxu0 %v1994
    %3194 = vmatpush.msra.mxu0 %v1990
    %3195 = vmatpush.msra.mxu0 %v1986
    %3196 = vmatpush.msra.mxu0 %v1982
    %3197 = vmatpush.msra.mxu0 %v1978
    %3198 = vmatpush.msra.mxu0 %v1974
    %3199 = vmatpush.msra.mxu0 %v1970
    %3200 = vmatpush.msra.mxu0 %v1966
    %3201 = vmatmul.f32.gmra.mxu0 %v3181
    %v3202 = vpop.f32.mrf.mxu0
    %v3203 = vadd.f32 0.0, %v3202
    %3204 = vdwg.mxu0
    %3205 = vmatpush.msra.mxu0 %v2027
    %3206 = vmatpush.msra.mxu0 %v2023
    %3207 = vmatpush.msra.mxu0 %v2019
    %3208 = vmatpush.msra.mxu0 %v2015
    %3209 = vmatpush.msra.mxu0 %v2011
    %3210 = vmatpush.msra.mxu0 %v2007
    %3211 = vmatpush.msra.mxu0 %v2003
    %3212 = vmatpush.msra.mxu0 %v1999
    %3213 = vmatpush.msra.mxu0 %v1995
    %3214 = vmatpush.msra.mxu0 %v1991
    %3215 = vmatpush.msra.mxu0 %v1987
    %3216 = vmatpush.msra.mxu0 %v1983
    %3217 = vmatpush.msra.mxu0 %v1979
    %3218 = vmatpush.msra.mxu0 %v1975
    %3219 = vmatpush.msra.mxu0 %v1971
    %3220 = vmatpush.msra.mxu0 %v1967
    %3221 = vmatmul.f32.gmra.mxu0 %v3181
    %v3222 = vpop.f32.mrf.mxu0
    %v3223 = vadd.f32 0.0, %v3222
    %3224 = vdwg.mxu0
    %3225 = vmatpush.msra.mxu0 %v2028
    %3226 = vmatpush.msra.mxu0 %v2024
    %3227 = vmatpush.msra.mxu0 %v2020
    %3228 = vmatpush.msra.mxu0 %v2016
    %3229 = vmatpush.msra.mxu0 %v2012
    %3230 = vmatpush.msra.mxu0 %v2008
    %3231 = vmatpush.msra.mxu0 %v2004
    %3232 = vmatpush.msra.mxu0 %v2000
    %3233 = vmatpush.msra.mxu0 %v1996
    %3234 = vmatpush.msra.mxu0 %v1992
    %3235 = vmatpush.msra.mxu0 %v1988
    %3236 = vmatpush.msra.mxu0 %v1984
    %3237 = vmatpush.msra.mxu0 %v1980
    %3238 = vmatpush.msra.mxu0 %v1976
    %3239 = vmatpush.msra.mxu0 %v1972
    %3240 = vmatpush.msra.mxu0 %v1968
    %3241 = vmatmul.f32.gmra.mxu0 %v3181
    %v3242 = vpop.f32.mrf.mxu0
    %v3243 = vadd.f32 0.0, %v3242
    %3244 = vdwg.mxu0
    %3245 = vmatpush.msra.mxu0 %v2029
    %3246 = vmatpush.msra.mxu0 %v2025
    %3247 = vmatpush.msra.mxu0 %v2021
    %3248 = vmatpush.msra.mxu0 %v2017
    %3249 = vmatpush.msra.mxu0 %v2013
    %3250 = vmatpush.msra.mxu0 %v2009
    %3251 = vmatpush.msra.mxu0 %v2005
    %3252 = vmatpush.msra.mxu0 %v2001
    %3253 = vmatpush.msra.mxu0 %v1997
    %3254 = vmatpush.msra.mxu0 %v1993
    %3255 = vmatpush.msra.mxu0 %v1989
    %3256 = vmatpush.msra.mxu0 %v1985
    %3257 = vmatpush.msra.mxu0 %v1981
    %3258 = vmatpush.msra.mxu0 %v1977
    %3259 = vmatpush.msra.mxu0 %v1973
    %3260 = vmatpush.msra.mxu0 %v1969
    %3261 = vmatmul.f32.gmra.mxu0 %v3181
    %v3262 = vpop.f32.mrf.mxu0
    %v3263 = vadd.f32 0.0, %v3262
    %3264 = vdwg.mxu0
    %v3269 = vrot.slane %v3223, 6
    %v3270 = vrot.slane %v3243, 4
    %v3271 = vrot.slane %v3263, 2
    %v3272 = vsel %vm261, %v3203, %v3269
    %v3273 = vsel %vm263, %v3270, %v3271
    %v3274 = vsel %vm265, %v3272, %v3273
    %v3276 = vadd.f32 %v3184, %v3274
    %v3277 = vxor.u32 %v3276, 2147483648
    %v3278 = vmul.f32 %v3277, 1.442695
    %v3279 = vpow.pop %v3278
    %v3280 = vadd.f32 %v3279, 1.0
    %v3281 = vrcp.pop %v3280
    %v3282 = vmul.f32 %v3280, %v3281
    %v3283 = vsub.f32 1.0, %v3282
    %v3284 = vmul.f32 %v3281, %v3283
    %v3285 = vadd.f32 %v3281, %v3284
    %vm3286 = vweird.f32 %v3280
    %vm3287 = vweird.f32 %v3281
    %vm3288 = vmor %vm3286, %vm3287
    %v3289 = vsel %vm3288, %v3281, %v3285
    %v3290 = vand.u32 2147483647, %v3280
    %vm3291 = vcmp.eq.f32.partialorder %v3290, 8.507059e+37
    %v3292 = vand.u32 %v3280, 2147483648
    %v3293 = vor.u32 1.1754944e-38, %v3292
    %v3294 = vsel %vm3291, %v3293, %v3289
    %v3295 = vmul.f32 1.0, %v3294
    %v3297 = vrot.slane %v3276, 2
    %v3299 = vxor.u32 %v3297, 2147483648
    %v3300 = vmul.f32 %v3299, 1.442695
    %v3301 = vpow.pop %v3300
    %v3302 = vadd.f32 %v3301, 1.0
    %v3303 = vrcp.pop %v3302
    %v3304 = vmul.f32 %v3302, %v3303
    %v3305 = vsub.f32 1.0, %v3304
    %v3306 = vmul.f32 %v3303, %v3305
    %v3307 = vadd.f32 %v3303, %v3306
    %vm3308 = vweird.f32 %v3302
    %vm3309 = vweird.f32 %v3303
    %vm3310 = vmor %vm3308, %vm3309
    %v3311 = vsel %vm3310, %v3303, %v3307
    %v3312 = vand.u32 2147483647, %v3302
    %vm3313 = vcmp.eq.f32.partialorder %v3312, 8.507059e+37
    %v3314 = vand.u32 %v3302, 2147483648
    %v3315 = vor.u32 1.1754944e-38, %v3314
    %v3316 = vsel %vm3313, %v3315, %v3311
    %v3317 = vmul.f32 1.0, %v3316
    %v3318 = vrot.slane %v3276, 4
    %v3320 = vtanh.pop %v3318
    %v3321 = vrot.slane %v3276, 6
    %v3323 = vxor.u32 %v3321, 2147483648
    %v3324 = vmul.f32 %v3323, 1.442695
    %v3325 = vpow.pop %v3324
    %v3326 = vadd.f32 %v3325, 1.0
    %v3327 = vrcp.pop %v3326
    %v3328 = vmul.f32 %v3326, %v3327
    %v3329 = vsub.f32 1.0, %v3328
    %v3330 = vmul.f32 %v3327, %v3329
    %v3331 = vadd.f32 %v3327, %v3330
    %vm3332 = vweird.f32 %v3326
    %vm3333 = vweird.f32 %v3327
    %vm3334 = vmor %vm3332, %vm3333
    %v3335 = vsel %vm3334, %v3327, %v3331
    %v3336 = vand.u32 2147483647, %v3326
    %vm3337 = vcmp.eq.f32.partialorder %v3336, 8.507059e+37
    %v3338 = vand.u32 %v3326, 2147483648
    %v3339 = vor.u32 1.1754944e-38, %v3338
    %v3340 = vsel %vm3337, %v3339, %v3335
    %v3341 = vmul.f32 1.0, %v3340
    %v3342 = vmul.f32 %v3317, %v3179
    %v3343 = vmul.f32 %v3295, %v3320
    %v3344 = vadd.f32 %v3342, %v3343
    %v3345 = vtanh.pop %v3344
    %v3346 = vmul.f32 %v3341, %v3345
    %s3347 = scalar_lea.vmem [#allocation13], 14
    %3348 = vst [vmem:[%s3347] sm:$0x3] %v3346
    // Predicated region
    $region42: #{tpu_custom_call.1} parent=1 // pred_check
      _
    $region43: #{tpu_custom_call.1} parent=1 // pred_check_branch
      %3350 = sbr.rel (0) target = $region45
    $region44: #{tpu_custom_call.1} parent=1 // pred_region
      %3352 = vsyncadd [#allocation6], 0
      %s3353 = sshll.u32 [#allocation13], 4
      %s3354 = int_to_ptr.vmem [resolvable:$true] %s3353
      %s3355 = sshll.u32 %s5, 4
      %s3356 = int_to_ptr.hbm [resolvable:$true] %s3355
      %3361 = dma.vmem_to_hbm [thread:$0]  %s3354, 256, %s3356, [#allocation6], 32, 32, 2
    $region45: #{tpu_custom_call.1} parent=1 // pred_fallthru
      _
    // Predicated region
    $region46: #{tpu_custom_call.1} parent=1 // pred_check
      _
    $region47: #{tpu_custom_call.1} parent=1 // pred_check_branch
      %3363 = sbr.rel (0) target = $region49
    $region48: #{tpu_custom_call.1} parent=1 // pred_region
      %3365 = dma.done [#allocation6], 256
    $region49: #{tpu_custom_call.1} parent=1 // pred_fallthru
      _
    %3366 = vsyncpa [#allocation5], 1
    %3367 = vsyncpa [#allocation8], 1
    %3368 = vsyncpa [#allocation11], 1
    %3369 = vsyncpa [#allocation6], 1

</llo_original>
